<compile_context>
chip_gen: v6e
topology: v6e:2x2x1
jax: 0.10.0
libtpu: 0.0.40
codegen_flags: <defaults>
</compile_context>

<pallas_src>
import functools

import jax
import jax.numpy as jnp
from jax import lax
from jax.experimental import pallas as pl
from jax.experimental.pallas import tpu as pltpu

_BN_EPS = 1e-5        # PyTorch BatchNorm2d default
_LANE = 128
_ROW_TILE_CAP = 8     # output rows per grid step


def _round_up(x, m):
    return ((x + m - 1) // m) * m


def _pick_row_tile(h, cap=_ROW_TILE_CAP):
    """Largest divisor of h that is <= cap (keeps the grid exact)."""
    th = min(cap, h)
    while h % th:
        th -= 1
    return th


def _conv_stage_kernel(apply_pre, x_ref, halo_ref, w_ref, b_ref,
                       pre_scale_ref, pre_shift_ref, y_ref, stats_ref):
    """One 3x3 'SAME' conv row-tile (+ optional fused BN/ReLU input prologue).

    x_ref         : (1, TH, W, Cin)   input rows of this tile (lane-padded C)
    halo_ref      : (1, 2, W, Cin)    [row above, row below] (zeros at image edge)
    w_ref         : (3, 3*Cin, Cout)  bf16 weights; w_ref[dy] is (dx,cin)-flattened
    b_ref         : (1, Cout)         conv bias (f32)
    pre_scale_ref : (1, Cin)          previous-stage BN scale (prologue)
    pre_shift_ref : (1, Cin)          previous-stage BN shift (prologue)
    y_ref         : (1, TH, W, Cout)  pre-BN conv output (bf16)
    stats_ref     : (1, 1, 2, Cout)   per-tile [sum, sum-of-squares] of y (f32)
    """
    _, TH, W, Cin = x_ref.shape
    Cout = y_ref.shape[-1]

    x = x_ref[...].reshape(TH, W, Cin).astype(jnp.float32)
    halo = halo_ref[...].reshape(2, W, Cin).astype(jnp.float32)
    top = halo[0:1]                                  # (1, W, Cin)
    bot = halo[1:2]                                  # (1, W, Cin)

    if apply_pre:
        # Fused BN+ReLU of the previous stage applied to this conv's input.
        s = pre_scale_ref[...].astype(jnp.float32).reshape(1, 1, Cin)
        t = pre_shift_ref[...].astype(jnp.float32).reshape(1, 1, Cin)
        x = jnp.maximum(x * s + t, 0.0)
        top = jnp.maximum(top * s + t, 0.0)
        bot = jnp.maximum(bot * s + t, 0.0)
        # Conv zero-padding is applied AFTER BN/ReLU in the reference, so the
        # image-boundary halo rows must stay exactly zero.
        i = pl.program_id(1)
        nt = pl.num_programs(1)
        top = top * (i > 0).astype(jnp.float32)
        bot = bot * (i < nt - 1).astype(jnp.float32)

    # Assemble the zero-padded slab in VMEM (pad=1 handled here, not in HBM).
    rows = jnp.concatenate([top, x, bot], axis=0)            # (TH+2, W, Cin)
    zcol = jnp.zeros((TH + 2, 1, Cin), jnp.float32)
    slab = jnp.concatenate([zcol, rows, zcol], axis=1)       # (TH+2, W+2, Cin)

    # 3x3 conv as 3 K-dense matmuls: per dy, the 3 dx taps are concatenated on
    # the lane axis so each dot has K = 3*Cin (vs 9 tiny K=Cin dots).
    acc = jnp.zeros((TH * W, Cout), jnp.float32)
    for dy in range(3):
        band = slab[dy:dy + TH]                              # (TH, W+2, Cin)
        patch = jnp.concatenate(
            [band[:, dx:dx + W, :].reshape(TH * W, Cin) for dx in range(3)],
            axis=-1)                                         # (TH*W, 3*Cin)
        acc = acc + jnp.dot(patch.astype(jnp.bfloat16), w_ref[dy],
                            preferred_element_type=jnp.float32)

    y = acc + b_ref[...].astype(jnp.float32)                 # (TH*W, Cout)

    y_ref[...] = y.reshape(1, TH, W, Cout).astype(y_ref.dtype)
    ssum = jnp.sum(y, axis=0, keepdims=True)                 # (1, Cout)
    ssq = jnp.sum(y * y, axis=0, keepdims=True)              # (1, Cout)
    stats_ref[...] = jnp.concatenate([ssum, ssq], axis=0).reshape(1, 1, 2, Cout)


def _bn_relu_kernel(y_ref, scale_ref, shift_ref, o_ref):
    """Elementwise y*scale + shift, ReLU (folded BatchNorm epilogue)."""
    y = y_ref[...].astype(jnp.float32)
    s = scale_ref[...].astype(jnp.float32).reshape(1, 1, 1, -1)
    t = shift_ref[...].astype(jnp.float32).reshape(1, 1, 1, -1)
    o_ref[...] = jnp.maximum(y * s + t, 0.0).astype(o_ref.dtype)


def _make_halos(a, th):
    """(N, H, W, C) -> (N, 2*nt, W, C) where rows [2i, 2i+1] are the row just
    above / below tile i (zeros at the image boundary). Reads only ~2 rows per
    tile from HBM instead of padding the whole tensor."""
    n, h, w, c = a.shape
    nt = h // th
    zero = jnp.zeros((n, 1, w, c), a.dtype)
    if nt > 1:
        tops = a[:, th - 1:h - 1:th]                     # rows th-1, 2*th-1, ...
        bots = a[:, th:h:th]                             # rows th, 2*th, ...
        top = jnp.concatenate([zero, tops], axis=1)      # (N, nt, W, C)
        bot = jnp.concatenate([bots, zero], axis=1)      # (N, nt, W, C)
    else:
        top = zero
        bot = zero
    return jnp.stack([top, bot], axis=2).reshape(n, 2 * nt, w, c)


def _conv_stage(x_nhwc, halos, w_packed, bias, pre_scale, pre_shift,
                *, apply_pre, th):
    """Tiled conv (+ optional fused BN/ReLU prologue). Returns (y_bf16, stats)."""
    n, h, w, cin = x_nhwc.shape
    cout = w_packed.shape[-1]
    nt = h // th

    flops = 2 * n * h * w * (9 * cin) * cout
    bytes_accessed = int(
        x_nhwc.size * x_nhwc.dtype.itemsize
        + halos.size * halos.dtype.itemsize
        + w_packed.size * w_packed.dtype.itemsize
        + n * h * w * cout * 2            # bf16 y output
        + n * nt * 2 * cout * 4)          # f32 stats output

    return pl.pallas_call(
        functools.partial(_conv_stage_kernel, apply_pre),
        grid=(n, nt),
        in_specs=[
            pl.BlockSpec((1, th, w, cin), lambda b, i: (b, i, 0, 0)),
            pl.BlockSpec((1, 2, w, cin), lambda b, i: (b, i, 0, 0)),
            # Constant block index -> DMA'd once, resident in VMEM across grid.
            pl.BlockSpec((3, 3 * cin, cout), lambda b, i: (0, 0, 0)),
            pl.BlockSpec((1, cout), lambda b, i: (0, 0)),
            pl.BlockSpec((1, cin), lambda b, i: (0, 0)),
            pl.BlockSpec((1, cin), lambda b, i: (0, 0)),
        ],
        out_specs=[
            pl.BlockSpec((1, th, w, cout), lambda b, i: (b, i, 0, 0)),
            pl.BlockSpec((1, 1, 2, cout), lambda b, i: (b, i, 0, 0)),
        ],
        out_shape=[
            jax.ShapeDtypeStruct((n, h, w, cout), jnp.bfloat16),
            jax.ShapeDtypeStruct((n, nt, 2, cout), jnp.float32),
        ],
        compiler_params=pltpu.CompilerParams(
            dimension_semantics=("parallel", "parallel")),
        cost_estimate=pl.CostEstimate(flops=flops, transcendentals=0,
                                      bytes_accessed=bytes_accessed),
    )(x_nhwc, halos, w_packed, bias, pre_scale, pre_shift)


def _bn_relu(y, scale, shift, *, th):
    n, h, w, c = y.shape
    nt = h // th
    return pl.pallas_call(
        _bn_relu_kernel,
        grid=(n, nt),
        in_specs=[
            pl.BlockSpec((1, th, w, c), lambda b, i: (b, i, 0, 0)),
            pl.BlockSpec((1, c), lambda b, i: (0, 0)),
            pl.BlockSpec((1, c), lambda b, i: (0, 0)),
        ],
        out_specs=pl.BlockSpec((1, th, w, c), lambda b, i: (b, i, 0, 0)),
        out_shape=jax.ShapeDtypeStruct((n, h, w, c), jnp.float32),
        compiler_params=pltpu.CompilerParams(
            dimension_semantics=("parallel", "parallel")),
    )(y, scale, shift)


def _bn_scale_shift(stats, gamma, beta, count):
    """Fold global BatchNorm (biased batch stats) into one per-channel
    scale/shift from the per-tile sum / sum-of-squares."""
    tot = jnp.sum(stats, axis=(0, 1))                # (2, C)
    mean = tot[0] / count
    var = jnp.maximum(tot[1] / count - mean * mean, 0.0)
    scale = gamma * lax.rsqrt(var + _BN_EPS)
    shift = beta - mean * scale
    return scale.reshape(1, -1), shift.reshape(1, -1)


@jax.jit
def conv_block_forward(x_nchw, params):
    """Full conv_block forward.  x_nchw: (N, C, H, W) -> (N, F, H, W)."""
    w1, w2 = params["w1"], params["w2"]
    cin, f = w1.shape[2], w1.shape[3]
    n, _, h, w = x_nchw.shape

    cin_p = _round_up(cin, _LANE)
    f_p = _round_up(f, _LANE)
    th = _pick_row_tile(h)
    count = n * h * w

    # NCHW -> NHWC, channels zero-padded to lane width (inert, sliced off later).
    # (For very small first-layer Cin this inflates the input read; real UNet
    #  blocks have Cin >= 64 where this is the right trade.)
    x = jnp.transpose(x_nchw, (0, 2, 3, 1)).astype(jnp.float32)
    x = jnp.pad(x, ((0, 0), (0, 0), (0, 0), (0, cin_p - cin)))

    def pack_w(wgt, ci_p, co_p):
        ci, co = wgt.shape[2], wgt.shape[3]
        wgt = jnp.pad(wgt, ((0, 0), (0, 0), (0, ci_p - ci), (0, co_p - co)))
        # (3, 3, ci_p, co_p) -> (3, 3*ci_p, co_p); row = dx*ci_p + cin, matching
        # the in-kernel dx-tap concatenation order. Stored bf16 for the MXU.
        return wgt.reshape(3, 3 * ci_p, co_p).astype(jnp.bfloat16)

    def pad_vec(v, cp):
        return jnp.pad(v.astype(jnp.float32), (0, cp - v.shape[0]))

    w1p = pack_w(w1, cin_p, f_p)
    w2p = pack_w(w2, f_p, f_p)
    b1p = pad_vec(params["b1"], f_p).reshape(1, -1)
    b2p = pad_vec(params["b2"], f_p).reshape(1, -1)
    g1p, bt1p = pad_vec(params["g1"], f_p), pad_vec(params["beta1"], f_p)
    g2p, bt2p = pad_vec(params["g2"], f_p), pad_vec(params["beta2"], f_p)
    no_pre = jnp.zeros((1, cin_p), jnp.float32)

    # Stage 1: conv1 + bias; per-tile sum/sumsq for BN1 (global batch stats).
    y1, st1 = _conv_stage(x, _make_halos(x, th), w1p, b1p, no_pre, no_pre,
                          apply_pre=False, th=th)
    scale1, shift1 = _bn_scale_shift(st1, g1p, bt1p, count)

    # Stage 2: BN1+ReLU fused as the conv2 prologue; per-tile stats for BN2.
    y2, st2 = _conv_stage(y1, _make_halos(y1, th), w2p, b2p, scale1, shift1,
                          apply_pre=True, th=th)
    scale2, shift2 = _bn_scale_shift(st2, g2p, bt2p, count)

    # Finalize: BN2 + ReLU.
    out = _bn_relu(y2, scale2, shift2, th=th)

    return jnp.transpose(out[..., :f], (0, 3, 1, 2))


def init_params(key, num_channels, num_filters):
    """Deterministic synthetic init (PyTorch-like uniform fan-in bounds)."""
    k1, k2, k3, k4 = jax.random.split(key, 4)
    bound1 = 1.0 / jnp.sqrt(num_channels * 9.0)
    bound2 = 1.0 / jnp.sqrt(num_filters * 9.0)
    return {
        "w1": jax.random.uniform(k1, (3, 3, num_channels, num_filters),
                                 jnp.float32, -bound1, bound1),
        "b1": jax.random.uniform(k2, (num_filters,), jnp.float32, -bound1, bound1),
        "g1": jnp.ones((num_filters,), jnp.float32),
        "beta1": jnp.zeros((num_filters,), jnp.float32),
        "w2": jax.random.uniform(k3, (3, 3, num_filters, num_filters),
                                 jnp.float32, -bound2, bound2),
        "b2": jax.random.uniform(k4, (num_filters,), jnp.float32, -bound2, bound2),
        "g2": jnp.ones((num_filters,), jnp.float32),
        "beta2": jnp.zeros((num_filters,), jnp.float32),
    }


def _reference_forward(x_nchw, params):
    """Pure-JAX f32 reference (lax.conv) for a correctness sanity check."""
    def stage(x_nhwc, w, b, g, beta):
        y = lax.conv_general_dilated(
            x_nhwc, w, window_strides=(1, 1), padding="SAME",
            dimension_numbers=("NHWC", "HWIO", "NHWC"))
        y = y + b[None, None, None, :]
        mean = jnp.mean(y, axis=(0, 1, 2), keepdims=True)
        var = jnp.mean((y - mean) ** 2, axis=(0, 1, 2), keepdims=True)
        y = (y - mean) * lax.rsqrt(var + _BN_EPS)
        y = y * g[None, None, None, :] + beta[None, None, None, :]
        return jnp.maximum(y, 0.0)

    x = jnp.transpose(x_nchw, (0, 2, 3, 1))
    h = stage(x, params["w1"], params["b1"], params["g1"], params["beta1"])
    h = stage(h, params["w2"], params["b2"], params["g2"], params["beta2"])
    return jnp.transpose(h, (0, 3, 1, 2))


if __name__ == "__main__":
    num_channels, num_filters = 4, 8
    N, H, W = 2, 16, 16

    key = jax.random.PRNGKey(0)
    kx, kp = jax.random.split(key)
    x = jax.random.normal(kx, (N, num_channels, H, W), jnp.float32)
    params = init_params(kp, num_channels, num_filters)

    out = jax.block_until_ready(conv_block_forward(x, params))
    ref = _reference_forward(x, params)

    assert out.shape == (N, num_filters, H, W)
    max_err = float(jnp.max(jnp.abs(out - ref)))
    # bf16 matmul inputs / bf16 inter-stage activations -> loosened tolerance.
    assert jnp.allclose(out, ref, atol=5e-2, rtol=5e-2), f"max abs err {max_err}"

    print("KERNEL_OK")
</pallas_src>

<mosaic_0001>
module attributes {stable_mosaic.version = 11 : i64} {
  func.func @_conv_stage_kernel(%arg0: i32, %arg1: i32, %arg2: memref<1x8x16x128xf32, #tpu.memory_space<vmem>>, %arg3: memref<1x2x16x128xf32, #tpu.memory_space<vmem>>, %arg4: memref<3x384x128xbf16, #tpu.memory_space<vmem>>, %arg5: memref<1x128xf32, #tpu.memory_space<vmem>>, %arg6: memref<1x128xf32, #tpu.memory_space<vmem>>, %arg7: memref<1x128xf32, #tpu.memory_space<vmem>>, %arg8: memref<1x8x16x128xbf16, #tpu.memory_space<vmem>>, %arg9: memref<1x1x2x128xf32, #tpu.memory_space<vmem>>) attributes {dimension_semantics = [#tpu.dimension_semantics<parallel>, #tpu.dimension_semantics<parallel>], iteration_bounds = array<i64: 2, 2>, scalar_prefetch = 0 : i64, scratch_operands = 0 : i64, tpu.core_type = #tpu.core_type<tc>, window_params = [{transform_indices = @transform_0, window_bounds = array<i64: 1, 8, 16, 128>}, {transform_indices = @transform_1, window_bounds = array<i64: 1, 2, 16, 128>}, {pipeline_mode = #tpu.pipeline_mode<synchronous>, transform_indices = @transform_2, window_bounds = array<i64: 3, 384, 128>}, {pipeline_mode = #tpu.pipeline_mode<synchronous>, transform_indices = @transform_3, window_bounds = array<i64: 1, 128>}, {pipeline_mode = #tpu.pipeline_mode<synchronous>, transform_indices = @transform_4, window_bounds = array<i64: 1, 128>}, {pipeline_mode = #tpu.pipeline_mode<synchronous>, transform_indices = @transform_5, window_bounds = array<i64: 1, 128>}, {transform_indices = @transform_6, window_bounds = array<i64: 1, 8, 16, 128>}, {transform_indices = @transform_7, window_bounds = array<i64: 1, 1, 2, 128>}]} {
    %c0 = arith.constant 0 : index
    %c0_0 = arith.constant 0 : index
    %c0_1 = arith.constant 0 : index
    %c0_2 = arith.constant 0 : index
    %0 = vector.load %arg2[%c0, %c0_0, %c0_1, %c0_2] : memref<1x8x16x128xf32, #tpu.memory_space<vmem>>, vector<1x8x16x128xf32>
    %1 = vector.shape_cast %0 : vector<1x8x16x128xf32> to vector<8x16x128xf32>
    %c0_3 = arith.constant 0 : index
    %c0_4 = arith.constant 0 : index
    %c0_5 = arith.constant 0 : index
    %c0_6 = arith.constant 0 : index
    %2 = vector.load %arg3[%c0_3, %c0_4, %c0_5, %c0_6] : memref<1x2x16x128xf32, #tpu.memory_space<vmem>>, vector<1x2x16x128xf32>
    %3 = vector.shape_cast %2 : vector<1x2x16x128xf32> to vector<2x16x128xf32>
    %4 = vector.extract_strided_slice %3 {offsets = [0, 0, 0], sizes = [1, 16, 128], strides = [1, 1, 1]} : vector<2x16x128xf32> to vector<1x16x128xf32>
    %5 = vector.extract_strided_slice %3 {offsets = [1, 0, 0], sizes = [1, 16, 128], strides = [1, 1, 1]} : vector<2x16x128xf32> to vector<1x16x128xf32>
    %6 = tpu.concatenate %4, %1, %5 in 0 : vector<1x16x128xf32>, vector<8x16x128xf32>, vector<1x16x128xf32> -> vector<10x16x128xf32>
    %cst = arith.constant 0.000000e+00 : f32
    %7 = vector.broadcast %cst : f32 to vector<10x1x128xf32>
    %8 = tpu.concatenate %7, %6, %7 in 1 : vector<10x1x128xf32>, vector<10x16x128xf32>, vector<10x1x128xf32> -> vector<10x18x128xf32>
    %cst_7 = arith.constant 0.000000e+00 : f32
    %9 = vector.broadcast %cst_7 : f32 to vector<128x128xf32>
    %10 = vector.extract_strided_slice %8 {offsets = [0, 0, 0], sizes = [8, 18, 128], strides = [1, 1, 1]} : vector<10x18x128xf32> to vector<8x18x128xf32>
    %11 = vector.extract_strided_slice %10 {offsets = [0, 0, 0], sizes = [8, 16, 128], strides = [1, 1, 1]} : vector<8x18x128xf32> to vector<8x16x128xf32>
    %12 = vector.shape_cast %11 : vector<8x16x128xf32> to vector<128x128xf32>
    %13 = vector.extract_strided_slice %10 {offsets = [0, 1, 0], sizes = [8, 16, 128], strides = [1, 1, 1]} : vector<8x18x128xf32> to vector<8x16x128xf32>
    %14 = vector.shape_cast %13 : vector<8x16x128xf32> to vector<128x128xf32>
    %15 = vector.extract_strided_slice %10 {offsets = [0, 2, 0], sizes = [8, 16, 128], strides = [1, 1, 1]} : vector<8x18x128xf32> to vector<8x16x128xf32>
    %16 = vector.shape_cast %15 : vector<8x16x128xf32> to vector<128x128xf32>
    %17 = tpu.concatenate %12, %14, %16 in 1 : vector<128x128xf32>, vector<128x128xf32>, vector<128x128xf32> -> vector<128x384xf32>
    %18 = arith.truncf %17 : vector<128x384xf32> to vector<128x384xbf16>
    %c0_8 = arith.constant 0 : index
    %c0_9 = arith.constant 0 : index
    %c0_10 = arith.constant 0 : index
    %19 = vector.load %arg4[%c0_8, %c0_9, %c0_10] : memref<3x384x128xbf16, #tpu.memory_space<vmem>>, vector<1x384x128xbf16>
    %20 = vector.shape_cast %19 : vector<1x384x128xbf16> to vector<384x128xbf16>
    %cst_11 = arith.constant dense<0.000000e+00> : vector<128x128xf32>
    %21 = tpu.matmul %18, %20, %cst_11 {dimension_numbers = #tpu.dot_dimension_numbers<[1], [0], [0], [1], [0, 0, 1, 1], [], []>} : vector<128x384xbf16>, vector<384x128xbf16>, vector<128x128xf32> -> vector<128x128xf32>
    %22 = arith.addf %9, %21 : vector<128x128xf32>
    %23 = vector.extract_strided_slice %8 {offsets = [1, 0, 0], sizes = [8, 18, 128], strides = [1, 1, 1]} : vector<10x18x128xf32> to vector<8x18x128xf32>
    %24 = vector.extract_strided_slice %23 {offsets = [0, 0, 0], sizes = [8, 16, 128], strides = [1, 1, 1]} : vector<8x18x128xf32> to vector<8x16x128xf32>
    %25 = vector.shape_cast %24 : vector<8x16x128xf32> to vector<128x128xf32>
    %26 = vector.extract_strided_slice %23 {offsets = [0, 1, 0], sizes = [8, 16, 128], strides = [1, 1, 1]} : vector<8x18x128xf32> to vector<8x16x128xf32>
    %27 = vector.shape_cast %26 : vector<8x16x128xf32> to vector<128x128xf32>
    %28 = vector.extract_strided_slice %23 {offsets = [0, 2, 0], sizes = [8, 16, 128], strides = [1, 1, 1]} : vector<8x18x128xf32> to vector<8x16x128xf32>
    %29 = vector.shape_cast %28 : vector<8x16x128xf32> to vector<128x128xf32>
    %30 = tpu.concatenate %25, %27, %29 in 1 : vector<128x128xf32>, vector<128x128xf32>, vector<128x128xf32> -> vector<128x384xf32>
    %31 = arith.truncf %30 : vector<128x384xf32> to vector<128x384xbf16>
    %c1 = arith.constant 1 : index
    %c0_12 = arith.constant 0 : index
    %c0_13 = arith.constant 0 : index
    %32 = vector.load %arg4[%c1, %c0_12, %c0_13] : memref<3x384x128xbf16, #tpu.memory_space<vmem>>, vector<1x384x128xbf16>
    %33 = vector.shape_cast %32 : vector<1x384x128xbf16> to vector<384x128xbf16>
    %cst_14 = arith.constant dense<0.000000e+00> : vector<128x128xf32>
    %34 = tpu.matmul %31, %33, %cst_14 {dimension_numbers = #tpu.dot_dimension_numbers<[1], [0], [0], [1], [0, 0, 1, 1], [], []>} : vector<128x384xbf16>, vector<384x128xbf16>, vector<128x128xf32> -> vector<128x128xf32>
    %35 = arith.addf %22, %34 : vector<128x128xf32>
    %36 = vector.extract_strided_slice %8 {offsets = [2, 0, 0], sizes = [8, 18, 128], strides = [1, 1, 1]} : vector<10x18x128xf32> to vector<8x18x128xf32>
    %37 = vector.extract_strided_slice %36 {offsets = [0, 0, 0], sizes = [8, 16, 128], strides = [1, 1, 1]} : vector<8x18x128xf32> to vector<8x16x128xf32>
    %38 = vector.shape_cast %37 : vector<8x16x128xf32> to vector<128x128xf32>
    %39 = vector.extract_strided_slice %36 {offsets = [0, 1, 0], sizes = [8, 16, 128], strides = [1, 1, 1]} : vector<8x18x128xf32> to vector<8x16x128xf32>
    %40 = vector.shape_cast %39 : vector<8x16x128xf32> to vector<128x128xf32>
    %41 = vector.extract_strided_slice %36 {offsets = [0, 2, 0], sizes = [8, 16, 128], strides = [1, 1, 1]} : vector<8x18x128xf32> to vector<8x16x128xf32>
    %42 = vector.shape_cast %41 : vector<8x16x128xf32> to vector<128x128xf32>
    %43 = tpu.concatenate %38, %40, %42 in 1 : vector<128x128xf32>, vector<128x128xf32>, vector<128x128xf32> -> vector<128x384xf32>
    %44 = arith.truncf %43 : vector<128x384xf32> to vector<128x384xbf16>
    %c2 = arith.constant 2 : index
    %c0_15 = arith.constant 0 : index
    %c0_16 = arith.constant 0 : index
    %45 = vector.load %arg4[%c2, %c0_15, %c0_16] : memref<3x384x128xbf16, #tpu.memory_space<vmem>>, vector<1x384x128xbf16>
    %46 = vector.shape_cast %45 : vector<1x384x128xbf16> to vector<384x128xbf16>
    %cst_17 = arith.constant dense<0.000000e+00> : vector<128x128xf32>
    %47 = tpu.matmul %44, %46, %cst_17 {dimension_numbers = #tpu.dot_dimension_numbers<[1], [0], [0], [1], [0, 0, 1, 1], [], []>} : vector<128x384xbf16>, vector<384x128xbf16>, vector<128x128xf32> -> vector<128x128xf32>
    %48 = arith.addf %35, %47 : vector<128x128xf32>
    %c0_18 = arith.constant 0 : index
    %c0_19 = arith.constant 0 : index
    %49 = vector.load %arg5[%c0_18, %c0_19] : memref<1x128xf32, #tpu.memory_space<vmem>>, vector<1x128xf32>
    %50 = vector.broadcast %49 : vector<1x128xf32> to vector<128x128xf32>
    %51 = arith.addf %48, %50 : vector<128x128xf32>
    %52 = vector.shape_cast %51 : vector<128x128xf32> to vector<1x8x16x128xf32>
    %53 = arith.truncf %52 : vector<1x8x16x128xf32> to vector<1x8x16x128xbf16>
    %c0_20 = arith.constant 0 : index
    %c0_21 = arith.constant 0 : index
    %c0_22 = arith.constant 0 : index
    %c0_23 = arith.constant 0 : index
    %54 = vector.load %arg8[%c0_20, %c0_21, %c0_22, %c0_23] : memref<1x8x16x128xbf16, #tpu.memory_space<vmem>>, vector<1x8x16x128xbf16>
    tpu.vector_store %arg8[%c0_20, %c0_21, %c0_22, %c0_23], %53 {strides = array<i32>} : memref<1x8x16x128xbf16, #tpu.memory_space<vmem>>, vector<1x8x16x128xbf16>,
    %cst_24 = arith.constant dense<0.000000e+00> : vector<128xf32>
    %55 = vector.multi_reduction <add>, %51, %cst_24 [0] : vector<128x128xf32> to vector<128xf32>
    %56 = vector.shape_cast %55 : vector<128xf32> to vector<1x128xf32>
    %57 = arith.mulf %51, %51 : vector<128x128xf32>
    %cst_25 = arith.constant dense<0.000000e+00> : vector<128xf32>
    %58 = vector.multi_reduction <add>, %57, %cst_25 [0] : vector<128x128xf32> to vector<128xf32>
    %59 = vector.shape_cast %58 : vector<128xf32> to vector<1x128xf32>
    %60 = tpu.concatenate %56, %59 in 0 : vector<1x128xf32>, vector<1x128xf32> -> vector<2x128xf32>
    %61 = vector.shape_cast %60 : vector<2x128xf32> to vector<1x1x2x128xf32>
    %c0_26 = arith.constant 0 : index
    %c0_27 = arith.constant 0 : index
    %c0_28 = arith.constant 0 : index
    %c0_29 = arith.constant 0 : index
    %62 = vector.load %arg9[%c0_26, %c0_27, %c0_28, %c0_29] : memref<1x1x2x128xf32, #tpu.memory_space<vmem>>, vector<1x1x2x128xf32>
    tpu.vector_store %arg9[%c0_26, %c0_27, %c0_28, %c0_29], %61 {strides = array<i32>} : memref<1x1x2x128xf32, #tpu.memory_space<vmem>>, vector<1x1x2x128xf32>,
    return
  }
  func.func @transform_0(%arg0: i32, %arg1: i32) -> (i32, i32, i32, i32) {
    %c0_i32 = arith.constant 0 : i32
    %c0_i32_0 = arith.constant 0 : i32
    %c0_i32_1 = arith.constant 0 : i32
    return %arg0, %arg1, %c0_i32, %c0_i32_0 : i32, i32, i32, i32
  }
  func.func @transform_1(%arg0: i32, %arg1: i32) -> (i32, i32, i32, i32) {
    %c0_i32 = arith.constant 0 : i32
    %c0_i32_0 = arith.constant 0 : i32
    %c0_i32_1 = arith.constant 0 : i32
    return %arg0, %arg1, %c0_i32, %c0_i32_0 : i32, i32, i32, i32
  }
  func.func @transform_2(%arg0: i32, %arg1: i32) -> (i32, i32, i32) {
    %c0_i32 = arith.constant 0 : i32
    %c0_i32_0 = arith.constant 0 : i32
    %c0_i32_1 = arith.constant 0 : i32
    %c0_i32_2 = arith.constant 0 : i32
    return %c0_i32, %c0_i32_0, %c0_i32_1 : i32, i32, i32
  }
  func.func @transform_3(%arg0: i32, %arg1: i32) -> (i32, i32) {
    %c0_i32 = arith.constant 0 : i32
    %c0_i32_0 = arith.constant 0 : i32
    %c0_i32_1 = arith.constant 0 : i32
    return %c0_i32, %c0_i32_0 : i32, i32
  }
  func.func @transform_4(%arg0: i32, %arg1: i32) -> (i32, i32) {
    %c0_i32 = arith.constant 0 : i32
    %c0_i32_0 = arith.constant 0 : i32
    %c0_i32_1 = arith.constant 0 : i32
    return %c0_i32, %c0_i32_0 : i32, i32
  }
  func.func @transform_5(%arg0: i32, %arg1: i32) -> (i32, i32) {
    %c0_i32 = arith.constant 0 : i32
    %c0_i32_0 = arith.constant 0 : i32
    %c0_i32_1 = arith.constant 0 : i32
    return %c0_i32, %c0_i32_0 : i32, i32
  }
  func.func @transform_6(%arg0: i32, %arg1: i32) -> (i32, i32, i32, i32) {
    %c0_i32 = arith.constant 0 : i32
    %c0_i32_0 = arith.constant 0 : i32
    %c0_i32_1 = arith.constant 0 : i32
    return %arg0, %arg1, %c0_i32, %c0_i32_0 : i32, i32, i32, i32
  }
  func.func @transform_7(%arg0: i32, %arg1: i32) -> (i32, i32, i32, i32) {
    %c0_i32 = arith.constant 0 : i32
    %c0_i32_0 = arith.constant 0 : i32
    %c0_i32_1 = arith.constant 0 : i32
    return %arg0, %arg1, %c0_i32, %c0_i32_0 : i32, i32, i32, i32
  }
}

module attributes {stable_mosaic.version = 11 : i64} {
  func.func @_conv_stage_kernel(%arg0: i32, %arg1: i32, %arg2: memref<1x8x16x128xbf16, #tpu.memory_space<vmem>>, %arg3: memref<1x2x16x128xbf16, #tpu.memory_space<vmem>>, %arg4: memref<3x384x128xbf16, #tpu.memory_space<vmem>>, %arg5: memref<1x128xf32, #tpu.memory_space<vmem>>, %arg6: memref<1x128xf32, #tpu.memory_space<vmem>>, %arg7: memref<1x128xf32, #tpu.memory_space<vmem>>, %arg8: memref<1x8x16x128xbf16, #tpu.memory_space<vmem>>, %arg9: memref<1x1x2x128xf32, #tpu.memory_space<vmem>>) attributes {dimension_semantics = [#tpu.dimension_semantics<parallel>, #tpu.dimension_semantics<parallel>], iteration_bounds = array<i64: 2, 2>, scalar_prefetch = 0 : i64, scratch_operands = 0 : i64, tpu.core_type = #tpu.core_type<tc>, window_params = [{transform_indices = @transform_0, window_bounds = array<i64: 1, 8, 16, 128>}, {transform_indices = @transform_1, window_bounds = array<i64: 1, 2, 16, 128>}, {pipeline_mode = #tpu.pipeline_mode<synchronous>, transform_indices = @transform_2, window_bounds = array<i64: 3, 384, 128>}, {pipeline_mode = #tpu.pipeline_mode<synchronous>, transform_indices = @transform_3, window_bounds = array<i64: 1, 128>}, {pipeline_mode = #tpu.pipeline_mode<synchronous>, transform_indices = @transform_4, window_bounds = array<i64: 1, 128>}, {pipeline_mode = #tpu.pipeline_mode<synchronous>, transform_indices = @transform_5, window_bounds = array<i64: 1, 128>}, {transform_indices = @transform_6, window_bounds = array<i64: 1, 8, 16, 128>}, {transform_indices = @transform_7, window_bounds = array<i64: 1, 1, 2, 128>}]} {
    %c0 = arith.constant 0 : index
    %c0_0 = arith.constant 0 : index
    %c0_1 = arith.constant 0 : index
    %c0_2 = arith.constant 0 : index
    %0 = vector.load %arg2[%c0, %c0_0, %c0_1, %c0_2] : memref<1x8x16x128xbf16, #tpu.memory_space<vmem>>, vector<1x8x16x128xbf16>
    %1 = vector.shape_cast %0 : vector<1x8x16x128xbf16> to vector<8x16x128xbf16>
    %2 = arith.extf %1 : vector<8x16x128xbf16> to vector<8x16x128xf32>
    %c0_3 = arith.constant 0 : index
    %c0_4 = arith.constant 0 : index
    %c0_5 = arith.constant 0 : index
    %c0_6 = arith.constant 0 : index
    %3 = vector.load %arg3[%c0_3, %c0_4, %c0_5, %c0_6] : memref<1x2x16x128xbf16, #tpu.memory_space<vmem>>, vector<1x2x16x128xbf16>
    %4 = vector.shape_cast %3 : vector<1x2x16x128xbf16> to vector<2x16x128xbf16>
    %5 = arith.extf %4 : vector<2x16x128xbf16> to vector<2x16x128xf32>
    %6 = vector.extract_strided_slice %5 {offsets = [0, 0, 0], sizes = [1, 16, 128], strides = [1, 1, 1]} : vector<2x16x128xf32> to vector<1x16x128xf32>
    %7 = vector.extract_strided_slice %5 {offsets = [1, 0, 0], sizes = [1, 16, 128], strides = [1, 1, 1]} : vector<2x16x128xf32> to vector<1x16x128xf32>
    %c0_7 = arith.constant 0 : index
    %c0_8 = arith.constant 0 : index
    %8 = vector.load %arg6[%c0_7, %c0_8] : memref<1x128xf32, #tpu.memory_space<vmem>>, vector<1x128xf32>
    %9 = vector.shape_cast %8 : vector<1x128xf32> to vector<1x1x128xf32>
    %c0_9 = arith.constant 0 : index
    %c0_10 = arith.constant 0 : index
    %10 = vector.load %arg7[%c0_9, %c0_10] : memref<1x128xf32, #tpu.memory_space<vmem>>, vector<1x128xf32>
    %11 = vector.shape_cast %10 : vector<1x128xf32> to vector<1x1x128xf32>
    %12 = vector.broadcast %9 : vector<1x1x128xf32> to vector<8x16x128xf32>
    %13 = arith.mulf %2, %12 : vector<8x16x128xf32>
    %14 = vector.broadcast %11 : vector<1x1x128xf32> to vector<8x16x128xf32>
    %15 = arith.addf %13, %14 : vector<8x16x128xf32>
    %cst = arith.constant 0.000000e+00 : f32
    %16 = vector.broadcast %cst : f32 to vector<8x16x128xf32>
    %17 = arith.maximumf %15, %16 : vector<8x16x128xf32>
    %18 = vector.broadcast %9 : vector<1x1x128xf32> to vector<1x16x128xf32>
    %19 = arith.mulf %6, %18 : vector<1x16x128xf32>
    %20 = vector.broadcast %11 : vector<1x1x128xf32> to vector<1x16x128xf32>
    %21 = arith.addf %19, %20 : vector<1x16x128xf32>
    %cst_11 = arith.constant 0.000000e+00 : f32
    %22 = vector.broadcast %cst_11 : f32 to vector<1x16x128xf32>
    %23 = arith.maximumf %21, %22 : vector<1x16x128xf32>
    %24 = vector.broadcast %9 : vector<1x1x128xf32> to vector<1x16x128xf32>
    %25 = arith.mulf %7, %24 : vector<1x16x128xf32>
    %26 = vector.broadcast %11 : vector<1x1x128xf32> to vector<1x16x128xf32>
    %27 = arith.addf %25, %26 : vector<1x16x128xf32>
    %cst_12 = arith.constant 0.000000e+00 : f32
    %28 = vector.broadcast %cst_12 : f32 to vector<1x16x128xf32>
    %29 = arith.maximumf %27, %28 : vector<1x16x128xf32>
    %c0_i32 = arith.constant 0 : i32
    %30 = arith.cmpi sgt, %arg1, %c0_i32 : i32
    %31 = arith.extui %30 : i1 to i32
    %32 = arith.sitofp %31 : i32 to f32
    %33 = vector.broadcast %32 : f32 to vector<1x16x128xf32>
    %34 = arith.mulf %23, %33 : vector<1x16x128xf32>
    %c1_i32 = arith.constant 1 : i32
    %35 = arith.cmpi slt, %arg1, %c1_i32 : i32
    %36 = arith.extui %35 : i1 to i32
    %37 = arith.sitofp %36 : i32 to f32
    %38 = vector.broadcast %37 : f32 to vector<1x16x128xf32>
    %39 = arith.mulf %29, %38 : vector<1x16x128xf32>
    %40 = tpu.concatenate %34, %17, %39 in 0 : vector<1x16x128xf32>, vector<8x16x128xf32>, vector<1x16x128xf32> -> vector<10x16x128xf32>
    %cst_13 = arith.constant 0.000000e+00 : f32
    %41 = vector.broadcast %cst_13 : f32 to vector<10x1x128xf32>
    %42 = tpu.concatenate %41, %40, %41 in 1 : vector<10x1x128xf32>, vector<10x16x128xf32>, vector<10x1x128xf32> -> vector<10x18x128xf32>
    %cst_14 = arith.constant 0.000000e+00 : f32
    %43 = vector.broadcast %cst_14 : f32 to vector<128x128xf32>
    %44 = vector.extract_strided_slice %42 {offsets = [0, 0, 0], sizes = [8, 18, 128], strides = [1, 1, 1]} : vector<10x18x128xf32> to vector<8x18x128xf32>
    %45 = vector.extract_strided_slice %44 {offsets = [0, 0, 0], sizes = [8, 16, 128], strides = [1, 1, 1]} : vector<8x18x128xf32> to vector<8x16x128xf32>
    %46 = vector.shape_cast %45 : vector<8x16x128xf32> to vector<128x128xf32>
    %47 = vector.extract_strided_slice %44 {offsets = [0, 1, 0], sizes = [8, 16, 128], strides = [1, 1, 1]} : vector<8x18x128xf32> to vector<8x16x128xf32>
    %48 = vector.shape_cast %47 : vector<8x16x128xf32> to vector<128x128xf32>
    %49 = vector.extract_strided_slice %44 {offsets = [0, 2, 0], sizes = [8, 16, 128], strides = [1, 1, 1]} : vector<8x18x128xf32> to vector<8x16x128xf32>
    %50 = vector.shape_cast %49 : vector<8x16x128xf32> to vector<128x128xf32>
    %51 = tpu.concatenate %46, %48, %50 in 1 : vector<128x128xf32>, vector<128x128xf32>, vector<128x128xf32> -> vector<128x384xf32>
    %52 = arith.truncf %51 : vector<128x384xf32> to vector<128x384xbf16>
    %c0_15 = arith.constant 0 : index
    %c0_16 = arith.constant 0 : index
    %c0_17 = arith.constant 0 : index
    %53 = vector.load %arg4[%c0_15, %c0_16, %c0_17] : memref<3x384x128xbf16, #tpu.memory_space<vmem>>, vector<1x384x128xbf16>
    %54 = vector.shape_cast %53 : vector<1x384x128xbf16> to vector<384x128xbf16>
    %cst_18 = arith.constant dense<0.000000e+00> : vector<128x128xf32>
    %55 = tpu.matmul %52, %54, %cst_18 {dimension_numbers = #tpu.dot_dimension_numbers<[1], [0], [0], [1], [0, 0, 1, 1], [], []>} : vector<128x384xbf16>, vector<384x128xbf16>, vector<128x128xf32> -> vector<128x128xf32>
    %56 = arith.addf %43, %55 : vector<128x128xf32>
    %57 = vector.extract_strided_slice %42 {offsets = [1, 0, 0], sizes = [8, 18, 128], strides = [1, 1, 1]} : vector<10x18x128xf32> to vector<8x18x128xf32>
    %58 = vector.extract_strided_slice %57 {offsets = [0, 0, 0], sizes = [8, 16, 128], strides = [1, 1, 1]} : vector<8x18x128xf32> to vector<8x16x128xf32>
    %59 = vector.shape_cast %58 : vector<8x16x128xf32> to vector<128x128xf32>
    %60 = vector.extract_strided_slice %57 {offsets = [0, 1, 0], sizes = [8, 16, 128], strides = [1, 1, 1]} : vector<8x18x128xf32> to vector<8x16x128xf32>
    %61 = vector.shape_cast %60 : vector<8x16x128xf32> to vector<128x128xf32>
    %62 = vector.extract_strided_slice %57 {offsets = [0, 2, 0], sizes = [8, 16, 128], strides = [1, 1, 1]} : vector<8x18x128xf32> to vector<8x16x128xf32>
    %63 = vector.shape_cast %62 : vector<8x16x128xf32> to vector<128x128xf32>
    %64 = tpu.concatenate %59, %61, %63 in 1 : vector<128x128xf32>, vector<128x128xf32>, vector<128x128xf32> -> vector<128x384xf32>
    %65 = arith.truncf %64 : vector<128x384xf32> to vector<128x384xbf16>
    %c1 = arith.constant 1 : index
    %c0_19 = arith.constant 0 : index
    %c0_20 = arith.constant 0 : index
    %66 = vector.load %arg4[%c1, %c0_19, %c0_20] : memref<3x384x128xbf16, #tpu.memory_space<vmem>>, vector<1x384x128xbf16>
    %67 = vector.shape_cast %66 : vector<1x384x128xbf16> to vector<384x128xbf16>
    %cst_21 = arith.constant dense<0.000000e+00> : vector<128x128xf32>
    %68 = tpu.matmul %65, %67, %cst_21 {dimension_numbers = #tpu.dot_dimension_numbers<[1], [0], [0], [1], [0, 0, 1, 1], [], []>} : vector<128x384xbf16>, vector<384x128xbf16>, vector<128x128xf32> -> vector<128x128xf32>
    %69 = arith.addf %56, %68 : vector<128x128xf32>
    %70 = vector.extract_strided_slice %42 {offsets = [2, 0, 0], sizes = [8, 18, 128], strides = [1, 1, 1]} : vector<10x18x128xf32> to vector<8x18x128xf32>
    %71 = vector.extract_strided_slice %70 {offsets = [0, 0, 0], sizes = [8, 16, 128], strides = [1, 1, 1]} : vector<8x18x128xf32> to vector<8x16x128xf32>
    %72 = vector.shape_cast %71 : vector<8x16x128xf32> to vector<128x128xf32>
    %73 = vector.extract_strided_slice %70 {offsets = [0, 1, 0], sizes = [8, 16, 128], strides = [1, 1, 1]} : vector<8x18x128xf32> to vector<8x16x128xf32>
    %74 = vector.shape_cast %73 : vector<8x16x128xf32> to vector<128x128xf32>
    %75 = vector.extract_strided_slice %70 {offsets = [0, 2, 0], sizes = [8, 16, 128], strides = [1, 1, 1]} : vector<8x18x128xf32> to vector<8x16x128xf32>
    %76 = vector.shape_cast %75 : vector<8x16x128xf32> to vector<128x128xf32>
    %77 = tpu.concatenate %72, %74, %76 in 1 : vector<128x128xf32>, vector<128x128xf32>, vector<128x128xf32> -> vector<128x384xf32>
    %78 = arith.truncf %77 : vector<128x384xf32> to vector<128x384xbf16>
    %c2 = arith.constant 2 : index
    %c0_22 = arith.constant 0 : index
    %c0_23 = arith.constant 0 : index
    %79 = vector.load %arg4[%c2, %c0_22, %c0_23] : memref<3x384x128xbf16, #tpu.memory_space<vmem>>, vector<1x384x128xbf16>
    %80 = vector.shape_cast %79 : vector<1x384x128xbf16> to vector<384x128xbf16>
    %cst_24 = arith.constant dense<0.000000e+00> : vector<128x128xf32>
    %81 = tpu.matmul %78, %80, %cst_24 {dimension_numbers = #tpu.dot_dimension_numbers<[1], [0], [0], [1], [0, 0, 1, 1], [], []>} : vector<128x384xbf16>, vector<384x128xbf16>, vector<128x128xf32> -> vector<128x128xf32>
    %82 = arith.addf %69, %81 : vector<128x128xf32>
    %c0_25 = arith.constant 0 : index
    %c0_26 = arith.constant 0 : index
    %83 = vector.load %arg5[%c0_25, %c0_26] : memref<1x128xf32, #tpu.memory_space<vmem>>, vector<1x128xf32>
    %84 = vector.broadcast %83 : vector<1x128xf32> to vector<128x128xf32>
    %85 = arith.addf %82, %84 : vector<128x128xf32>
    %86 = vector.shape_cast %85 : vector<128x128xf32> to vector<1x8x16x128xf32>
    %87 = arith.truncf %86 : vector<1x8x16x128xf32> to vector<1x8x16x128xbf16>
    %c0_27 = arith.constant 0 : index
    %c0_28 = arith.constant 0 : index
    %c0_29 = arith.constant 0 : index
    %c0_30 = arith.constant 0 : index
    %88 = vector.load %arg8[%c0_27, %c0_28, %c0_29, %c0_30] : memref<1x8x16x128xbf16, #tpu.memory_space<vmem>>, vector<1x8x16x128xbf16>
    tpu.vector_store %arg8[%c0_27, %c0_28, %c0_29, %c0_30], %87 {strides = array<i32>} : memref<1x8x16x128xbf16, #tpu.memory_space<vmem>>, vector<1x8x16x128xbf16>,
    %cst_31 = arith.constant dense<0.000000e+00> : vector<128xf32>
    %89 = vector.multi_reduction <add>, %85, %cst_31 [0] : vector<128x128xf32> to vector<128xf32>
    %90 = vector.shape_cast %89 : vector<128xf32> to vector<1x128xf32>
    %91 = arith.mulf %85, %85 : vector<128x128xf32>
    %cst_32 = arith.constant dense<0.000000e+00> : vector<128xf32>
    %92 = vector.multi_reduction <add>, %91, %cst_32 [0] : vector<128x128xf32> to vector<128xf32>
    %93 = vector.shape_cast %92 : vector<128xf32> to vector<1x128xf32>
    %94 = tpu.concatenate %90, %93 in 0 : vector<1x128xf32>, vector<1x128xf32> -> vector<2x128xf32>
    %95 = vector.shape_cast %94 : vector<2x128xf32> to vector<1x1x2x128xf32>
    %c0_33 = arith.constant 0 : index
    %c0_34 = arith.constant 0 : index
    %c0_35 = arith.constant 0 : index
    %c0_36 = arith.constant 0 : index
    %96 = vector.load %arg9[%c0_33, %c0_34, %c0_35, %c0_36] : memref<1x1x2x128xf32, #tpu.memory_space<vmem>>, vector<1x1x2x128xf32>
    tpu.vector_store %arg9[%c0_33, %c0_34, %c0_35, %c0_36], %95 {strides = array<i32>} : memref<1x1x2x128xf32, #tpu.memory_space<vmem>>, vector<1x1x2x128xf32>,
    return
  }
  func.func @transform_0(%arg0: i32, %arg1: i32) -> (i32, i32, i32, i32) {
    %c0_i32 = arith.constant 0 : i32
    %c0_i32_0 = arith.constant 0 : i32
    %c0_i32_1 = arith.constant 0 : i32
    return %arg0, %arg1, %c0_i32, %c0_i32_0 : i32, i32, i32, i32
  }
  func.func @transform_1(%arg0: i32, %arg1: i32) -> (i32, i32, i32, i32) {
    %c0_i32 = arith.constant 0 : i32
    %c0_i32_0 = arith.constant 0 : i32
    %c0_i32_1 = arith.constant 0 : i32
    return %arg0, %arg1, %c0_i32, %c0_i32_0 : i32, i32, i32, i32
  }
  func.func @transform_2(%arg0: i32, %arg1: i32) -> (i32, i32, i32) {
    %c0_i32 = arith.constant 0 : i32
    %c0_i32_0 = arith.constant 0 : i32
    %c0_i32_1 = arith.constant 0 : i32
    %c0_i32_2 = arith.constant 0 : i32
    return %c0_i32, %c0_i32_0, %c0_i32_1 : i32, i32, i32
  }
  func.func @transform_3(%arg0: i32, %arg1: i32) -> (i32, i32) {
    %c0_i32 = arith.constant 0 : i32
    %c0_i32_0 = arith.constant 0 : i32
    %c0_i32_1 = arith.constant 0 : i32
    return %c0_i32, %c0_i32_0 : i32, i32
  }
  func.func @transform_4(%arg0: i32, %arg1: i32) -> (i32, i32) {
    %c0_i32 = arith.constant 0 : i32
    %c0_i32_0 = arith.constant 0 : i32
    %c0_i32_1 = arith.constant 0 : i32
    return %c0_i32, %c0_i32_0 : i32, i32
  }
  func.func @transform_5(%arg0: i32, %arg1: i32) -> (i32, i32) {
    %c0_i32 = arith.constant 0 : i32
    %c0_i32_0 = arith.constant 0 : i32
    %c0_i32_1 = arith.constant 0 : i32
    return %c0_i32, %c0_i32_0 : i32, i32
  }
  func.func @transform_6(%arg0: i32, %arg1: i32) -> (i32, i32, i32, i32) {
    %c0_i32 = arith.constant 0 : i32
    %c0_i32_0 = arith.constant 0 : i32
    %c0_i32_1 = arith.constant 0 : i32
    return %arg0, %arg1, %c0_i32, %c0_i32_0 : i32, i32, i32, i32
  }
  func.func @transform_7(%arg0: i32, %arg1: i32) -> (i32, i32, i32, i32) {
    %c0_i32 = arith.constant 0 : i32
    %c0_i32_0 = arith.constant 0 : i32
    %c0_i32_1 = arith.constant 0 : i32
    return %arg0, %arg1, %c0_i32, %c0_i32_0 : i32, i32, i32, i32
  }
}

module attributes {stable_mosaic.version = 11 : i64} {
  func.func @_bn_relu_kernel(%arg0: i32, %arg1: i32, %arg2: memref<1x8x16x128xbf16, #tpu.memory_space<vmem>>, %arg3: memref<1x128xf32, #tpu.memory_space<vmem>>, %arg4: memref<1x128xf32, #tpu.memory_space<vmem>>, %arg5: memref<1x8x16x128xf32, #tpu.memory_space<vmem>>) attributes {dimension_semantics = [#tpu.dimension_semantics<parallel>, #tpu.dimension_semantics<parallel>], iteration_bounds = array<i64: 2, 2>, scalar_prefetch = 0 : i64, scratch_operands = 0 : i64, tpu.core_type = #tpu.core_type<tc>, window_params = [{transform_indices = @transform_0, window_bounds = array<i64: 1, 8, 16, 128>}, {pipeline_mode = #tpu.pipeline_mode<synchronous>, transform_indices = @transform_1, window_bounds = array<i64: 1, 128>}, {pipeline_mode = #tpu.pipeline_mode<synchronous>, transform_indices = @transform_2, window_bounds = array<i64: 1, 128>}, {transform_indices = @transform_3, window_bounds = array<i64: 1, 8, 16, 128>}]} {
    %c0 = arith.constant 0 : index
    %c0_0 = arith.constant 0 : index
    %c0_1 = arith.constant 0 : index
    %c0_2 = arith.constant 0 : index
    %0 = vector.load %arg2[%c0, %c0_0, %c0_1, %c0_2] : memref<1x8x16x128xbf16, #tpu.memory_space<vmem>>, vector<1x8x16x128xbf16>
    %1 = arith.extf %0 : vector<1x8x16x128xbf16> to vector<1x8x16x128xf32>
    %c0_3 = arith.constant 0 : index
    %c0_4 = arith.constant 0 : index
    %2 = vector.load %arg3[%c0_3, %c0_4] : memref<1x128xf32, #tpu.memory_space<vmem>>, vector<1x128xf32>
    %3 = vector.shape_cast %2 : vector<1x128xf32> to vector<1x1x1x128xf32>
    %c0_5 = arith.constant 0 : index
    %c0_6 = arith.constant 0 : index
    %4 = vector.load %arg4[%c0_5, %c0_6] : memref<1x128xf32, #tpu.memory_space<vmem>>, vector<1x128xf32>
    %5 = vector.shape_cast %4 : vector<1x128xf32> to vector<1x1x1x128xf32>
    %6 = vector.broadcast %3 : vector<1x1x1x128xf32> to vector<1x8x16x128xf32>
    %7 = arith.mulf %1, %6 : vector<1x8x16x128xf32>
    %8 = vector.broadcast %5 : vector<1x1x1x128xf32> to vector<1x8x16x128xf32>
    %9 = arith.addf %7, %8 : vector<1x8x16x128xf32>
    %cst = arith.constant 0.000000e+00 : f32
    %10 = vector.broadcast %cst : f32 to vector<1x8x16x128xf32>
    %11 = arith.maximumf %9, %10 : vector<1x8x16x128xf32>
    %c0_7 = arith.constant 0 : index
    %c0_8 = arith.constant 0 : index
    %c0_9 = arith.constant 0 : index
    %c0_10 = arith.constant 0 : index
    %12 = vector.load %arg5[%c0_7, %c0_8, %c0_9, %c0_10] : memref<1x8x16x128xf32, #tpu.memory_space<vmem>>, vector<1x8x16x128xf32>
    tpu.vector_store %arg5[%c0_7, %c0_8, %c0_9, %c0_10], %11 {strides = array<i32>} : memref<1x8x16x128xf32, #tpu.memory_space<vmem>>, vector<1x8x16x128xf32>,
    return
  }
  func.func @transform_0(%arg0: i32, %arg1: i32) -> (i32, i32, i32, i32) {
    %c0_i32 = arith.constant 0 : i32
    %c0_i32_0 = arith.constant 0 : i32
    %c0_i32_1 = arith.constant 0 : i32
    return %arg0, %arg1, %c0_i32, %c0_i32_0 : i32, i32, i32, i32
  }
  func.func @transform_1(%arg0: i32, %arg1: i32) -> (i32, i32) {
    %c0_i32 = arith.constant 0 : i32
    %c0_i32_0 = arith.constant 0 : i32
    %c0_i32_1 = arith.constant 0 : i32
    return %c0_i32, %c0_i32_0 : i32, i32
  }
  func.func @transform_2(%arg0: i32, %arg1: i32) -> (i32, i32) {
    %c0_i32 = arith.constant 0 : i32
    %c0_i32_0 = arith.constant 0 : i32
    %c0_i32_1 = arith.constant 0 : i32
    return %c0_i32, %c0_i32_0 : i32, i32
  }
  func.func @transform_3(%arg0: i32, %arg1: i32) -> (i32, i32, i32, i32) {
    %c0_i32 = arith.constant 0 : i32
    %c0_i32_0 = arith.constant 0 : i32
    %c0_i32_1 = arith.constant 0 : i32
    return %arg0, %arg1, %c0_i32, %c0_i32_0 : i32, i32, i32, i32
  }
}

</mosaic_0001>

<llo_original>
// kernel: conv_block_forward.5
$region0: #{conv_block_forward.5}
  #allocation0 [shape = 'u32[]', space=smem, size = 0x4, offset = 0x4, fixed_abs, tag = 'smem constant byte address 0x4 - core index']
  #allocation1 [shape = 'u32[144,128]{1,0:T(1,128)}', space=vmem, size = 0x12000, scoped, tag = 'internal scratch']
  %s0 = inlined_call_operand.vmem [shape: bf16[2,16,16,128], index: 0, kind: input, shape index: {}]
  %s1 = inlined_call_operand.vmem [shape: f32[1,128], index: 1, kind: input, shape index: {}]
  %s2 = inlined_call_operand.vmem [shape: f32[1,128], index: 2, kind: input, shape index: {}]
  %s3 = inlined_call_operand.vmem [shape: f32[2,16,16,128], index: 3, kind: output, shape index: {}]
  %s4 = sld [smem:[#allocation0]]
  $region45: #{conv_block_forward.5} parent=0
    _
  %s6 = ssub.s32 1, %s4
  %s7 = scalar_select 0, %s6, %s4
  loop: start=0, step=1, limit=6
  $region2: #{conv_block_forward.5} parent=0 // loop_pre_header
    _
  $region3: #{conv_block_forward.5} parent=0 // loop_header
    %s9 = sphi 0, %s13
    %p10 = scmp.ge.s32.totalorder %s9, 6
    %s16 = sphi 0, %s28
    %s17 = sphi 0, %s24
    %s18 = sphi 0, %s16
    %s19 = sphi 0, %s17
    %s20 = sphi 0, %s18
    %s21 = sphi 0, %s19
    %s33 = sphi 0, %s35
    %s36 = sphi 0, %s33
    %s37 = sphi 0, %s36
    %s53 = sphi 0, %s37
    %s57 = sphi 0, %s57
    %s59 = sphi 0, %s57
    %s60 = sphi 0, %s59
    %s74 = sphi 0, %s60
    %s78 = sphi 0, %s78
    %s80 = sphi 0, %s78
    %s81 = sphi 0, %s80
    %s95 = sphi 0, %s81
    %s103 = sphi 0, %s105
    %s106 = sphi 0, %s103
    %s107 = sphi 0, %s106
    %s123 = sphi 0, %s107
  $region4: #{conv_block_forward.5} parent=0 // loop_header_branch
    %12 = sbr.rel (%p10) target = $region8
  $region5: #{conv_block_forward.5} parent=0 // loop_body
    %s14 = ssub.s32 %s9, 1
    %s15 = ssub.s32 %s9, 2
    %s22 = sadd.s32 1, %s17
    %p23 = scmp.ge.s32.totalorder %s22, 2
    %s24 = scalar_select %p23, 0, %s22
    %s25 = sadd.s32 1, %s16
    %s26 = scalar_select %p23, %s25, %s16
    %p27 = scmp.ge.s32.totalorder %s26, 2
    %s28 = scalar_select %p27, 0, %s26
    %s29 = ssub.s32 %s16, %s28
    %s30 = ssub.s32 %s17, %s24
    %s31 = sor.u32 %s29, %s30
    %p32 = scmp.eq.s32.totalorder %s31, 0
    %s34 = sadd.s32 %s33, 1
    %s35 = scalar_select %p32, %s33, %s34
    %p38 = pneg %p32
    %p39 = scmp.eq.s32.totalorder %s9, 3
    %p40 = por %p38, %p39
    %p41 = scmp.ne.s32.totalorder %s33, %s36
    %p42 = scmp.eq.s32.totalorder %s9, 0
    %p43 = por %p41, %p42
    %p44 = scmp.ne.s32.totalorder %s33, %s36
    %p45 = scmp.eq.s32.totalorder %s14, 3
    %p46 = por %p44, %p45
    %p47 = scmp.ne.s32.totalorder %s36, %s37
    %p48 = scmp.eq.s32.totalorder %s14, 0
    %p49 = por %p47, %p48
    %p50 = scmp.ne.s32.totalorder %s36, %s37
    %p51 = scmp.eq.s32.totalorder %s15, 3
    %p52 = por %p50, %p51
    %p54 = scmp.ne.s32.totalorder %s37, %s53
    %p55 = scmp.eq.s32.totalorder %s15, 0
    %p56 = por %p54, %p55
    %s58 = sadd.s32 %s57, 1
    %p61 = scmp.eq.s32.totalorder %s9, 3
    %p62 = scmp.ne.s32.totalorder %s57, %s59
    %p63 = scmp.eq.s32.totalorder %s9, 0
    %p64 = por %p62, %p63
    %p65 = scmp.ne.s32.totalorder %s57, %s59
    %p66 = scmp.eq.s32.totalorder %s14, 3
    %p67 = por %p65, %p66
    %p68 = scmp.ne.s32.totalorder %s59, %s60
    %p69 = scmp.eq.s32.totalorder %s14, 0
    %p70 = por %p68, %p69
    %p71 = scmp.ne.s32.totalorder %s59, %s60
    %p72 = scmp.eq.s32.totalorder %s15, 3
    %p73 = por %p71, %p72
    %p75 = scmp.ne.s32.totalorder %s60, %s74
    %p76 = scmp.eq.s32.totalorder %s15, 0
    %p77 = por %p75, %p76
    %s79 = sadd.s32 %s78, 1
    %p82 = scmp.eq.s32.totalorder %s9, 3
    %p83 = scmp.ne.s32.totalorder %s78, %s80
    %p84 = scmp.eq.s32.totalorder %s9, 0
    %p85 = por %p83, %p84
    %p86 = scmp.ne.s32.totalorder %s78, %s80
    %p87 = scmp.eq.s32.totalorder %s14, 3
    %p88 = por %p86, %p87
    %p89 = scmp.ne.s32.totalorder %s80, %s81
    %p90 = scmp.eq.s32.totalorder %s14, 0
    %p91 = por %p89, %p90
    %p92 = scmp.ne.s32.totalorder %s80, %s81
    %p93 = scmp.eq.s32.totalorder %s15, 3
    %p94 = por %p92, %p93
    %p96 = scmp.ne.s32.totalorder %s81, %s95
    %p97 = scmp.eq.s32.totalorder %s15, 0
    %p98 = por %p96, %p97
    %s99 = ssub.s32 %s16, %s28
    %s100 = ssub.s32 %s17, %s24
    %s101 = sor.u32 %s99, %s100
    %p102 = scmp.eq.s32.totalorder %s101, 0
    %s104 = sadd.s32 %s103, 1
    %s105 = scalar_select %p102, %s103, %s104
    %p108 = pneg %p102
    %p109 = scmp.eq.s32.totalorder %s9, 3
    %p110 = por %p108, %p109
    %p111 = scmp.ne.s32.totalorder %s103, %s106
    %p112 = scmp.eq.s32.totalorder %s9, 0
    %p113 = por %p111, %p112
    %p114 = scmp.ne.s32.totalorder %s103, %s106
    %p115 = scmp.eq.s32.totalorder %s14, 3
    %p116 = por %p114, %p115
    %p117 = scmp.ne.s32.totalorder %s106, %s107
    %p118 = scmp.eq.s32.totalorder %s14, 0
    %p119 = por %p117, %p118
    %p120 = scmp.ne.s32.totalorder %s106, %s107
    %p121 = scmp.eq.s32.totalorder %s15, 3
    %p122 = por %p120, %p121
    %p124 = scmp.ne.s32.totalorder %s107, %s123
    %p125 = scmp.eq.s32.totalorder %s15, 0
    %p126 = por %p124, %p125
    %p127 = scmp.le.s32.totalorder 1, %s9
    %p128 = scmp.lt.s32.totalorder %s9, 5
    %p129 = pnand %p127, %p128
    %p130 = pneg %p129
    // Predicated region
    $region9: #{conv_block_forward.5} parent=5 // pred_check
      _
    $region10: #{conv_block_forward.5} parent=5 // pred_check_branch
      %132 = sbr.rel (%p129) target = $region12
    $region11: #{conv_block_forward.5} parent=5 // pred_region
      %s133 = ssub.s32 %s9, 1
      // Predicated region
      $region13: #{conv_block_forward.5} parent=11 // pred_check
        %p134 = pneg %p70
      $region14: #{conv_block_forward.5} parent=11 // pred_check_branch
        %136 = sbr.rel (%p134) target = $region16
      $region15: #{conv_block_forward.5} parent=11 // pred_region
        _
      $region16: #{conv_block_forward.5} parent=11 // pred_fallthru
        _
      // Predicated region
      $region17: #{conv_block_forward.5} parent=11 // pred_check
        %p137 = pneg %p91
      $region18: #{conv_block_forward.5} parent=11 // pred_check_branch
        %139 = sbr.rel (%p137) target = $region20
      $region19: #{conv_block_forward.5} parent=11 // pred_region
        _
      $region20: #{conv_block_forward.5} parent=11 // pred_fallthru
        _
    $region12: #{conv_block_forward.5} parent=5 // pred_fallthru
      _
    %p140 = scmp.lt.s32.totalorder %s9, 4
    // Predicated region
    $region21: #{conv_block_forward.5} parent=5 // pred_check
      %p141 = pneg %p140
    $region22: #{conv_block_forward.5} parent=5 // pred_check_branch
      %143 = sbr.rel (%p141) target = $region24
    $region23: #{conv_block_forward.5} parent=5 // pred_region
      // Predicated region
      $region25: #{conv_block_forward.5} parent=23 // pred_check
        %p144 = pneg %p43
      $region26: #{conv_block_forward.5} parent=23 // pred_check_branch
        %146 = sbr.rel (%p144) target = $region28
      $region27: #{conv_block_forward.5} parent=23 // pred_region
        %s147 = smul.u32 8, %s17
        %p148 = scmp.lt.s32.totalorder %s16, 1
        %s149 = scalar_select %p148, %s16, 1
        %p150 = scmp.lt.s32.totalorder %s147, 15
        %s151 = scalar_select %p150, %s147, 15
        %s152 = smul.addr %s151, 2
        %s153 = smul.addr %s149, 32
        %s154 = sadd.s32 %s152, %s153
        %s155 = smul.addr %s154, 4
        %s156 = scalar_lea.vmem %s0, %s155
        %s157 = smul.u32 8, %s17
      $region28: #{conv_block_forward.5} parent=23 // pred_fallthru
        _
    $region24: #{conv_block_forward.5} parent=5 // pred_fallthru
      _
    %p158 = scmp.le.s32.totalorder 1, %s9
    %p159 = scmp.lt.s32.totalorder %s9, 5
    %p160 = pnand %p158, %p159
    %p161 = pneg %p160
    // Predicated region
    $region29: #{conv_block_forward.5} parent=5 // pred_check
      _
    $region30: #{conv_block_forward.5} parent=5 // pred_check_branch
      %163 = sbr.rel (%p160) target = $region32
    $region31: #{conv_block_forward.5} parent=5 // pred_region
      %s164 = ssub.s32 %s9, 1
      %s165 = smul.u32 8, %s19
      %p166 = scmp.lt.s32.totalorder %s18, 1
      %s167 = scalar_select %p166, %s18, 1
      %p168 = scmp.lt.s32.totalorder %s165, 15
      %s169 = scalar_select %p168, %s165, 15
      %s170 = smul.addr %s169, 2
      %s171 = smul.addr %s167, 32
      %s172 = sadd.s32 %s170, %s171
      %s173 = smul.addr %s172, 4
      %s174 = scalar_lea.vmem %s0, %s173
      %p175 = pneg %p49
      %p176 = pneg %p46
      %p177 = pneg %p70
      %p178 = pneg %p67
      %p179 = pneg %p91
      %p180 = pneg %p88
      %p181 = pneg %p119
      %p182 = pneg %p116
      %s183 = smul.u32 8, %s19
      %p184 = scmp.lt.s32.totalorder %s18, 1
      %s185 = scalar_select %p184, %s18, 1
      %p186 = scmp.lt.s32.totalorder %s183, 15
      %s187 = scalar_select %p186, %s183, 15
      %s188 = smul.addr %s187, 2
      %s189 = smul.addr %s185, 32
      %s190 = sadd.s32 %s188, %s189
      %s191 = smul.addr %s190, 8
      %s192 = scalar_lea.vmem %s3, %s191
      %s193 = smul.u32 8, %s19
      %p194 = scmp.lt.s32.totalorder %s18, 1
      %s195 = scalar_select %p194, %s18, 1
      %p196 = scmp.lt.s32.totalorder %s193, 15
      %s197 = scalar_select %p196, %s193, 15
      %s198 = smul.addr %s197, 2
      %s199 = smul.addr %s195, 32
      %s200 = sadd.s32 %s198, %s199
      %s201 = smul.addr %s200, 4
      %s202 = scalar_lea.vmem %s0, %s201
      %s203 = smul.u32 8, %s19
      %s204 = smul.u32 8, %s19
      %p205 = scmp.lt.s32.totalorder %s18, 1
      %s206 = scalar_select %p205, %s18, 1
      %p207 = scmp.lt.s32.totalorder %s204, 15
      %s208 = scalar_select %p207, %s204, 15
      %s209 = smul.addr %s208, 2
      %s210 = smul.addr %s206, 32
      %s211 = sadd.s32 %s209, %s210
      %s212 = smul.addr %s211, 8
      %s213 = scalar_lea.vmem %s3, %s212
      %s214 = smul.u32 8, %s19
      %v215 = vld [vmem:[%s202] sm:$0xf]
      %v216 = vld [vmem:[%s202 + $0x4] sm:$0xf]
      %v217 = vld [vmem:[%s202 + $0x8] sm:$0xf]
      %v218 = vld [vmem:[%s202 + $0xc] sm:$0xf]
      %v219 = vld [vmem:[%s202 + $0x10] sm:$0xf]
      %v220 = vld [vmem:[%s202 + $0x14] sm:$0xf]
      %v221 = vld [vmem:[%s202 + $0x18] sm:$0xf]
      %v222 = vld [vmem:[%s202 + $0x1c] sm:$0xf]
      %v223 = vld [vmem:[%s202 + $0x20] sm:$0xf]
      %v224 = vld [vmem:[%s202 + $0x24] sm:$0xf]
      %v225 = vld [vmem:[%s202 + $0x28] sm:$0xf]
      %v226 = vld [vmem:[%s202 + $0x2c] sm:$0xf]
      %v227 = vld [vmem:[%s202 + $0x30] sm:$0xf]
      %v228 = vld [vmem:[%s202 + $0x34] sm:$0xf]
      %v229 = vld [vmem:[%s202 + $0x38] sm:$0xf]
      %v230 = vld [vmem:[%s202 + $0x3c] sm:$0xf]
      %v231 = vunpack.c.l.bf16 %v215
      %v232 = vunpack.c.l.bf16 %v216
      %v233 = vunpack.c.l.bf16 %v217
      %v234 = vunpack.c.l.bf16 %v218
      %v235 = vunpack.c.l.bf16 %v219
      %v236 = vunpack.c.l.bf16 %v220
      %v237 = vunpack.c.l.bf16 %v221
      %v238 = vunpack.c.l.bf16 %v222
      %v239 = vunpack.c.l.bf16 %v223
      %v240 = vunpack.c.l.bf16 %v224
      %v241 = vunpack.c.l.bf16 %v225
      %v242 = vunpack.c.l.bf16 %v226
      %v243 = vunpack.c.l.bf16 %v227
      %v244 = vunpack.c.l.bf16 %v228
      %v245 = vunpack.c.l.bf16 %v229
      %v246 = vunpack.c.l.bf16 %v230
      %v247 = vld [vmem:[%s1] sm:$0x1]
      %v248 = vld [vmem:[%s2] sm:$0x1]
      %v250 = vlaneseq
      %v251 = vshrl.u32 %v250, 7
      %v252 = vsub.s32 0, %v251
      %v253 = vrot.slane %v247, %v252
      %v255 = vmul.f32 %v231, %v253
      %v256 = vmul.f32 %v232, %v253
      %v257 = vmul.f32 %v233, %v253
      %v258 = vmul.f32 %v234, %v253
      %v259 = vmul.f32 %v235, %v253
      %v260 = vmul.f32 %v236, %v253
      %v261 = vmul.f32 %v237, %v253
      %v262 = vmul.f32 %v238, %v253
      %v263 = vmul.f32 %v239, %v253
      %v264 = vmul.f32 %v240, %v253
      %v265 = vmul.f32 %v241, %v253
      %v266 = vmul.f32 %v242, %v253
      %v267 = vmul.f32 %v243, %v253
      %v268 = vmul.f32 %v244, %v253
      %v269 = vmul.f32 %v245, %v253
      %v270 = vmul.f32 %v246, %v253
      %v272 = vlaneseq
      %v273 = vshrl.u32 %v272, 7
      %v274 = vsub.s32 0, %v273
      %v275 = vrot.slane %v248, %v274
      %v277 = vadd.f32 %v255, %v275
      %v278 = vadd.f32 %v256, %v275
      %v279 = vadd.f32 %v257, %v275
      %v280 = vadd.f32 %v258, %v275
      %v281 = vadd.f32 %v259, %v275
      %v282 = vadd.f32 %v260, %v275
      %v283 = vadd.f32 %v261, %v275
      %v284 = vadd.f32 %v262, %v275
      %v285 = vadd.f32 %v263, %v275
      %v286 = vadd.f32 %v264, %v275
      %v287 = vadd.f32 %v265, %v275
      %v288 = vadd.f32 %v266, %v275
      %v289 = vadd.f32 %v267, %v275
      %v290 = vadd.f32 %v268, %v275
      %v291 = vadd.f32 %v269, %v275
      %v292 = vadd.f32 %v270, %v275
      %v293 = vmax.f32 %v277, 0.0
      %v294 = vmax.f32 %v278, 0.0
      %v295 = vmax.f32 %v279, 0.0
      %v296 = vmax.f32 %v280, 0.0
      %v297 = vmax.f32 %v281, 0.0
      %v298 = vmax.f32 %v282, 0.0
      %v299 = vmax.f32 %v283, 0.0
      %v300 = vmax.f32 %v284, 0.0
      %v301 = vmax.f32 %v285, 0.0
      %v302 = vmax.f32 %v286, 0.0
      %v303 = vmax.f32 %v287, 0.0
      %v304 = vmax.f32 %v288, 0.0
      %v305 = vmax.f32 %v289, 0.0
      %v306 = vmax.f32 %v290, 0.0
      %v307 = vmax.f32 %v291, 0.0
      %v308 = vmax.f32 %v292, 0.0
      %309 = vst [vmem:[%s213] sm:$0xff] %v293
      %310 = vst [vmem:[%s213 + $0x8] sm:$0xff] %v294
      %311 = vst [vmem:[%s213 + $0x10] sm:$0xff] %v295
      %312 = vst [vmem:[%s213 + $0x18] sm:$0xff] %v296
      %313 = vst [vmem:[%s213 + $0x20] sm:$0xff] %v297
      %314 = vst [vmem:[%s213 + $0x28] sm:$0xff] %v298
      %315 = vst [vmem:[%s213 + $0x30] sm:$0xff] %v299
      %316 = vst [vmem:[%s213 + $0x38] sm:$0xff] %v300
      %317 = vst [vmem:[%s213 + $0x40] sm:$0xff] %v301
      %318 = vst [vmem:[%s213 + $0x48] sm:$0xff] %v302
      %319 = vst [vmem:[%s213 + $0x50] sm:$0xff] %v303
      %320 = vst [vmem:[%s213 + $0x58] sm:$0xff] %v304
      %321 = vst [vmem:[%s213 + $0x60] sm:$0xff] %v305
      %322 = vst [vmem:[%s213 + $0x68] sm:$0xff] %v306
      %323 = vst [vmem:[%s213 + $0x70] sm:$0xff] %v307
      %324 = vst [vmem:[%s213 + $0x78] sm:$0xff] %v308
      %s325 = smul.u32 8, %s19
      %p326 = scmp.lt.s32.totalorder %s18, 1
      %s327 = scalar_select %p326, %s18, 1
      %p328 = scmp.lt.s32.totalorder %s325, 15
      %s329 = scalar_select %p328, %s325, 15
      %s330 = smul.addr %s329, 2
      %s331 = smul.addr %s327, 32
      %s332 = sadd.s32 %s330, %s331
      %s333 = smul.addr %s332, 8
      %s334 = scalar_lea.vmem %s3, %s333
      // Predicated region
      $region33: #{conv_block_forward.5} parent=31 // pred_check
        %p335 = pneg %p116
      $region34: #{conv_block_forward.5} parent=31 // pred_check_branch
        %337 = sbr.rel (%p335) target = $region36
      $region35: #{conv_block_forward.5} parent=31 // pred_region
        %s338 = smul.u32 8, %s19
      $region36: #{conv_block_forward.5} parent=31 // pred_fallthru
        _
    $region32: #{conv_block_forward.5} parent=5 // pred_fallthru
      _
    %p339 = scmp.le.s32.totalorder 2, %s9
    // Predicated region
    $region37: #{conv_block_forward.5} parent=5 // pred_check
      %p340 = pneg %p339
    $region38: #{conv_block_forward.5} parent=5 // pred_check_branch
      %342 = sbr.rel (%p340) target = $region40
    $region39: #{conv_block_forward.5} parent=5 // pred_region
      %s343 = ssub.s32 %s9, 2
      // Predicated region
      $region41: #{conv_block_forward.5} parent=39 // pred_check
        %p344 = pneg %p122
      $region42: #{conv_block_forward.5} parent=39 // pred_check_branch
        %346 = sbr.rel (%p344) target = $region44
      $region43: #{conv_block_forward.5} parent=39 // pred_region
        %s347 = smul.u32 8, %s21
        %p348 = scmp.lt.s32.totalorder %s20, 1
        %s349 = scalar_select %p348, %s20, 1
        %p350 = scmp.lt.s32.totalorder %s347, 15
        %s351 = scalar_select %p350, %s347, 15
        %s352 = smul.addr %s351, 2
        %s353 = smul.addr %s349, 32
        %s354 = sadd.s32 %s352, %s353
        %s355 = smul.addr %s354, 8
        %s356 = scalar_lea.vmem %s3, %s355
      $region44: #{conv_block_forward.5} parent=39 // pred_fallthru
        _
    $region40: #{conv_block_forward.5} parent=5 // pred_fallthru
      _
  $region6: #{conv_block_forward.5} parent=0 // loop_footer
    %s13 = sadd.s32 1, %s9
  $region7: #{conv_block_forward.5} parent=0 // loop_footer_branch
    %8 = sbr.rel target = $region3
  $region8: #{conv_block_forward.5} parent=0 // loop_exit
    _

// kernel: conv_block_forward.4
$region0: #{conv_block_forward.4}
  #allocation0 [shape = 'u32[]', space=smem, size = 0x4, offset = 0x4, fixed_abs, tag = 'smem constant byte address 0x4 - core index']
  #allocation1 [shape = 'u32[144,128]{1,0:T(1,128)}', space=vmem, size = 0x12000, scoped, tag = 'internal scratch']
  %s0 = inlined_call_operand.vmem [shape: bf16[2,16,16,128], index: 0, kind: input, shape index: {}]
  %s1 = inlined_call_operand.vmem [shape: bf16[2,4,16,128], index: 1, kind: input, shape index: {}]
  %s2 = inlined_call_operand.vmem [shape: bf16[3,384,128], index: 2, kind: input, shape index: {}]
  %s3 = inlined_call_operand.vmem [shape: f32[1,128], index: 3, kind: input, shape index: {}]
  %s4 = inlined_call_operand.vmem [shape: f32[1,128], index: 4, kind: input, shape index: {}]
  %s5 = inlined_call_operand.vmem [shape: f32[1,128], index: 5, kind: input, shape index: {}]
  %s6 = inlined_call_operand.vmem [shape: bf16[2,16,16,128], index: 6, kind: output, shape index: {0}]
  %s7 = inlined_call_operand.vmem [shape: f32[2,2,2,128], index: 7, kind: output, shape index: {1}]
  %8 = xla_tuple %s6, %s7
  %s9 = sld [smem:[#allocation0]]
  $region65: #{conv_block_forward.4} parent=0
    _
  %s11 = ssub.s32 1, %s9
  %s12 = scalar_select 0, %s11, %s9
  loop: start=0, step=1, limit=6
  $region2: #{conv_block_forward.4} parent=0 // loop_pre_header
    _
  $region3: #{conv_block_forward.4} parent=0 // loop_header
    %s14 = sphi 0, %s18
    %p15 = scmp.ge.s32.totalorder %s14, 6
    %s21 = sphi 0, %s33
    %s22 = sphi 0, %s29
    %s23 = sphi 0, %s21
    %s24 = sphi 0, %s22
    %s25 = sphi 0, %s23
    %s26 = sphi 0, %s24
    %s38 = sphi 0, %s40
    %s41 = sphi 0, %s38
    %s42 = sphi 0, %s41
    %s58 = sphi 0, %s42
    %s66 = sphi 0, %s68
    %s69 = sphi 0, %s66
    %s70 = sphi 0, %s69
    %s86 = sphi 0, %s70
    %s90 = sphi 0, %s90
    %s92 = sphi 0, %s90
    %s93 = sphi 0, %s92
    %s107 = sphi 0, %s93
    %s111 = sphi 0, %s111
    %s113 = sphi 0, %s111
    %s114 = sphi 0, %s113
    %s128 = sphi 0, %s114
    %s132 = sphi 0, %s132
    %s134 = sphi 0, %s132
    %s135 = sphi 0, %s134
    %s149 = sphi 0, %s135
    %s153 = sphi 0, %s153
    %s155 = sphi 0, %s153
    %s156 = sphi 0, %s155
    %s170 = sphi 0, %s156
    %s178 = sphi 0, %s180
    %s181 = sphi 0, %s178
    %s182 = sphi 0, %s181
    %s198 = sphi 0, %s182
    %s206 = sphi 0, %s208
    %s209 = sphi 0, %s206
    %s210 = sphi 0, %s209
    %s226 = sphi 0, %s210
  $region4: #{conv_block_forward.4} parent=0 // loop_header_branch
    %17 = sbr.rel (%p15) target = $region8
  $region5: #{conv_block_forward.4} parent=0 // loop_body
    %s19 = ssub.s32 %s14, 1
    %s20 = ssub.s32 %s14, 2
    %s27 = sadd.s32 1, %s22
    %p28 = scmp.ge.s32.totalorder %s27, 2
    %s29 = scalar_select %p28, 0, %s27
    %s30 = sadd.s32 1, %s21
    %s31 = scalar_select %p28, %s30, %s21
    %p32 = scmp.ge.s32.totalorder %s31, 2
    %s33 = scalar_select %p32, 0, %s31
    %s34 = ssub.s32 %s21, %s33
    %s35 = ssub.s32 %s22, %s29
    %s36 = sor.u32 %s34, %s35
    %p37 = scmp.eq.s32.totalorder %s36, 0
    %s39 = sadd.s32 %s38, 1
    %s40 = scalar_select %p37, %s38, %s39
    %p43 = pneg %p37
    %p44 = scmp.eq.s32.totalorder %s14, 3
    %p45 = por %p43, %p44
    %p46 = scmp.ne.s32.totalorder %s38, %s41
    %p47 = scmp.eq.s32.totalorder %s14, 0
    %p48 = por %p46, %p47
    %p49 = scmp.ne.s32.totalorder %s38, %s41
    %p50 = scmp.eq.s32.totalorder %s19, 3
    %p51 = por %p49, %p50
    %p52 = scmp.ne.s32.totalorder %s41, %s42
    %p53 = scmp.eq.s32.totalorder %s19, 0
    %p54 = por %p52, %p53
    %p55 = scmp.ne.s32.totalorder %s41, %s42
    %p56 = scmp.eq.s32.totalorder %s20, 3
    %p57 = por %p55, %p56
    %p59 = scmp.ne.s32.totalorder %s42, %s58
    %p60 = scmp.eq.s32.totalorder %s20, 0
    %p61 = por %p59, %p60
    %s62 = ssub.s32 %s21, %s33
    %s63 = ssub.s32 %s22, %s29
    %s64 = sor.u32 %s62, %s63
    %p65 = scmp.eq.s32.totalorder %s64, 0
    %s67 = sadd.s32 %s66, 1
    %s68 = scalar_select %p65, %s66, %s67
    %p71 = pneg %p65
    %p72 = scmp.eq.s32.totalorder %s14, 3
    %p73 = por %p71, %p72
    %p74 = scmp.ne.s32.totalorder %s66, %s69
    %p75 = scmp.eq.s32.totalorder %s14, 0
    %p76 = por %p74, %p75
    %p77 = scmp.ne.s32.totalorder %s66, %s69
    %p78 = scmp.eq.s32.totalorder %s19, 3
    %p79 = por %p77, %p78
    %p80 = scmp.ne.s32.totalorder %s69, %s70
    %p81 = scmp.eq.s32.totalorder %s19, 0
    %p82 = por %p80, %p81
    %p83 = scmp.ne.s32.totalorder %s69, %s70
    %p84 = scmp.eq.s32.totalorder %s20, 3
    %p85 = por %p83, %p84
    %p87 = scmp.ne.s32.totalorder %s70, %s86
    %p88 = scmp.eq.s32.totalorder %s20, 0
    %p89 = por %p87, %p88
    %s91 = sadd.s32 %s90, 1
    %p94 = scmp.eq.s32.totalorder %s14, 3
    %p95 = scmp.ne.s32.totalorder %s90, %s92
    %p96 = scmp.eq.s32.totalorder %s14, 0
    %p97 = por %p95, %p96
    %p98 = scmp.ne.s32.totalorder %s90, %s92
    %p99 = scmp.eq.s32.totalorder %s19, 3
    %p100 = por %p98, %p99
    %p101 = scmp.ne.s32.totalorder %s92, %s93
    %p102 = scmp.eq.s32.totalorder %s19, 0
    %p103 = por %p101, %p102
    %p104 = scmp.ne.s32.totalorder %s92, %s93
    %p105 = scmp.eq.s32.totalorder %s20, 3
    %p106 = por %p104, %p105
    %p108 = scmp.ne.s32.totalorder %s93, %s107
    %p109 = scmp.eq.s32.totalorder %s20, 0
    %p110 = por %p108, %p109
    %s112 = sadd.s32 %s111, 1
    %p115 = scmp.eq.s32.totalorder %s14, 3
    %p116 = scmp.ne.s32.totalorder %s111, %s113
    %p117 = scmp.eq.s32.totalorder %s14, 0
    %p118 = por %p116, %p117
    %p119 = scmp.ne.s32.totalorder %s111, %s113
    %p120 = scmp.eq.s32.totalorder %s19, 3
    %p121 = por %p119, %p120
    %p122 = scmp.ne.s32.totalorder %s113, %s114
    %p123 = scmp.eq.s32.totalorder %s19, 0
    %p124 = por %p122, %p123
    %p125 = scmp.ne.s32.totalorder %s113, %s114
    %p126 = scmp.eq.s32.totalorder %s20, 3
    %p127 = por %p125, %p126
    %p129 = scmp.ne.s32.totalorder %s114, %s128
    %p130 = scmp.eq.s32.totalorder %s20, 0
    %p131 = por %p129, %p130
    %s133 = sadd.s32 %s132, 1
    %p136 = scmp.eq.s32.totalorder %s14, 3
    %p137 = scmp.ne.s32.totalorder %s132, %s134
    %p138 = scmp.eq.s32.totalorder %s14, 0
    %p139 = por %p137, %p138
    %p140 = scmp.ne.s32.totalorder %s132, %s134
    %p141 = scmp.eq.s32.totalorder %s19, 3
    %p142 = por %p140, %p141
    %p143 = scmp.ne.s32.totalorder %s134, %s135
    %p144 = scmp.eq.s32.totalorder %s19, 0
    %p145 = por %p143, %p144
    %p146 = scmp.ne.s32.totalorder %s134, %s135
    %p147 = scmp.eq.s32.totalorder %s20, 3
    %p148 = por %p146, %p147
    %p150 = scmp.ne.s32.totalorder %s135, %s149
    %p151 = scmp.eq.s32.totalorder %s20, 0
    %p152 = por %p150, %p151
    %s154 = sadd.s32 %s153, 1
    %p157 = scmp.eq.s32.totalorder %s14, 3
    %p158 = scmp.ne.s32.totalorder %s153, %s155
    %p159 = scmp.eq.s32.totalorder %s14, 0
    %p160 = por %p158, %p159
    %p161 = scmp.ne.s32.totalorder %s153, %s155
    %p162 = scmp.eq.s32.totalorder %s19, 3
    %p163 = por %p161, %p162
    %p164 = scmp.ne.s32.totalorder %s155, %s156
    %p165 = scmp.eq.s32.totalorder %s19, 0
    %p166 = por %p164, %p165
    %p167 = scmp.ne.s32.totalorder %s155, %s156
    %p168 = scmp.eq.s32.totalorder %s20, 3
    %p169 = por %p167, %p168
    %p171 = scmp.ne.s32.totalorder %s156, %s170
    %p172 = scmp.eq.s32.totalorder %s20, 0
    %p173 = por %p171, %p172
    %s174 = ssub.s32 %s21, %s33
    %s175 = ssub.s32 %s22, %s29
    %s176 = sor.u32 %s174, %s175
    %p177 = scmp.eq.s32.totalorder %s176, 0
    %s179 = sadd.s32 %s178, 1
    %s180 = scalar_select %p177, %s178, %s179
    %p183 = pneg %p177
    %p184 = scmp.eq.s32.totalorder %s14, 3
    %p185 = por %p183, %p184
    %p186 = scmp.ne.s32.totalorder %s178, %s181
    %p187 = scmp.eq.s32.totalorder %s14, 0
    %p188 = por %p186, %p187
    %p189 = scmp.ne.s32.totalorder %s178, %s181
    %p190 = scmp.eq.s32.totalorder %s19, 3
    %p191 = por %p189, %p190
    %p192 = scmp.ne.s32.totalorder %s181, %s182
    %p193 = scmp.eq.s32.totalorder %s19, 0
    %p194 = por %p192, %p193
    %p195 = scmp.ne.s32.totalorder %s181, %s182
    %p196 = scmp.eq.s32.totalorder %s20, 3
    %p197 = por %p195, %p196
    %p199 = scmp.ne.s32.totalorder %s182, %s198
    %p200 = scmp.eq.s32.totalorder %s20, 0
    %p201 = por %p199, %p200
    %s202 = ssub.s32 %s21, %s33
    %s203 = ssub.s32 %s22, %s29
    %s204 = sor.u32 %s202, %s203
    %p205 = scmp.eq.s32.totalorder %s204, 0
    %s207 = sadd.s32 %s206, 1
    %s208 = scalar_select %p205, %s206, %s207
    %p211 = pneg %p205
    %p212 = scmp.eq.s32.totalorder %s14, 3
    %p213 = por %p211, %p212
    %p214 = scmp.ne.s32.totalorder %s206, %s209
    %p215 = scmp.eq.s32.totalorder %s14, 0
    %p216 = por %p214, %p215
    %p217 = scmp.ne.s32.totalorder %s206, %s209
    %p218 = scmp.eq.s32.totalorder %s19, 3
    %p219 = por %p217, %p218
    %p220 = scmp.ne.s32.totalorder %s209, %s210
    %p221 = scmp.eq.s32.totalorder %s19, 0
    %p222 = por %p220, %p221
    %p223 = scmp.ne.s32.totalorder %s209, %s210
    %p224 = scmp.eq.s32.totalorder %s20, 3
    %p225 = por %p223, %p224
    %p227 = scmp.ne.s32.totalorder %s210, %s226
    %p228 = scmp.eq.s32.totalorder %s20, 0
    %p229 = por %p227, %p228
    %p230 = scmp.le.s32.totalorder 1, %s14
    %p231 = scmp.lt.s32.totalorder %s14, 5
    %p232 = pnand %p230, %p231
    %p233 = pneg %p232
    // Predicated region
    $region9: #{conv_block_forward.4} parent=5 // pred_check
      _
    $region10: #{conv_block_forward.4} parent=5 // pred_check_branch
      %235 = sbr.rel (%p232) target = $region12
    $region11: #{conv_block_forward.4} parent=5 // pred_region
      %s236 = ssub.s32 %s14, 1
      // Predicated region
      $region13: #{conv_block_forward.4} parent=11 // pred_check
        %p237 = pneg %p103
      $region14: #{conv_block_forward.4} parent=11 // pred_check_branch
        %239 = sbr.rel (%p237) target = $region16
      $region15: #{conv_block_forward.4} parent=11 // pred_region
        _
      $region16: #{conv_block_forward.4} parent=11 // pred_fallthru
        _
      // Predicated region
      $region17: #{conv_block_forward.4} parent=11 // pred_check
        %p240 = pneg %p124
      $region18: #{conv_block_forward.4} parent=11 // pred_check_branch
        %242 = sbr.rel (%p240) target = $region20
      $region19: #{conv_block_forward.4} parent=11 // pred_region
        _
      $region20: #{conv_block_forward.4} parent=11 // pred_fallthru
        _
      // Predicated region
      $region21: #{conv_block_forward.4} parent=11 // pred_check
        %p243 = pneg %p145
      $region22: #{conv_block_forward.4} parent=11 // pred_check_branch
        %245 = sbr.rel (%p243) target = $region24
      $region23: #{conv_block_forward.4} parent=11 // pred_region
        _
      $region24: #{conv_block_forward.4} parent=11 // pred_fallthru
        _
      // Predicated region
      $region25: #{conv_block_forward.4} parent=11 // pred_check
        %p246 = pneg %p166
      $region26: #{conv_block_forward.4} parent=11 // pred_check_branch
        %248 = sbr.rel (%p246) target = $region28
      $region27: #{conv_block_forward.4} parent=11 // pred_region
        _
      $region28: #{conv_block_forward.4} parent=11 // pred_fallthru
        _
    $region12: #{conv_block_forward.4} parent=5 // pred_fallthru
      _
    %p249 = scmp.lt.s32.totalorder %s14, 4
    // Predicated region
    $region29: #{conv_block_forward.4} parent=5 // pred_check
      %p250 = pneg %p249
    $region30: #{conv_block_forward.4} parent=5 // pred_check_branch
      %252 = sbr.rel (%p250) target = $region32
    $region31: #{conv_block_forward.4} parent=5 // pred_region
      // Predicated region
      $region33: #{conv_block_forward.4} parent=31 // pred_check
        %p253 = pneg %p48
      $region34: #{conv_block_forward.4} parent=31 // pred_check_branch
        %255 = sbr.rel (%p253) target = $region36
      $region35: #{conv_block_forward.4} parent=31 // pred_region
        %s256 = smul.u32 8, %s22
        %p257 = scmp.lt.s32.totalorder %s21, 1
        %s258 = scalar_select %p257, %s21, 1
        %p259 = scmp.lt.s32.totalorder %s256, 15
        %s260 = scalar_select %p259, %s256, 15
        %s261 = smul.addr %s260, 2
        %s262 = smul.addr %s258, 32
        %s263 = sadd.s32 %s261, %s262
        %s264 = smul.addr %s263, 4
        %s265 = scalar_lea.vmem %s0, %s264
        %s266 = smul.u32 8, %s22
      $region36: #{conv_block_forward.4} parent=31 // pred_fallthru
        _
      // Predicated region
      $region37: #{conv_block_forward.4} parent=31 // pred_check
        %p267 = pneg %p76
      $region38: #{conv_block_forward.4} parent=31 // pred_check_branch
        %269 = sbr.rel (%p267) target = $region40
      $region39: #{conv_block_forward.4} parent=31 // pred_region
        %s270 = smul.u32 2, %s22
        %p271 = scmp.lt.s32.totalorder %s21, 1
        %s272 = scalar_select %p271, %s21, 1
        %p273 = scmp.lt.s32.totalorder %s270, 3
        %s274 = scalar_select %p273, %s270, 3
        %s275 = smul.addr %s274, 2
        %s276 = smul.addr %s272, 8
        %s277 = sadd.s32 %s275, %s276
        %s278 = smul.addr %s277, 4
        %s279 = scalar_lea.vmem %s1, %s278
        %s280 = smul.u32 2, %s22
      $region40: #{conv_block_forward.4} parent=31 // pred_fallthru
        _
    $region32: #{conv_block_forward.4} parent=5 // pred_fallthru
      _
    %p281 = scmp.le.s32.totalorder 1, %s14
    %p282 = scmp.lt.s32.totalorder %s14, 5
    %p283 = pnand %p281, %p282
    %p284 = pneg %p283
    // Predicated region
    $region41: #{conv_block_forward.4} parent=5 // pred_check
      _
    $region42: #{conv_block_forward.4} parent=5 // pred_check_branch
      %286 = sbr.rel (%p283) target = $region44
    $region43: #{conv_block_forward.4} parent=5 // pred_region
      %s287 = ssub.s32 %s14, 1
      %s288 = smul.u32 8, %s24
      %p289 = scmp.lt.s32.totalorder %s23, 1
      %s290 = scalar_select %p289, %s23, 1
      %p291 = scmp.lt.s32.totalorder %s288, 15
      %s292 = scalar_select %p291, %s288, 15
      %s293 = smul.addr %s292, 2
      %s294 = smul.addr %s290, 32
      %s295 = sadd.s32 %s293, %s294
      %s296 = smul.addr %s295, 4
      %s297 = scalar_lea.vmem %s0, %s296
      %p298 = pneg %p54
      %p299 = pneg %p51
      %s300 = smul.u32 2, %s24
      %p301 = scmp.lt.s32.totalorder %s23, 1
      %s302 = scalar_select %p301, %s23, 1
      %p303 = scmp.lt.s32.totalorder %s300, 3
      %s304 = scalar_select %p303, %s300, 3
      %s305 = smul.addr %s304, 2
      %s306 = smul.addr %s302, 8
      %s307 = sadd.s32 %s305, %s306
      %s308 = smul.addr %s307, 4
      %s309 = scalar_lea.vmem %s1, %s308
      %p310 = pneg %p82
      %p311 = pneg %p79
      %p312 = pneg %p103
      %p313 = pneg %p100
      %p314 = pneg %p124
      %p315 = pneg %p121
      %p316 = pneg %p145
      %p317 = pneg %p142
      %p318 = pneg %p166
      %p319 = pneg %p163
      %p320 = pneg %p194
      %p321 = pneg %p191
      %s322 = smul.u32 8, %s24
      %p323 = scmp.lt.s32.totalorder %s23, 1
      %s324 = scalar_select %p323, %s23, 1
      %p325 = scmp.lt.s32.totalorder %s322, 15
      %s326 = scalar_select %p325, %s322, 15
      %s327 = smul.addr %s326, 2
      %s328 = smul.addr %s324, 32
      %s329 = sadd.s32 %s327, %s328
      %s330 = smul.addr %s329, 4
      %s331 = scalar_lea.vmem %s6, %s330
      %p332 = pneg %p222
      %p333 = pneg %p219
      %p334 = scmp.lt.s32.totalorder %s23, 1
      %s335 = scalar_select %p334, %s23, 1
      %p336 = scmp.lt.s32.totalorder %s24, 1
      %s337 = scalar_select %p336, %s24, 1
      %s338 = smul.addr %s335, 2
      %s339 = sadd.s32 %s337, %s338
      %s340 = smul.addr %s339, 2
      %s341 = scalar_lea.vmem %s7, %s340
      %s342 = smul.u32 8, %s24
      %p343 = scmp.lt.s32.totalorder %s23, 1
      %s344 = scalar_select %p343, %s23, 1
      %p345 = scmp.lt.s32.totalorder %s342, 15
      %s346 = scalar_select %p345, %s342, 15
      %s347 = smul.addr %s346, 2
      %s348 = smul.addr %s344, 32
      %s349 = sadd.s32 %s347, %s348
      %s350 = smul.addr %s349, 4
      %s351 = scalar_lea.vmem %s0, %s350
      %s352 = smul.u32 8, %s24
      %s353 = smul.u32 2, %s24
      %p354 = scmp.lt.s32.totalorder %s23, 1
      %s355 = scalar_select %p354, %s23, 1
      %p356 = scmp.lt.s32.totalorder %s353, 3
      %s357 = scalar_select %p356, %s353, 3
      %s358 = smul.addr %s357, 2
      %s359 = smul.addr %s355, 8
      %s360 = sadd.s32 %s358, %s359
      %s361 = smul.addr %s360, 4
      %s362 = scalar_lea.vmem %s1, %s361
      %s363 = smul.u32 2, %s24
      %s364 = smul.u32 8, %s24
      %p365 = scmp.lt.s32.totalorder %s23, 1
      %s366 = scalar_select %p365, %s23, 1
      %p367 = scmp.lt.s32.totalorder %s364, 15
      %s368 = scalar_select %p367, %s364, 15
      %s369 = smul.addr %s368, 2
      %s370 = smul.addr %s366, 32
      %s371 = sadd.s32 %s369, %s370
      %s372 = smul.addr %s371, 4
      %s373 = scalar_lea.vmem %s6, %s372
      %s374 = smul.u32 8, %s24
      %p375 = scmp.lt.s32.totalorder %s23, 1
      %s376 = scalar_select %p375, %s23, 1
      %p377 = scmp.lt.s32.totalorder %s24, 1
      %s378 = scalar_select %p377, %s24, 1
      %s379 = smul.addr %s376, 2
      %s380 = sadd.s32 %s378, %s379
      %s381 = smul.addr %s380, 2
      %s382 = scalar_lea.vmem %s7, %s381
      %v384 = vld [vmem:[%s351] sm:$0xf]
      %v385 = vld [vmem:[%s351 + $0x4] sm:$0xf]
      %v386 = vld [vmem:[%s351 + $0x8] sm:$0xf]
      %v387 = vld [vmem:[%s351 + $0xc] sm:$0xf]
      %v388 = vld [vmem:[%s351 + $0x10] sm:$0xf]
      %v389 = vld [vmem:[%s351 + $0x14] sm:$0xf]
      %v390 = vld [vmem:[%s351 + $0x18] sm:$0xf]
      %v391 = vld [vmem:[%s351 + $0x1c] sm:$0xf]
      %v392 = vld [vmem:[%s351 + $0x20] sm:$0xf]
      %v393 = vld [vmem:[%s351 + $0x24] sm:$0xf]
      %v394 = vld [vmem:[%s351 + $0x28] sm:$0xf]
      %v395 = vld [vmem:[%s351 + $0x2c] sm:$0xf]
      %v396 = vld [vmem:[%s351 + $0x30] sm:$0xf]
      %v397 = vld [vmem:[%s351 + $0x34] sm:$0xf]
      %v398 = vld [vmem:[%s351 + $0x38] sm:$0xf]
      %v399 = vld [vmem:[%s351 + $0x3c] sm:$0xf]
      %v400 = vunpack.c.l.bf16 %v384
      %v401 = vunpack.c.l.bf16 %v385
      %v402 = vunpack.c.l.bf16 %v386
      %v403 = vunpack.c.l.bf16 %v387
      %v404 = vunpack.c.l.bf16 %v388
      %v405 = vunpack.c.l.bf16 %v389
      %v406 = vunpack.c.l.bf16 %v390
      %v407 = vunpack.c.l.bf16 %v391
      %v408 = vunpack.c.l.bf16 %v392
      %v409 = vunpack.c.l.bf16 %v393
      %v410 = vunpack.c.l.bf16 %v394
      %v411 = vunpack.c.l.bf16 %v395
      %v412 = vunpack.c.l.bf16 %v396
      %v413 = vunpack.c.l.bf16 %v397
      %v414 = vunpack.c.l.bf16 %v398
      %v415 = vunpack.c.l.bf16 %v399
      %v416 = vld [vmem:[%s362] sm:$0xf]
      %v417 = vld [vmem:[%s362 + $0x4] sm:$0xf]
      %v418 = vld [vmem:[%s362 + $0x8] sm:$0xf]
      %v419 = vld [vmem:[%s362 + $0xc] sm:$0xf]
      %v420 = vunpack.c.l.bf16 %v416
      %v421 = vunpack.c.l.bf16 %v417
      %v422 = vunpack.c.l.bf16 %v418
      %v423 = vunpack.c.l.bf16 %v419
      %v424 = vld [vmem:[%s4] sm:$0x1]
      %v425 = vld [vmem:[%s5] sm:$0x1]
      %v427 = vlaneseq
      %v428 = vshrl.u32 %v427, 7
      %v429 = vsub.s32 0, %v428
      %v430 = vrot.slane %v424, %v429
      %v432 = vmul.f32 %v400, %v430
      %v433 = vmul.f32 %v401, %v430
      %v434 = vmul.f32 %v402, %v430
      %v435 = vmul.f32 %v403, %v430
      %v436 = vmul.f32 %v404, %v430
      %v437 = vmul.f32 %v405, %v430
      %v438 = vmul.f32 %v406, %v430
      %v439 = vmul.f32 %v407, %v430
      %v440 = vmul.f32 %v408, %v430
      %v441 = vmul.f32 %v409, %v430
      %v442 = vmul.f32 %v410, %v430
      %v443 = vmul.f32 %v411, %v430
      %v444 = vmul.f32 %v412, %v430
      %v445 = vmul.f32 %v413, %v430
      %v446 = vmul.f32 %v414, %v430
      %v447 = vmul.f32 %v415, %v430
      %v449 = vlaneseq
      %v450 = vshrl.u32 %v449, 7
      %v451 = vsub.s32 0, %v450
      %v452 = vrot.slane %v425, %v451
      %v454 = vadd.f32 %v432, %v452
      %v455 = vadd.f32 %v433, %v452
      %v456 = vadd.f32 %v434, %v452
      %v457 = vadd.f32 %v435, %v452
      %v458 = vadd.f32 %v436, %v452
      %v459 = vadd.f32 %v437, %v452
      %v460 = vadd.f32 %v438, %v452
      %v461 = vadd.f32 %v439, %v452
      %v462 = vadd.f32 %v440, %v452
      %v463 = vadd.f32 %v441, %v452
      %v464 = vadd.f32 %v442, %v452
      %v465 = vadd.f32 %v443, %v452
      %v466 = vadd.f32 %v444, %v452
      %v467 = vadd.f32 %v445, %v452
      %v468 = vadd.f32 %v446, %v452
      %v469 = vadd.f32 %v447, %v452
      %v470 = vmax.f32 %v454, 0.0
      %v471 = vmax.f32 %v455, 0.0
      %v472 = vmax.f32 %v456, 0.0
      %v473 = vmax.f32 %v457, 0.0
      %v474 = vmax.f32 %v458, 0.0
      %v475 = vmax.f32 %v459, 0.0
      %v476 = vmax.f32 %v460, 0.0
      %v477 = vmax.f32 %v461, 0.0
      %v478 = vmax.f32 %v462, 0.0
      %v479 = vmax.f32 %v463, 0.0
      %v480 = vmax.f32 %v464, 0.0
      %v481 = vmax.f32 %v465, 0.0
      %v482 = vmax.f32 %v466, 0.0
      %v483 = vmax.f32 %v467, 0.0
      %v484 = vmax.f32 %v468, 0.0
      %v485 = vmax.f32 %v469, 0.0
      %v486 = vmul.f32 %v420, %v430
      %v487 = vmul.f32 %v421, %v430
      %v488 = vadd.f32 %v486, %v452
      %v489 = vadd.f32 %v487, %v452
      %v490 = vmax.f32 %v488, 0.0
      %v491 = vmax.f32 %v489, 0.0
      %v492 = vmul.f32 %v422, %v430
      %v493 = vmul.f32 %v423, %v430
      %v494 = vadd.f32 %v492, %v452
      %v495 = vadd.f32 %v493, %v452
      %v496 = vmax.f32 %v494, 0.0
      %v497 = vmax.f32 %v495, 0.0
      %p498 = scmp.gt.s32.totalorder %s24, 0
      %s499 = scalar_select %p498, 1, 0
      %s500 = scvt.s32.f32 %s499
      %v501 = vstv %s500
      %v502 = vmul.f32 %v490, %v501
      %v503 = vmul.f32 %v491, %v501
      %p504 = scmp.lt.s32.totalorder %s24, 1
      %s505 = scalar_select %p504, 1, 0
      %s506 = scvt.s32.f32 %s505
      %v507 = vstv %s506
      %v508 = vmul.f32 %v496, %v507
      %v509 = vmul.f32 %v497, %v507
      %vm530 = vcmask 1040384
      %v531 = vrot.slane %v502, 7
      %v532 = vrot.slane %v503, 7
      %v533 = vsel %vm530, %v531, %v532
      %v534 = vrot.slane %v470, 7
      %v535 = vrot.slane %v471, 7
      %v536 = vsel %vm530, %v534, %v535
      %v537 = vrot.slane %v472, 7
      %v538 = vrot.slane %v473, 7
      %v539 = vsel %vm530, %v537, %v538
      %v540 = vrot.slane %v474, 7
      %v541 = vrot.slane %v475, 7
      %v542 = vsel %vm530, %v540, %v541
      %v543 = vrot.slane %v476, 7
      %v544 = vrot.slane %v477, 7
      %v545 = vsel %vm530, %v543, %v544
      %v546 = vrot.slane %v478, 7
      %v547 = vrot.slane %v479, 7
      %v548 = vsel %vm530, %v546, %v547
      %v549 = vrot.slane %v480, 7
      %v550 = vrot.slane %v481, 7
      %v551 = vsel %vm530, %v549, %v550
      %v552 = vrot.slane %v482, 7
      %v553 = vrot.slane %v483, 7
      %v554 = vsel %vm530, %v552, %v553
      %v555 = vrot.slane %v484, 7
      %v556 = vrot.slane %v485, 7
      %v557 = vsel %vm530, %v555, %v556
      %v558 = vrot.slane %v508, 7
      %v559 = vrot.slane %v509, 7
      %v560 = vsel %vm530, %v558, %v559
      %v591 = vsel %vm530, 0.0, %v531
      %v592 = vsel %vm530, 0.0, %v534
      %v593 = vsel %vm530, 0.0, %v537
      %v594 = vsel %vm530, 0.0, %v540
      %v595 = vsel %vm530, 0.0, %v543
      %v596 = vsel %vm530, 0.0, %v546
      %v597 = vsel %vm530, 0.0, %v549
      %v598 = vsel %vm530, 0.0, %v552
      %v599 = vsel %vm530, 0.0, %v555
      %v600 = vsel %vm530, 0.0, %v558
      %v601 = vsel %vm530, %v532, 0.0
      %v602 = vsel %vm530, %v535, 0.0
      %v603 = vsel %vm530, %v538, 0.0
      %v604 = vsel %vm530, %v541, 0.0
      %v605 = vsel %vm530, %v544, 0.0
      %v606 = vsel %vm530, %v547, 0.0
      %v607 = vsel %vm530, %v550, 0.0
      %v608 = vsel %vm530, %v553, 0.0
      %v609 = vsel %vm530, %v556, 0.0
      %v610 = vsel %vm530, %v559, 0.0
      %vm627 = vcmask 1046528
      %v628 = vrot.slane %v591, 1
      %v629 = vrot.slane %v533, 1
      %v630 = vsel %vm627, %v628, %v629
      %v631 = vrot.slane %v601, 1
      %v632 = vsel %vm627, %v629, %v631
      %v633 = vrot.slane %v592, 1
      %v634 = vrot.slane %v536, 1
      %v635 = vsel %vm627, %v633, %v634
      %v636 = vrot.slane %v602, 1
      %v637 = vsel %vm627, %v634, %v636
      %v638 = vrot.slane %v593, 1
      %v639 = vrot.slane %v539, 1
      %v640 = vsel %vm627, %v638, %v639
      %v641 = vrot.slane %v603, 1
      %v642 = vsel %vm627, %v639, %v641
      %v643 = vrot.slane %v594, 1
      %v644 = vrot.slane %v542, 1
      %v645 = vsel %vm627, %v643, %v644
      %v646 = vrot.slane %v604, 1
      %v647 = vsel %vm627, %v644, %v646
      %v648 = vrot.slane %v595, 1
      %v649 = vrot.slane %v545, 1
      %v650 = vsel %vm627, %v648, %v649
      %v651 = vrot.slane %v605, 1
      %v652 = vsel %vm627, %v649, %v651
      %v653 = vrot.slane %v596, 1
      %v654 = vrot.slane %v548, 1
      %v655 = vsel %vm627, %v653, %v654
      %v656 = vrot.slane %v606, 1
      %v657 = vsel %vm627, %v654, %v656
      %v658 = vrot.slane %v597, 1
      %v659 = vrot.slane %v551, 1
      %v660 = vsel %vm627, %v658, %v659
      %v661 = vrot.slane %v607, 1
      %v662 = vsel %vm627, %v659, %v661
      %v663 = vrot.slane %v598, 1
      %v664 = vrot.slane %v554, 1
      %v665 = vsel %vm627, %v663, %v664
      %v666 = vrot.slane %v608, 1
      %v667 = vsel %vm627, %v664, %v666
      %vm684 = vcmask 1045504
      %v685 = vrot.slane %v591, 2
      %v686 = vrot.slane %v533, 2
      %v687 = vsel %vm684, %v685, %v686
      %v688 = vrot.slane %v601, 2
      %v689 = vsel %vm684, %v686, %v688
      %v690 = vrot.slane %v592, 2
      %v691 = vrot.slane %v536, 2
      %v692 = vsel %vm684, %v690, %v691
      %v693 = vrot.slane %v602, 2
      %v694 = vsel %vm684, %v691, %v693
      %v695 = vrot.slane %v593, 2
      %v696 = vrot.slane %v539, 2
      %v697 = vsel %vm684, %v695, %v696
      %v698 = vrot.slane %v603, 2
      %v699 = vsel %vm684, %v696, %v698
      %v700 = vrot.slane %v594, 2
      %v701 = vrot.slane %v542, 2
      %v702 = vsel %vm684, %v700, %v701
      %v703 = vrot.slane %v604, 2
      %v704 = vsel %vm684, %v701, %v703
      %v705 = vrot.slane %v595, 2
      %v706 = vrot.slane %v545, 2
      %v707 = vsel %vm684, %v705, %v706
      %v708 = vrot.slane %v605, 2
      %v709 = vsel %vm684, %v706, %v708
      %v710 = vrot.slane %v596, 2
      %v711 = vrot.slane %v548, 2
      %v712 = vsel %vm684, %v710, %v711
      %v713 = vrot.slane %v606, 2
      %v714 = vsel %vm684, %v711, %v713
      %v715 = vrot.slane %v597, 2
      %v716 = vrot.slane %v551, 2
      %v717 = vsel %vm684, %v715, %v716
      %v718 = vrot.slane %v607, 2
      %v719 = vsel %vm684, %v716, %v718
      %v720 = vrot.slane %v598, 2
      %v721 = vrot.slane %v554, 2
      %v722 = vsel %vm684, %v720, %v721
      %v723 = vrot.slane %v608, 2
      %v724 = vsel %vm684, %v721, %v723
      %v741 = vpack.c.bf16 %v533, %v591
      %v742 = vpack.c.bf16 %v632, %v630
      %v743 = vpack.c.bf16 %v689, %v687
      %v744 = vpack.c.bf16 %v536, %v592
      %v745 = vpack.c.bf16 %v637, %v635
      %v746 = vpack.c.bf16 %v694, %v692
      %v747 = vpack.c.bf16 %v539, %v593
      %v748 = vpack.c.bf16 %v642, %v640
      %v749 = vpack.c.bf16 %v699, %v697
      %v750 = vpack.c.bf16 %v542, %v594
      %v751 = vpack.c.bf16 %v647, %v645
      %v752 = vpack.c.bf16 %v704, %v702
      %v753 = vpack.c.bf16 %v545, %v595
      %v754 = vpack.c.bf16 %v652, %v650
      %v755 = vpack.c.bf16 %v709, %v707
      %v756 = vpack.c.bf16 %v548, %v596
      %v757 = vpack.c.bf16 %v657, %v655
      %v758 = vpack.c.bf16 %v714, %v712
      %v759 = vpack.c.bf16 %v551, %v597
      %v760 = vpack.c.bf16 %v662, %v660
      %v761 = vpack.c.bf16 %v719, %v717
      %v762 = vpack.c.bf16 %v554, %v598
      %v763 = vpack.c.bf16 %v667, %v665
      %v764 = vpack.c.bf16 %v724, %v722
      %v765 = vld [vmem:[%s2] sm:$0xf]
      %v766 = vld [vmem:[%s2 + $0x4] sm:$0xf]
      %v767 = vld [vmem:[%s2 + $0x8] sm:$0xf]
      %v768 = vld [vmem:[%s2 + $0xc] sm:$0xf]
      %v769 = vld [vmem:[%s2 + $0x10] sm:$0xf]
      %v770 = vld [vmem:[%s2 + $0x14] sm:$0xf]
      %v771 = vld [vmem:[%s2 + $0x18] sm:$0xf]
      %v772 = vld [vmem:[%s2 + $0x1c] sm:$0xf]
      %v773 = vld [vmem:[%s2 + $0x20] sm:$0xf]
      %v774 = vld [vmem:[%s2 + $0x24] sm:$0xf]
      %v775 = vld [vmem:[%s2 + $0x28] sm:$0xf]
      %v776 = vld [vmem:[%s2 + $0x2c] sm:$0xf]
      %v777 = vld [vmem:[%s2 + $0x30] sm:$0xf]
      %v778 = vld [vmem:[%s2 + $0x34] sm:$0xf]
      %v779 = vld [vmem:[%s2 + $0x38] sm:$0xf]
      %v780 = vld [vmem:[%s2 + $0x3c] sm:$0xf]
      %v781 = vld [vmem:[%s2 + $0x40] sm:$0xf]
      %v782 = vld [vmem:[%s2 + $0x44] sm:$0xf]
      %v783 = vld [vmem:[%s2 + $0x48] sm:$0xf]
      %v784 = vld [vmem:[%s2 + $0x4c] sm:$0xf]
      %v785 = vld [vmem:[%s2 + $0x50] sm:$0xf]
      %v786 = vld [vmem:[%s2 + $0x54] sm:$0xf]
      %v787 = vld [vmem:[%s2 + $0x58] sm:$0xf]
      %v788 = vld [vmem:[%s2 + $0x5c] sm:$0xf]
      %v789 = vld [vmem:[%s2 + $0x60] sm:$0xf]
      %v790 = vld [vmem:[%s2 + $0x64] sm:$0xf]
      %v791 = vld [vmem:[%s2 + $0x68] sm:$0xf]
      %v792 = vld [vmem:[%s2 + $0x6c] sm:$0xf]
      %v793 = vld [vmem:[%s2 + $0x70] sm:$0xf]
      %v794 = vld [vmem:[%s2 + $0x74] sm:$0xf]
      %v795 = vld [vmem:[%s2 + $0x78] sm:$0xf]
      %v796 = vld [vmem:[%s2 + $0x7c] sm:$0xf]
      %v797 = vld [vmem:[%s2 + $0x80] sm:$0xf]
      %v798 = vld [vmem:[%s2 + $0x84] sm:$0xf]
      %v799 = vld [vmem:[%s2 + $0x88] sm:$0xf]
      %v800 = vld [vmem:[%s2 + $0x8c] sm:$0xf]
      %v801 = vld [vmem:[%s2 + $0x90] sm:$0xf]
      %v802 = vld [vmem:[%s2 + $0x94] sm:$0xf]
      %v803 = vld [vmem:[%s2 + $0x98] sm:$0xf]
      %v804 = vld [vmem:[%s2 + $0x9c] sm:$0xf]
      %v805 = vld [vmem:[%s2 + $0xa0] sm:$0xf]
      %v806 = vld [vmem:[%s2 + $0xa4] sm:$0xf]
      %v807 = vld [vmem:[%s2 + $0xa8] sm:$0xf]
      %v808 = vld [vmem:[%s2 + $0xac] sm:$0xf]
      %v809 = vld [vmem:[%s2 + $0xb0] sm:$0xf]
      %v810 = vld [vmem:[%s2 + $0xb4] sm:$0xf]
      %v811 = vld [vmem:[%s2 + $0xb8] sm:$0xf]
      %v812 = vld [vmem:[%s2 + $0xbc] sm:$0xf]
      %v815 = vrot.slane %v599, 1
      %v816 = vrot.slane %v557, 1
      %v817 = vsel %vm627, %v815, %v816
      %v818 = vrot.slane %v609, 1
      %v819 = vsel %vm627, %v816, %v818
      %v822 = vrot.slane %v599, 2
      %v823 = vrot.slane %v557, 2
      %v824 = vsel %vm684, %v822, %v823
      %v825 = vrot.slane %v609, 2
      %v826 = vsel %vm684, %v823, %v825
      %v829 = vpack.c.bf16 %v557, %v599
      %v830 = vpack.c.bf16 %v819, %v817
      %v831 = vpack.c.bf16 %v826, %v824
      %s832 = scalar_lea.vmem %s2, 192
      %v833 = vld [vmem:[%s832] sm:$0xf]
      %v834 = vld [vmem:[%s832 + $0x4] sm:$0xf]
      %v835 = vld [vmem:[%s832 + $0x8] sm:$0xf]
      %v836 = vld [vmem:[%s832 + $0xc] sm:$0xf]
      %v837 = vld [vmem:[%s832 + $0x10] sm:$0xf]
      %v838 = vld [vmem:[%s832 + $0x14] sm:$0xf]
      %v839 = vld [vmem:[%s832 + $0x18] sm:$0xf]
      %v840 = vld [vmem:[%s832 + $0x1c] sm:$0xf]
      %v841 = vld [vmem:[%s832 + $0x20] sm:$0xf]
      %v842 = vld [vmem:[%s832 + $0x24] sm:$0xf]
      %v843 = vld [vmem:[%s832 + $0x28] sm:$0xf]
      %v844 = vld [vmem:[%s832 + $0x2c] sm:$0xf]
      %v845 = vld [vmem:[%s832 + $0x30] sm:$0xf]
      %v846 = vld [vmem:[%s832 + $0x34] sm:$0xf]
      %v847 = vld [vmem:[%s832 + $0x38] sm:$0xf]
      %v848 = vld [vmem:[%s832 + $0x3c] sm:$0xf]
      %v849 = vld [vmem:[%s832 + $0x40] sm:$0xf]
      %v850 = vld [vmem:[%s832 + $0x44] sm:$0xf]
      %v851 = vld [vmem:[%s832 + $0x48] sm:$0xf]
      %v852 = vld [vmem:[%s832 + $0x4c] sm:$0xf]
      %v853 = vld [vmem:[%s832 + $0x50] sm:$0xf]
      %v854 = vld [vmem:[%s832 + $0x54] sm:$0xf]
      %v855 = vld [vmem:[%s832 + $0x58] sm:$0xf]
      %v856 = vld [vmem:[%s832 + $0x5c] sm:$0xf]
      %v857 = vld [vmem:[%s832 + $0x60] sm:$0xf]
      %v858 = vld [vmem:[%s832 + $0x64] sm:$0xf]
      %v859 = vld [vmem:[%s832 + $0x68] sm:$0xf]
      %v860 = vld [vmem:[%s832 + $0x6c] sm:$0xf]
      %v861 = vld [vmem:[%s832 + $0x70] sm:$0xf]
      %v862 = vld [vmem:[%s832 + $0x74] sm:$0xf]
      %v863 = vld [vmem:[%s832 + $0x78] sm:$0xf]
      %v864 = vld [vmem:[%s832 + $0x7c] sm:$0xf]
      %v865 = vld [vmem:[%s832 + $0x80] sm:$0xf]
      %v866 = vld [vmem:[%s832 + $0x84] sm:$0xf]
      %v867 = vld [vmem:[%s832 + $0x88] sm:$0xf]
      %v868 = vld [vmem:[%s832 + $0x8c] sm:$0xf]
      %v869 = vld [vmem:[%s832 + $0x90] sm:$0xf]
      %v870 = vld [vmem:[%s832 + $0x94] sm:$0xf]
      %v871 = vld [vmem:[%s832 + $0x98] sm:$0xf]
      %v872 = vld [vmem:[%s832 + $0x9c] sm:$0xf]
      %v873 = vld [vmem:[%s832 + $0xa0] sm:$0xf]
      %v874 = vld [vmem:[%s832 + $0xa4] sm:$0xf]
      %v875 = vld [vmem:[%s832 + $0xa8] sm:$0xf]
      %v876 = vld [vmem:[%s832 + $0xac] sm:$0xf]
      %v877 = vld [vmem:[%s832 + $0xb0] sm:$0xf]
      %v878 = vld [vmem:[%s832 + $0xb4] sm:$0xf]
      %v879 = vld [vmem:[%s832 + $0xb8] sm:$0xf]
      %v880 = vld [vmem:[%s832 + $0xbc] sm:$0xf]
      %v929 = vunpack.c.l.b16 %v833
      %v930 = vunpack.c.l.b16 %v834
      %v931 = vunpack.c.l.b16 %v835
      %v932 = vunpack.c.l.b16 %v836
      %v933 = vunpack.c.l.b16 %v837
      %v934 = vunpack.c.l.b16 %v838
      %v935 = vunpack.c.l.b16 %v839
      %v936 = vunpack.c.l.b16 %v840
      %v937 = vunpack.c.l.b16 %v841
      %v938 = vunpack.c.l.b16 %v842
      %v939 = vunpack.c.l.b16 %v843
      %v940 = vunpack.c.l.b16 %v844
      %v941 = vunpack.c.l.b16 %v845
      %v942 = vunpack.c.l.b16 %v846
      %v943 = vunpack.c.l.b16 %v847
      %v944 = vunpack.c.l.b16 %v848
      %v945 = vunpack.c.l.b16 %v849
      %v946 = vunpack.c.l.b16 %v850
      %v947 = vunpack.c.l.b16 %v851
      %v948 = vunpack.c.l.b16 %v852
      %v949 = vunpack.c.l.b16 %v853
      %v950 = vunpack.c.l.b16 %v854
      %v951 = vunpack.c.l.b16 %v855
      %v952 = vunpack.c.l.b16 %v856
      %v953 = vunpack.c.l.b16 %v857
      %v954 = vunpack.c.l.b16 %v858
      %v955 = vunpack.c.l.b16 %v859
      %v956 = vunpack.c.l.b16 %v860
      %v957 = vunpack.c.l.b16 %v861
      %v958 = vunpack.c.l.b16 %v862
      %v959 = vunpack.c.l.b16 %v863
      %v960 = vunpack.c.l.b16 %v864
      %v961 = vunpack.c.l.b16 %v865
      %v962 = vunpack.c.l.b16 %v866
      %v963 = vunpack.c.l.b16 %v867
      %v964 = vunpack.c.l.b16 %v868
      %v965 = vunpack.c.l.b16 %v869
      %v966 = vunpack.c.l.b16 %v870
      %v967 = vunpack.c.l.b16 %v871
      %v968 = vunpack.c.l.b16 %v872
      %v969 = vunpack.c.l.b16 %v873
      %v970 = vunpack.c.l.b16 %v874
      %v971 = vunpack.c.l.b16 %v875
      %v972 = vunpack.c.l.b16 %v876
      %v973 = vunpack.c.l.b16 %v877
      %v974 = vunpack.c.l.b16 %v878
      %v975 = vunpack.c.l.b16 %v879
      %v976 = vunpack.c.l.b16 %v880
      %v977 = vpack.c.b16 %v930, %v929
      %v978 = vpack.c.b16 %v932, %v931
      %v979 = vpack.c.b16 %v934, %v933
      %v980 = vpack.c.b16 %v936, %v935
      %v981 = vpack.c.b16 %v938, %v937
      %v982 = vpack.c.b16 %v940, %v939
      %v983 = vpack.c.b16 %v942, %v941
      %v984 = vpack.c.b16 %v944, %v943
      %v985 = vpack.c.b16 %v946, %v945
      %v986 = vpack.c.b16 %v948, %v947
      %v987 = vpack.c.b16 %v950, %v949
      %v988 = vpack.c.b16 %v952, %v951
      %v989 = vpack.c.b16 %v954, %v953
      %v990 = vpack.c.b16 %v956, %v955
      %v991 = vpack.c.b16 %v958, %v957
      %v992 = vpack.c.b16 %v960, %v959
      %v993 = vpack.c.b16 %v962, %v961
      %v994 = vpack.c.b16 %v964, %v963
      %v995 = vpack.c.b16 %v966, %v965
      %v996 = vpack.c.b16 %v968, %v967
      %v997 = vpack.c.b16 %v970, %v969
      %v998 = vpack.c.b16 %v972, %v971
      %v999 = vpack.c.b16 %v974, %v973
      %v1000 = vpack.c.b16 %v976, %v975
      %1025 = vmatprep.subr.bf16.mxu0 0
      %1026 = vmatpush1.bf16.msra.mxu0 %v984
      %1027 = vmatprep.subr.bf16.mxu0 0
      %1028 = vmatpush1.bf16.msra.mxu0 %v983
      %1029 = vmatprep.subr.bf16.mxu0 0
      %1030 = vmatpush1.bf16.msra.mxu0 %v982
      %1031 = vmatprep.subr.bf16.mxu0 0
      %1032 = vmatpush1.bf16.msra.mxu0 %v981
      %1033 = vmatprep.subr.bf16.mxu0 0
      %1034 = vmatpush1.bf16.msra.mxu0 %v980
      %1035 = vmatprep.subr.bf16.mxu0 0
      %1036 = vmatpush1.bf16.msra.mxu0 %v979
      %1037 = vmatprep.subr.bf16.mxu0 0
      %1038 = vmatpush1.bf16.msra.mxu0 %v978
      %1039 = vmatprep.subr.bf16.mxu0 0
      %1040 = vmatpush1.bf16.msra.mxu0 %v977
      %1041 = vmatprep.subr.bf16.mxu0 0
      %1042 = vmatpush2.bf16.msra.mxu0 %v992
      %1043 = vmatprep.subr.bf16.mxu0 0
      %1044 = vmatpush2.bf16.msra.mxu0 %v991
      %1045 = vmatprep.subr.bf16.mxu0 0
      %1046 = vmatpush2.bf16.msra.mxu0 %v990
      %1047 = vmatprep.subr.bf16.mxu0 0
      %1048 = vmatpush2.bf16.msra.mxu0 %v989
      %1049 = vmatprep.subr.bf16.mxu0 0
      %1050 = vmatpush2.bf16.msra.mxu0 %v988
      %1051 = vmatprep.subr.bf16.mxu0 0
      %1052 = vmatpush2.bf16.msra.mxu0 %v987
      %1053 = vmatprep.subr.bf16.mxu0 0
      %1054 = vmatpush2.bf16.msra.mxu0 %v986
      %1055 = vmatprep.subr.bf16.mxu0 0
      %1056 = vmatpush2.bf16.msra.mxu0 %v985
      %1057 = vmatprep.mubr.bf16.mxu0 %v745
      %1058 = vmatmul.mubr.bf16.gmra.mxu0 %v744
      %v1059 = vpop.f32.mrf.mxu0
      %v1060 = vadd.f32 0.0, %v1059
      %v1061 = vpop.f32.mrf.mxu0
      %v1062 = vpop.f32.mrf.mxu0
      %v1063 = vadd.f32 0.0, %v1062
      %v1064 = vpop.f32.mrf.mxu0
      %1065 = vmatprep.mubr.bf16.mxu0 %v748
      %1066 = vmatmul.mubr.bf16.gmra.mxu0 %v747
      %v1067 = vpop.f32.mrf.mxu0
      %v1068 = vadd.f32 0.0, %v1067
      %v1069 = vpop.f32.mrf.mxu0
      %v1070 = vpop.f32.mrf.mxu0
      %v1071 = vadd.f32 0.0, %v1070
      %v1072 = vpop.f32.mrf.mxu0
      %1073 = vmatprep.mubr.bf16.mxu0 %v751
      %1074 = vmatmul.mubr.bf16.gmra.mxu0 %v750
      %v1075 = vpop.f32.mrf.mxu0
      %v1076 = vadd.f32 0.0, %v1075
      %v1077 = vpop.f32.mrf.mxu0
      %v1078 = vpop.f32.mrf.mxu0
      %v1079 = vadd.f32 0.0, %v1078
      %v1080 = vpop.f32.mrf.mxu0
      %1081 = vmatprep.mubr.bf16.mxu0 %v754
      %1082 = vmatmul.mubr.bf16.gmra.mxu0 %v753
      %v1083 = vpop.f32.mrf.mxu0
      %v1084 = vadd.f32 0.0, %v1083
      %v1085 = vpop.f32.mrf.mxu0
      %v1086 = vpop.f32.mrf.mxu0
      %v1087 = vadd.f32 0.0, %v1086
      %v1088 = vpop.f32.mrf.mxu0
      %1089 = vmatprep.mubr.bf16.mxu0 %v757
      %1090 = vmatmul.mubr.bf16.gmra.mxu0 %v756
      %v1091 = vpop.f32.mrf.mxu0
      %v1092 = vadd.f32 0.0, %v1091
      %v1093 = vpop.f32.mrf.mxu0
      %v1094 = vpop.f32.mrf.mxu0
      %v1095 = vadd.f32 0.0, %v1094
      %v1096 = vpop.f32.mrf.mxu0
      %1097 = vmatprep.mubr.bf16.mxu0 %v760
      %1098 = vmatmul.mubr.bf16.gmra.mxu0 %v759
      %v1099 = vpop.f32.mrf.mxu0
      %v1100 = vadd.f32 0.0, %v1099
      %v1101 = vpop.f32.mrf.mxu0
      %v1102 = vpop.f32.mrf.mxu0
      %v1103 = vadd.f32 0.0, %v1102
      %v1104 = vpop.f32.mrf.mxu0
      %1105 = vmatprep.mubr.bf16.mxu0 %v763
      %1106 = vmatmul.mubr.bf16.gmra.mxu0 %v762
      %v1107 = vpop.f32.mrf.mxu0
      %v1108 = vadd.f32 0.0, %v1107
      %v1109 = vpop.f32.mrf.mxu0
      %v1110 = vpop.f32.mrf.mxu0
      %v1111 = vadd.f32 0.0, %v1110
      %v1112 = vpop.f32.mrf.mxu0
      %1113 = vmatprep.mubr.bf16.mxu0 %v830
      %1114 = vmatmul.mubr.bf16.gmra.mxu0 %v829
      %v1115 = vpop.f32.mrf.mxu0
      %v1116 = vadd.f32 0.0, %v1115
      %v1117 = vpop.f32.mrf.mxu0
      %v1118 = vpop.f32.mrf.mxu0
      %v1119 = vadd.f32 0.0, %v1118
      %v1120 = vpop.f32.mrf.mxu0
      %1121 = vdwg.mxu0
      %1122 = vmatprep.subr.bf16.mxu0 0
      %1123 = vmatpush1.bf16.msra.mxu0 %v1000
      %1124 = vmatprep.subr.bf16.mxu0 0
      %1125 = vmatpush1.bf16.msra.mxu0 %v999
      %1126 = vmatprep.subr.bf16.mxu0 0
      %1127 = vmatpush1.bf16.msra.mxu0 %v998
      %1128 = vmatprep.subr.bf16.mxu0 0
      %1129 = vmatpush1.bf16.msra.mxu0 %v997
      %1130 = vmatprep.subr.bf16.mxu0 0
      %1131 = vmatpush1.bf16.msra.mxu0 %v996
      %1132 = vmatprep.subr.bf16.mxu0 0
      %1133 = vmatpush1.bf16.msra.mxu0 %v995
      %1134 = vmatprep.subr.bf16.mxu0 0
      %1135 = vmatpush1.bf16.msra.mxu0 %v994
      %1136 = vmatprep.subr.bf16.mxu0 0
      %1137 = vmatpush1.bf16.msra.mxu0 %v993
      %1138 = vmatprep.subr.bf16.mxu0 0
      %1139 = vmatpush2.bf16.msra.mxu0 0
      %1140 = vmatprep.subr.bf16.mxu0 0
      %1141 = vmatpush2.bf16.msra.mxu0 0
      %1142 = vmatprep.subr.bf16.mxu0 0
      %1143 = vmatpush2.bf16.msra.mxu0 0
      %1144 = vmatprep.subr.bf16.mxu0 0
      %1145 = vmatpush2.bf16.msra.mxu0 0
      %1146 = vmatprep.subr.bf16.mxu0 0
      %1147 = vmatpush2.bf16.msra.mxu0 0
      %1148 = vmatprep.subr.bf16.mxu0 0
      %1149 = vmatpush2.bf16.msra.mxu0 0
      %1150 = vmatprep.subr.bf16.mxu0 0
      %1151 = vmatpush2.bf16.msra.mxu0 0
      %1152 = vmatprep.subr.bf16.mxu0 0
      %1153 = vmatpush2.bf16.msra.mxu0 0
      %1154 = vmatprep.mubr.bf16.mxu0 0
      %1155 = vmatmul.mubr.bf16.gmra.mxu0 %v746
      %v1156 = vpop.f32.mrf.mxu0
      %v1157 = vadd.f32 %v1060, %v1156
      %v1158 = vpop.f32.mrf.mxu0
      %v1159 = vpop.f32.mrf.mxu0
      %v1160 = vadd.f32 %v1063, %v1159
      %v1161 = vpop.f32.mrf.mxu0
      %1162 = vmatprep.mubr.bf16.mxu0 0
      %1163 = vmatmul.mubr.bf16.gmra.mxu0 %v749
      %v1164 = vpop.f32.mrf.mxu0
      %v1165 = vadd.f32 %v1068, %v1164
      %v1166 = vpop.f32.mrf.mxu0
      %v1167 = vpop.f32.mrf.mxu0
      %v1168 = vadd.f32 %v1071, %v1167
      %v1169 = vpop.f32.mrf.mxu0
      %1170 = vmatprep.mubr.bf16.mxu0 0
      %1171 = vmatmul.mubr.bf16.gmra.mxu0 %v752
      %v1172 = vpop.f32.mrf.mxu0
      %v1173 = vadd.f32 %v1076, %v1172
      %v1174 = vpop.f32.mrf.mxu0
      %v1175 = vpop.f32.mrf.mxu0
      %v1176 = vadd.f32 %v1079, %v1175
      %v1177 = vpop.f32.mrf.mxu0
      %1178 = vmatprep.mubr.bf16.mxu0 0
      %1179 = vmatmul.mubr.bf16.gmra.mxu0 %v755
      %v1180 = vpop.f32.mrf.mxu0
      %v1181 = vadd.f32 %v1084, %v1180
      %v1182 = vpop.f32.mrf.mxu0
      %v1183 = vpop.f32.mrf.mxu0
      %v1184 = vadd.f32 %v1087, %v1183
      %v1185 = vpop.f32.mrf.mxu0
      %1186 = vmatprep.mubr.bf16.mxu0 0
      %1187 = vmatmul.mubr.bf16.gmra.mxu0 %v758
      %v1188 = vpop.f32.mrf.mxu0
      %v1189 = vadd.f32 %v1092, %v1188
      %v1190 = vpop.f32.mrf.mxu0
      %v1191 = vpop.f32.mrf.mxu0
      %v1192 = vadd.f32 %v1095, %v1191
      %v1193 = vpop.f32.mrf.mxu0
      %1194 = vmatprep.mubr.bf16.mxu0 0
      %1195 = vmatmul.mubr.bf16.gmra.mxu0 %v761
      %v1196 = vpop.f32.mrf.mxu0
      %v1197 = vadd.f32 %v1100, %v1196
      %v1198 = vpop.f32.mrf.mxu0
      %v1199 = vpop.f32.mrf.mxu0
      %v1200 = vadd.f32 %v1103, %v1199
      %v1201 = vpop.f32.mrf.mxu0
      %1202 = vmatprep.mubr.bf16.mxu0 0
      %1203 = vmatmul.mubr.bf16.gmra.mxu0 %v764
      %v1204 = vpop.f32.mrf.mxu0
      %v1205 = vadd.f32 %v1108, %v1204
      %v1206 = vpop.f32.mrf.mxu0
      %v1207 = vpop.f32.mrf.mxu0
      %v1208 = vadd.f32 %v1111, %v1207
      %v1209 = vpop.f32.mrf.mxu0
      %1210 = vmatprep.mubr.bf16.mxu0 0
      %1211 = vmatmul.mubr.bf16.gmra.mxu0 %v831
      %v1212 = vpop.f32.mrf.mxu0
      %v1213 = vadd.f32 %v1116, %v1212
      %v1214 = vpop.f32.mrf.mxu0
      %v1215 = vpop.f32.mrf.mxu0
      %v1216 = vadd.f32 %v1119, %v1215
      %v1217 = vpop.f32.mrf.mxu0
      %1218 = vdwg.mxu0
      %v1267 = vunpack.c.l.b16 %v765
      %v1268 = vunpack.c.l.b16 %v766
      %v1269 = vunpack.c.l.b16 %v767
      %v1270 = vunpack.c.l.b16 %v768
      %v1271 = vunpack.c.l.b16 %v769
      %v1272 = vunpack.c.l.b16 %v770
      %v1273 = vunpack.c.l.b16 %v771
      %v1274 = vunpack.c.l.b16 %v772
      %v1275 = vunpack.c.l.b16 %v773
      %v1276 = vunpack.c.l.b16 %v774
      %v1277 = vunpack.c.l.b16 %v775
      %v1278 = vunpack.c.l.b16 %v776
      %v1279 = vunpack.c.l.b16 %v777
      %v1280 = vunpack.c.l.b16 %v778
      %v1281 = vunpack.c.l.b16 %v779
      %v1282 = vunpack.c.l.b16 %v780
      %v1283 = vunpack.c.l.b16 %v781
      %v1284 = vunpack.c.l.b16 %v782
      %v1285 = vunpack.c.l.b16 %v783
      %v1286 = vunpack.c.l.b16 %v784
      %v1287 = vunpack.c.l.b16 %v785
      %v1288 = vunpack.c.l.b16 %v786
      %v1289 = vunpack.c.l.b16 %v787
      %v1290 = vunpack.c.l.b16 %v788
      %v1291 = vunpack.c.l.b16 %v789
      %v1292 = vunpack.c.l.b16 %v790
      %v1293 = vunpack.c.l.b16 %v791
      %v1294 = vunpack.c.l.b16 %v792
      %v1295 = vunpack.c.l.b16 %v793
      %v1296 = vunpack.c.l.b16 %v794
      %v1297 = vunpack.c.l.b16 %v795
      %v1298 = vunpack.c.l.b16 %v796
      %v1299 = vunpack.c.l.b16 %v797
      %v1300 = vunpack.c.l.b16 %v798
      %v1301 = vunpack.c.l.b16 %v799
      %v1302 = vunpack.c.l.b16 %v800
      %v1303 = vunpack.c.l.b16 %v801
      %v1304 = vunpack.c.l.b16 %v802
      %v1305 = vunpack.c.l.b16 %v803
      %v1306 = vunpack.c.l.b16 %v804
      %v1307 = vunpack.c.l.b16 %v805
      %v1308 = vunpack.c.l.b16 %v806
      %v1309 = vunpack.c.l.b16 %v807
      %v1310 = vunpack.c.l.b16 %v808
      %v1311 = vunpack.c.l.b16 %v809
      %v1312 = vunpack.c.l.b16 %v810
      %v1313 = vunpack.c.l.b16 %v811
      %v1314 = vunpack.c.l.b16 %v812
      %v1315 = vpack.c.b16 %v1268, %v1267
      %v1316 = vpack.c.b16 %v1270, %v1269
      %v1317 = vpack.c.b16 %v1272, %v1271
      %v1318 = vpack.c.b16 %v1274, %v1273
      %v1319 = vpack.c.b16 %v1276, %v1275
      %v1320 = vpack.c.b16 %v1278, %v1277
      %v1321 = vpack.c.b16 %v1280, %v1279
      %v1322 = vpack.c.b16 %v1282, %v1281
      %v1323 = vpack.c.b16 %v1284, %v1283
      %v1324 = vpack.c.b16 %v1286, %v1285
      %v1325 = vpack.c.b16 %v1288, %v1287
      %v1326 = vpack.c.b16 %v1290, %v1289
      %v1327 = vpack.c.b16 %v1292, %v1291
      %v1328 = vpack.c.b16 %v1294, %v1293
      %v1329 = vpack.c.b16 %v1296, %v1295
      %v1330 = vpack.c.b16 %v1298, %v1297
      %v1331 = vpack.c.b16 %v1300, %v1299
      %v1332 = vpack.c.b16 %v1302, %v1301
      %v1333 = vpack.c.b16 %v1304, %v1303
      %v1334 = vpack.c.b16 %v1306, %v1305
      %v1335 = vpack.c.b16 %v1308, %v1307
      %v1336 = vpack.c.b16 %v1310, %v1309
      %v1337 = vpack.c.b16 %v1312, %v1311
      %v1338 = vpack.c.b16 %v1314, %v1313
      %1363 = vmatprep.subr.bf16.mxu0 0
      %1364 = vmatpush1.bf16.msra.mxu0 %v1322
      %1365 = vmatprep.subr.bf16.mxu0 0
      %1366 = vmatpush1.bf16.msra.mxu0 %v1321
      %1367 = vmatprep.subr.bf16.mxu0 0
      %1368 = vmatpush1.bf16.msra.mxu0 %v1320
      %1369 = vmatprep.subr.bf16.mxu0 0
      %1370 = vmatpush1.bf16.msra.mxu0 %v1319
      %1371 = vmatprep.subr.bf16.mxu0 0
      %1372 = vmatpush1.bf16.msra.mxu0 %v1318
      %1373 = vmatprep.subr.bf16.mxu0 0
      %1374 = vmatpush1.bf16.msra.mxu0 %v1317
      %1375 = vmatprep.subr.bf16.mxu0 0
      %1376 = vmatpush1.bf16.msra.mxu0 %v1316
      %1377 = vmatprep.subr.bf16.mxu0 0
      %1378 = vmatpush1.bf16.msra.mxu0 %v1315
      %1379 = vmatprep.subr.bf16.mxu0 0
      %1380 = vmatpush2.bf16.msra.mxu0 %v1330
      %1381 = vmatprep.subr.bf16.mxu0 0
      %1382 = vmatpush2.bf16.msra.mxu0 %v1329
      %1383 = vmatprep.subr.bf16.mxu0 0
      %1384 = vmatpush2.bf16.msra.mxu0 %v1328
      %1385 = vmatprep.subr.bf16.mxu0 0
      %1386 = vmatpush2.bf16.msra.mxu0 %v1327
      %1387 = vmatprep.subr.bf16.mxu0 0
      %1388 = vmatpush2.bf16.msra.mxu0 %v1326
      %1389 = vmatprep.subr.bf16.mxu0 0
      %1390 = vmatpush2.bf16.msra.mxu0 %v1325
      %1391 = vmatprep.subr.bf16.mxu0 0
      %1392 = vmatpush2.bf16.msra.mxu0 %v1324
      %1393 = vmatprep.subr.bf16.mxu0 0
      %1394 = vmatpush2.bf16.msra.mxu0 %v1323
      %1395 = vmatprep.mubr.bf16.mxu0 %v742
      %1396 = vmatmul.mubr.bf16.gmra.mxu0 %v741
      %v1397 = vpop.f32.mrf.mxu0
      %v1398 = vadd.f32 %v1157, %v1397
      %v1399 = vpop.f32.mrf.mxu0
      %v1400 = vpop.f32.mrf.mxu0
      %v1401 = vadd.f32 %v1160, %v1400
      %v1402 = vpop.f32.mrf.mxu0
      %1403 = vmatprep.mubr.bf16.mxu0 %v745
      %1404 = vmatmul.mubr.bf16.gmra.mxu0 %v744
      %v1405 = vpop.f32.mrf.mxu0
      %v1406 = vadd.f32 %v1165, %v1405
      %v1407 = vpop.f32.mrf.mxu0
      %v1408 = vpop.f32.mrf.mxu0
      %v1409 = vadd.f32 %v1168, %v1408
      %v1410 = vpop.f32.mrf.mxu0
      %1411 = vmatprep.mubr.bf16.mxu0 %v748
      %1412 = vmatmul.mubr.bf16.gmra.mxu0 %v747
      %v1413 = vpop.f32.mrf.mxu0
      %v1414 = vadd.f32 %v1173, %v1413
      %v1415 = vpop.f32.mrf.mxu0
      %v1416 = vpop.f32.mrf.mxu0
      %v1417 = vadd.f32 %v1176, %v1416
      %v1418 = vpop.f32.mrf.mxu0
      %1419 = vmatprep.mubr.bf16.mxu0 %v751
      %1420 = vmatmul.mubr.bf16.gmra.mxu0 %v750
      %v1421 = vpop.f32.mrf.mxu0
      %v1422 = vadd.f32 %v1181, %v1421
      %v1423 = vpop.f32.mrf.mxu0
      %v1424 = vpop.f32.mrf.mxu0
      %v1425 = vadd.f32 %v1184, %v1424
      %v1426 = vpop.f32.mrf.mxu0
      %1427 = vmatprep.mubr.bf16.mxu0 %v754
      %1428 = vmatmul.mubr.bf16.gmra.mxu0 %v753
      %v1429 = vpop.f32.mrf.mxu0
      %v1430 = vadd.f32 %v1189, %v1429
      %v1431 = vpop.f32.mrf.mxu0
      %v1432 = vpop.f32.mrf.mxu0
      %v1433 = vadd.f32 %v1192, %v1432
      %v1434 = vpop.f32.mrf.mxu0
      %1435 = vmatprep.mubr.bf16.mxu0 %v757
      %1436 = vmatmul.mubr.bf16.gmra.mxu0 %v756
      %v1437 = vpop.f32.mrf.mxu0
      %v1438 = vadd.f32 %v1197, %v1437
      %v1439 = vpop.f32.mrf.mxu0
      %v1440 = vpop.f32.mrf.mxu0
      %v1441 = vadd.f32 %v1200, %v1440
      %v1442 = vpop.f32.mrf.mxu0
      %1443 = vmatprep.mubr.bf16.mxu0 %v760
      %1444 = vmatmul.mubr.bf16.gmra.mxu0 %v759
      %v1445 = vpop.f32.mrf.mxu0
      %v1446 = vadd.f32 %v1205, %v1445
      %v1447 = vpop.f32.mrf.mxu0
      %v1448 = vpop.f32.mrf.mxu0
      %v1449 = vadd.f32 %v1208, %v1448
      %v1450 = vpop.f32.mrf.mxu0
      %1451 = vmatprep.mubr.bf16.mxu0 %v763
      %1452 = vmatmul.mubr.bf16.gmra.mxu0 %v762
      %v1453 = vpop.f32.mrf.mxu0
      %v1454 = vadd.f32 %v1213, %v1453
      %v1455 = vpop.f32.mrf.mxu0
      %v1456 = vpop.f32.mrf.mxu0
      %v1457 = vadd.f32 %v1216, %v1456
      %v1458 = vpop.f32.mrf.mxu0
      %1459 = vdwg.mxu0
      %1460 = vmatprep.subr.bf16.mxu0 0
      %1461 = vmatpush1.bf16.msra.mxu0 %v1338
      %1462 = vmatprep.subr.bf16.mxu0 0
      %1463 = vmatpush1.bf16.msra.mxu0 %v1337
      %1464 = vmatprep.subr.bf16.mxu0 0
      %1465 = vmatpush1.bf16.msra.mxu0 %v1336
      %1466 = vmatprep.subr.bf16.mxu0 0
      %1467 = vmatpush1.bf16.msra.mxu0 %v1335
      %1468 = vmatprep.subr.bf16.mxu0 0
      %1469 = vmatpush1.bf16.msra.mxu0 %v1334
      %1470 = vmatprep.subr.bf16.mxu0 0
      %1471 = vmatpush1.bf16.msra.mxu0 %v1333
      %1472 = vmatprep.subr.bf16.mxu0 0
      %1473 = vmatpush1.bf16.msra.mxu0 %v1332
      %1474 = vmatprep.subr.bf16.mxu0 0
      %1475 = vmatpush1.bf16.msra.mxu0 %v1331
      %1476 = vmatprep.subr.bf16.mxu0 0
      %1477 = vmatpush2.bf16.msra.mxu0 0
      %1478 = vmatprep.subr.bf16.mxu0 0
      %1479 = vmatpush2.bf16.msra.mxu0 0
      %1480 = vmatprep.subr.bf16.mxu0 0
      %1481 = vmatpush2.bf16.msra.mxu0 0
      %1482 = vmatprep.subr.bf16.mxu0 0
      %1483 = vmatpush2.bf16.msra.mxu0 0
      %1484 = vmatprep.subr.bf16.mxu0 0
      %1485 = vmatpush2.bf16.msra.mxu0 0
      %1486 = vmatprep.subr.bf16.mxu0 0
      %1487 = vmatpush2.bf16.msra.mxu0 0
      %1488 = vmatprep.subr.bf16.mxu0 0
      %1489 = vmatpush2.bf16.msra.mxu0 0
      %1490 = vmatprep.subr.bf16.mxu0 0
      %1491 = vmatpush2.bf16.msra.mxu0 0
      %1492 = vmatprep.mubr.bf16.mxu0 0
      %1493 = vmatmul.mubr.bf16.gmra.mxu0 %v743
      %v1494 = vpop.f32.mrf.mxu0
      %v1495 = vadd.f32 %v1398, %v1494
      %v1496 = vpop.f32.mrf.mxu0
      %v1497 = vpop.f32.mrf.mxu0
      %v1498 = vadd.f32 %v1401, %v1497
      %v1499 = vpop.f32.mrf.mxu0
      %1500 = vmatprep.mubr.bf16.mxu0 0
      %1501 = vmatmul.mubr.bf16.gmra.mxu0 %v746
      %v1502 = vpop.f32.mrf.mxu0
      %v1503 = vadd.f32 %v1406, %v1502
      %v1504 = vpop.f32.mrf.mxu0
      %v1505 = vpop.f32.mrf.mxu0
      %v1506 = vadd.f32 %v1409, %v1505
      %v1507 = vpop.f32.mrf.mxu0
      %1508 = vmatprep.mubr.bf16.mxu0 0
      %1509 = vmatmul.mubr.bf16.gmra.mxu0 %v749
      %v1510 = vpop.f32.mrf.mxu0
      %v1511 = vadd.f32 %v1414, %v1510
      %v1512 = vpop.f32.mrf.mxu0
      %v1513 = vpop.f32.mrf.mxu0
      %v1514 = vadd.f32 %v1417, %v1513
      %v1515 = vpop.f32.mrf.mxu0
      %1516 = vmatprep.mubr.bf16.mxu0 0
      %1517 = vmatmul.mubr.bf16.gmra.mxu0 %v752
      %v1518 = vpop.f32.mrf.mxu0
      %v1519 = vadd.f32 %v1422, %v1518
      %v1520 = vpop.f32.mrf.mxu0
      %v1521 = vpop.f32.mrf.mxu0
      %v1522 = vadd.f32 %v1425, %v1521
      %v1523 = vpop.f32.mrf.mxu0
      %1524 = vmatprep.mubr.bf16.mxu0 0
      %1525 = vmatmul.mubr.bf16.gmra.mxu0 %v755
      %v1526 = vpop.f32.mrf.mxu0
      %v1527 = vadd.f32 %v1430, %v1526
      %v1528 = vpop.f32.mrf.mxu0
      %v1529 = vpop.f32.mrf.mxu0
      %v1530 = vadd.f32 %v1433, %v1529
      %v1531 = vpop.f32.mrf.mxu0
      %1532 = vmatprep.mubr.bf16.mxu0 0
      %1533 = vmatmul.mubr.bf16.gmra.mxu0 %v758
      %v1534 = vpop.f32.mrf.mxu0
      %v1535 = vadd.f32 %v1438, %v1534
      %v1536 = vpop.f32.mrf.mxu0
      %v1537 = vpop.f32.mrf.mxu0
      %v1538 = vadd.f32 %v1441, %v1537
      %v1539 = vpop.f32.mrf.mxu0
      %1540 = vmatprep.mubr.bf16.mxu0 0
      %1541 = vmatmul.mubr.bf16.gmra.mxu0 %v761
      %v1542 = vpop.f32.mrf.mxu0
      %v1543 = vadd.f32 %v1446, %v1542
      %v1544 = vpop.f32.mrf.mxu0
      %v1545 = vpop.f32.mrf.mxu0
      %v1546 = vadd.f32 %v1449, %v1545
      %v1547 = vpop.f32.mrf.mxu0
      %1548 = vmatprep.mubr.bf16.mxu0 0
      %1549 = vmatmul.mubr.bf16.gmra.mxu0 %v764
      %v1550 = vpop.f32.mrf.mxu0
      %v1551 = vadd.f32 %v1454, %v1550
      %v1552 = vpop.f32.mrf.mxu0
      %v1553 = vpop.f32.mrf.mxu0
      %v1554 = vadd.f32 %v1457, %v1553
      %v1555 = vpop.f32.mrf.mxu0
      %1556 = vdwg.mxu0
      %v1559 = vrot.slane %v600, 1
      %v1560 = vrot.slane %v560, 1
      %v1561 = vsel %vm627, %v1559, %v1560
      %v1562 = vrot.slane %v610, 1
      %v1563 = vsel %vm627, %v1560, %v1562
      %v1566 = vrot.slane %v600, 2
      %v1567 = vrot.slane %v560, 2
      %v1568 = vsel %vm684, %v1566, %v1567
      %v1569 = vrot.slane %v610, 2
      %v1570 = vsel %vm684, %v1567, %v1569
      %v1573 = vpack.c.bf16 %v560, %v600
      %v1574 = vpack.c.bf16 %v1563, %v1561
      %v1575 = vpack.c.bf16 %v1570, %v1568
      %s1576 = scalar_lea.vmem %s2, 384
      %v1577 = vld [vmem:[%s1576] sm:$0xf]
      %v1578 = vld [vmem:[%s1576 + $0x4] sm:$0xf]
      %v1579 = vld [vmem:[%s1576 + $0x8] sm:$0xf]
      %v1580 = vld [vmem:[%s1576 + $0xc] sm:$0xf]
      %v1581 = vld [vmem:[%s1576 + $0x10] sm:$0xf]
      %v1582 = vld [vmem:[%s1576 + $0x14] sm:$0xf]
      %v1583 = vld [vmem:[%s1576 + $0x18] sm:$0xf]
      %v1584 = vld [vmem:[%s1576 + $0x1c] sm:$0xf]
      %v1585 = vld [vmem:[%s1576 + $0x20] sm:$0xf]
      %v1586 = vld [vmem:[%s1576 + $0x24] sm:$0xf]
      %v1587 = vld [vmem:[%s1576 + $0x28] sm:$0xf]
      %v1588 = vld [vmem:[%s1576 + $0x2c] sm:$0xf]
      %v1589 = vld [vmem:[%s1576 + $0x30] sm:$0xf]
      %v1590 = vld [vmem:[%s1576 + $0x34] sm:$0xf]
      %v1591 = vld [vmem:[%s1576 + $0x38] sm:$0xf]
      %v1592 = vld [vmem:[%s1576 + $0x3c] sm:$0xf]
      %v1593 = vld [vmem:[%s1576 + $0x40] sm:$0xf]
      %v1594 = vld [vmem:[%s1576 + $0x44] sm:$0xf]
      %v1595 = vld [vmem:[%s1576 + $0x48] sm:$0xf]
      %v1596 = vld [vmem:[%s1576 + $0x4c] sm:$0xf]
      %v1597 = vld [vmem:[%s1576 + $0x50] sm:$0xf]
      %v1598 = vld [vmem:[%s1576 + $0x54] sm:$0xf]
      %v1599 = vld [vmem:[%s1576 + $0x58] sm:$0xf]
      %v1600 = vld [vmem:[%s1576 + $0x5c] sm:$0xf]
      %v1601 = vld [vmem:[%s1576 + $0x60] sm:$0xf]
      %v1602 = vld [vmem:[%s1576 + $0x64] sm:$0xf]
      %v1603 = vld [vmem:[%s1576 + $0x68] sm:$0xf]
      %v1604 = vld [vmem:[%s1576 + $0x6c] sm:$0xf]
      %v1605 = vld [vmem:[%s1576 + $0x70] sm:$0xf]
      %v1606 = vld [vmem:[%s1576 + $0x74] sm:$0xf]
      %v1607 = vld [vmem:[%s1576 + $0x78] sm:$0xf]
      %v1608 = vld [vmem:[%s1576 + $0x7c] sm:$0xf]
      %v1609 = vld [vmem:[%s1576 + $0x80] sm:$0xf]
      %v1610 = vld [vmem:[%s1576 + $0x84] sm:$0xf]
      %v1611 = vld [vmem:[%s1576 + $0x88] sm:$0xf]
      %v1612 = vld [vmem:[%s1576 + $0x8c] sm:$0xf]
      %v1613 = vld [vmem:[%s1576 + $0x90] sm:$0xf]
      %v1614 = vld [vmem:[%s1576 + $0x94] sm:$0xf]
      %v1615 = vld [vmem:[%s1576 + $0x98] sm:$0xf]
      %v1616 = vld [vmem:[%s1576 + $0x9c] sm:$0xf]
      %v1617 = vld [vmem:[%s1576 + $0xa0] sm:$0xf]
      %v1618 = vld [vmem:[%s1576 + $0xa4] sm:$0xf]
      %v1619 = vld [vmem:[%s1576 + $0xa8] sm:$0xf]
      %v1620 = vld [vmem:[%s1576 + $0xac] sm:$0xf]
      %v1621 = vld [vmem:[%s1576 + $0xb0] sm:$0xf]
      %v1622 = vld [vmem:[%s1576 + $0xb4] sm:$0xf]
      %v1623 = vld [vmem:[%s1576 + $0xb8] sm:$0xf]
      %v1624 = vld [vmem:[%s1576 + $0xbc] sm:$0xf]
      %v1673 = vunpack.c.l.b16 %v1577
      %v1674 = vunpack.c.l.b16 %v1578
      %v1675 = vunpack.c.l.b16 %v1579
      %v1676 = vunpack.c.l.b16 %v1580
      %v1677 = vunpack.c.l.b16 %v1581
      %v1678 = vunpack.c.l.b16 %v1582
      %v1679 = vunpack.c.l.b16 %v1583
      %v1680 = vunpack.c.l.b16 %v1584
      %v1681 = vunpack.c.l.b16 %v1585
      %v1682 = vunpack.c.l.b16 %v1586
      %v1683 = vunpack.c.l.b16 %v1587
      %v1684 = vunpack.c.l.b16 %v1588
      %v1685 = vunpack.c.l.b16 %v1589
      %v1686 = vunpack.c.l.b16 %v1590
      %v1687 = vunpack.c.l.b16 %v1591
      %v1688 = vunpack.c.l.b16 %v1592
      %v1689 = vunpack.c.l.b16 %v1593
      %v1690 = vunpack.c.l.b16 %v1594
      %v1691 = vunpack.c.l.b16 %v1595
      %v1692 = vunpack.c.l.b16 %v1596
      %v1693 = vunpack.c.l.b16 %v1597
      %v1694 = vunpack.c.l.b16 %v1598
      %v1695 = vunpack.c.l.b16 %v1599
      %v1696 = vunpack.c.l.b16 %v1600
      %v1697 = vunpack.c.l.b16 %v1601
      %v1698 = vunpack.c.l.b16 %v1602
      %v1699 = vunpack.c.l.b16 %v1603
      %v1700 = vunpack.c.l.b16 %v1604
      %v1701 = vunpack.c.l.b16 %v1605
      %v1702 = vunpack.c.l.b16 %v1606
      %v1703 = vunpack.c.l.b16 %v1607
      %v1704 = vunpack.c.l.b16 %v1608
      %v1705 = vunpack.c.l.b16 %v1609
      %v1706 = vunpack.c.l.b16 %v1610
      %v1707 = vunpack.c.l.b16 %v1611
      %v1708 = vunpack.c.l.b16 %v1612
      %v1709 = vunpack.c.l.b16 %v1613
      %v1710 = vunpack.c.l.b16 %v1614
      %v1711 = vunpack.c.l.b16 %v1615
      %v1712 = vunpack.c.l.b16 %v1616
      %v1713 = vunpack.c.l.b16 %v1617
      %v1714 = vunpack.c.l.b16 %v1618
      %v1715 = vunpack.c.l.b16 %v1619
      %v1716 = vunpack.c.l.b16 %v1620
      %v1717 = vunpack.c.l.b16 %v1621
      %v1718 = vunpack.c.l.b16 %v1622
      %v1719 = vunpack.c.l.b16 %v1623
      %v1720 = vunpack.c.l.b16 %v1624
      %v1721 = vpack.c.b16 %v1674, %v1673
      %v1722 = vpack.c.b16 %v1676, %v1675
      %v1723 = vpack.c.b16 %v1678, %v1677
      %v1724 = vpack.c.b16 %v1680, %v1679
      %v1725 = vpack.c.b16 %v1682, %v1681
      %v1726 = vpack.c.b16 %v1684, %v1683
      %v1727 = vpack.c.b16 %v1686, %v1685
      %v1728 = vpack.c.b16 %v1688, %v1687
      %v1729 = vpack.c.b16 %v1690, %v1689
      %v1730 = vpack.c.b16 %v1692, %v1691
      %v1731 = vpack.c.b16 %v1694, %v1693
      %v1732 = vpack.c.b16 %v1696, %v1695
      %v1733 = vpack.c.b16 %v1698, %v1697
      %v1734 = vpack.c.b16 %v1700, %v1699
      %v1735 = vpack.c.b16 %v1702, %v1701
      %v1736 = vpack.c.b16 %v1704, %v1703
      %v1737 = vpack.c.b16 %v1706, %v1705
      %v1738 = vpack.c.b16 %v1708, %v1707
      %v1739 = vpack.c.b16 %v1710, %v1709
      %v1740 = vpack.c.b16 %v1712, %v1711
      %v1741 = vpack.c.b16 %v1714, %v1713
      %v1742 = vpack.c.b16 %v1716, %v1715
      %v1743 = vpack.c.b16 %v1718, %v1717
      %v1744 = vpack.c.b16 %v1720, %v1719
      %1769 = vmatprep.subr.bf16.mxu0 0
      %1770 = vmatpush1.bf16.msra.mxu0 %v1728
      %1771 = vmatprep.subr.bf16.mxu0 0
      %1772 = vmatpush1.bf16.msra.mxu0 %v1727
      %1773 = vmatprep.subr.bf16.mxu0 0
      %1774 = vmatpush1.bf16.msra.mxu0 %v1726
      %1775 = vmatprep.subr.bf16.mxu0 0
      %1776 = vmatpush1.bf16.msra.mxu0 %v1725
      %1777 = vmatprep.subr.bf16.mxu0 0
      %1778 = vmatpush1.bf16.msra.mxu0 %v1724
      %1779 = vmatprep.subr.bf16.mxu0 0
      %1780 = vmatpush1.bf16.msra.mxu0 %v1723
      %1781 = vmatprep.subr.bf16.mxu0 0
      %1782 = vmatpush1.bf16.msra.mxu0 %v1722
      %1783 = vmatprep.subr.bf16.mxu0 0
      %1784 = vmatpush1.bf16.msra.mxu0 %v1721
      %1785 = vmatprep.subr.bf16.mxu0 0
      %1786 = vmatpush2.bf16.msra.mxu0 %v1736
      %1787 = vmatprep.subr.bf16.mxu0 0
      %1788 = vmatpush2.bf16.msra.mxu0 %v1735
      %1789 = vmatprep.subr.bf16.mxu0 0
      %1790 = vmatpush2.bf16.msra.mxu0 %v1734
      %1791 = vmatprep.subr.bf16.mxu0 0
      %1792 = vmatpush2.bf16.msra.mxu0 %v1733
      %1793 = vmatprep.subr.bf16.mxu0 0
      %1794 = vmatpush2.bf16.msra.mxu0 %v1732
      %1795 = vmatprep.subr.bf16.mxu0 0
      %1796 = vmatpush2.bf16.msra.mxu0 %v1731
      %1797 = vmatprep.subr.bf16.mxu0 0
      %1798 = vmatpush2.bf16.msra.mxu0 %v1730
      %1799 = vmatprep.subr.bf16.mxu0 0
      %1800 = vmatpush2.bf16.msra.mxu0 %v1729
      %1801 = vmatprep.mubr.bf16.mxu0 %v748
      %1802 = vmatmul.mubr.bf16.gmra.mxu0 %v747
      %v1803 = vpop.f32.mrf.mxu0
      %v1804 = vadd.f32 0.0, %v1803
      %v1805 = vpop.f32.mrf.mxu0
      %v1806 = vpop.f32.mrf.mxu0
      %v1807 = vadd.f32 0.0, %v1806
      %v1808 = vpop.f32.mrf.mxu0
      %1809 = vmatprep.mubr.bf16.mxu0 %v751
      %1810 = vmatmul.mubr.bf16.gmra.mxu0 %v750
      %v1811 = vpop.f32.mrf.mxu0
      %v1812 = vadd.f32 0.0, %v1811
      %v1813 = vpop.f32.mrf.mxu0
      %v1814 = vpop.f32.mrf.mxu0
      %v1815 = vadd.f32 0.0, %v1814
      %v1816 = vpop.f32.mrf.mxu0
      %1817 = vmatprep.mubr.bf16.mxu0 %v754
      %1818 = vmatmul.mubr.bf16.gmra.mxu0 %v753
      %v1819 = vpop.f32.mrf.mxu0
      %v1820 = vadd.f32 0.0, %v1819
      %v1821 = vpop.f32.mrf.mxu0
      %v1822 = vpop.f32.mrf.mxu0
      %v1823 = vadd.f32 0.0, %v1822
      %v1824 = vpop.f32.mrf.mxu0
      %1825 = vmatprep.mubr.bf16.mxu0 %v757
      %1826 = vmatmul.mubr.bf16.gmra.mxu0 %v756
      %v1827 = vpop.f32.mrf.mxu0
      %v1828 = vadd.f32 0.0, %v1827
      %v1829 = vpop.f32.mrf.mxu0
      %v1830 = vpop.f32.mrf.mxu0
      %v1831 = vadd.f32 0.0, %v1830
      %v1832 = vpop.f32.mrf.mxu0
      %1833 = vmatprep.mubr.bf16.mxu0 %v760
      %1834 = vmatmul.mubr.bf16.gmra.mxu0 %v759
      %v1835 = vpop.f32.mrf.mxu0
      %v1836 = vadd.f32 0.0, %v1835
      %v1837 = vpop.f32.mrf.mxu0
      %v1838 = vpop.f32.mrf.mxu0
      %v1839 = vadd.f32 0.0, %v1838
      %v1840 = vpop.f32.mrf.mxu0
      %1841 = vmatprep.mubr.bf16.mxu0 %v763
      %1842 = vmatmul.mubr.bf16.gmra.mxu0 %v762
      %v1843 = vpop.f32.mrf.mxu0
      %v1844 = vadd.f32 0.0, %v1843
      %v1845 = vpop.f32.mrf.mxu0
      %v1846 = vpop.f32.mrf.mxu0
      %v1847 = vadd.f32 0.0, %v1846
      %v1848 = vpop.f32.mrf.mxu0
      %1849 = vmatprep.mubr.bf16.mxu0 %v830
      %1850 = vmatmul.mubr.bf16.gmra.mxu0 %v829
      %v1851 = vpop.f32.mrf.mxu0
      %v1852 = vadd.f32 0.0, %v1851
      %v1853 = vpop.f32.mrf.mxu0
      %v1854 = vpop.f32.mrf.mxu0
      %v1855 = vadd.f32 0.0, %v1854
      %v1856 = vpop.f32.mrf.mxu0
      %1857 = vmatprep.mubr.bf16.mxu0 %v1574
      %1858 = vmatmul.mubr.bf16.gmra.mxu0 %v1573
      %v1859 = vpop.f32.mrf.mxu0
      %v1860 = vadd.f32 0.0, %v1859
      %v1861 = vpop.f32.mrf.mxu0
      %v1862 = vpop.f32.mrf.mxu0
      %v1863 = vadd.f32 0.0, %v1862
      %v1864 = vpop.f32.mrf.mxu0
      %1865 = vdwg.mxu0
      %1866 = vmatprep.subr.bf16.mxu0 0
      %1867 = vmatpush1.bf16.msra.mxu0 %v1744
      %1868 = vmatprep.subr.bf16.mxu0 0
      %1869 = vmatpush1.bf16.msra.mxu0 %v1743
      %1870 = vmatprep.subr.bf16.mxu0 0
      %1871 = vmatpush1.bf16.msra.mxu0 %v1742
      %1872 = vmatprep.subr.bf16.mxu0 0
      %1873 = vmatpush1.bf16.msra.mxu0 %v1741
      %1874 = vmatprep.subr.bf16.mxu0 0
      %1875 = vmatpush1.bf16.msra.mxu0 %v1740
      %1876 = vmatprep.subr.bf16.mxu0 0
      %1877 = vmatpush1.bf16.msra.mxu0 %v1739
      %1878 = vmatprep.subr.bf16.mxu0 0
      %1879 = vmatpush1.bf16.msra.mxu0 %v1738
      %1880 = vmatprep.subr.bf16.mxu0 0
      %1881 = vmatpush1.bf16.msra.mxu0 %v1737
      %1882 = vmatprep.subr.bf16.mxu0 0
      %1883 = vmatpush2.bf16.msra.mxu0 0
      %1884 = vmatprep.subr.bf16.mxu0 0
      %1885 = vmatpush2.bf16.msra.mxu0 0
      %1886 = vmatprep.subr.bf16.mxu0 0
      %1887 = vmatpush2.bf16.msra.mxu0 0
      %1888 = vmatprep.subr.bf16.mxu0 0
      %1889 = vmatpush2.bf16.msra.mxu0 0
      %1890 = vmatprep.subr.bf16.mxu0 0
      %1891 = vmatpush2.bf16.msra.mxu0 0
      %1892 = vmatprep.subr.bf16.mxu0 0
      %1893 = vmatpush2.bf16.msra.mxu0 0
      %1894 = vmatprep.subr.bf16.mxu0 0
      %1895 = vmatpush2.bf16.msra.mxu0 0
      %1896 = vmatprep.subr.bf16.mxu0 0
      %1897 = vmatpush2.bf16.msra.mxu0 0
      %1898 = vmatprep.mubr.bf16.mxu0 0
      %1899 = vmatmul.mubr.bf16.gmra.mxu0 %v749
      %v1900 = vpop.f32.mrf.mxu0
      %v1901 = vadd.f32 %v1804, %v1900
      %v1902 = vpop.f32.mrf.mxu0
      %v1903 = vpop.f32.mrf.mxu0
      %v1904 = vadd.f32 %v1807, %v1903
      %v1905 = vpop.f32.mrf.mxu0
      %1906 = vmatprep.mubr.bf16.mxu0 0
      %1907 = vmatmul.mubr.bf16.gmra.mxu0 %v752
      %v1908 = vpop.f32.mrf.mxu0
      %v1909 = vadd.f32 %v1812, %v1908
      %v1910 = vpop.f32.mrf.mxu0
      %v1911 = vpop.f32.mrf.mxu0
      %v1912 = vadd.f32 %v1815, %v1911
      %v1913 = vpop.f32.mrf.mxu0
      %1914 = vmatprep.mubr.bf16.mxu0 0
      %1915 = vmatmul.mubr.bf16.gmra.mxu0 %v755
      %v1916 = vpop.f32.mrf.mxu0
      %v1917 = vadd.f32 %v1820, %v1916
      %v1918 = vpop.f32.mrf.mxu0
      %v1919 = vpop.f32.mrf.mxu0
      %v1920 = vadd.f32 %v1823, %v1919
      %v1921 = vpop.f32.mrf.mxu0
      %1922 = vmatprep.mubr.bf16.mxu0 0
      %1923 = vmatmul.mubr.bf16.gmra.mxu0 %v758
      %v1924 = vpop.f32.mrf.mxu0
      %v1925 = vadd.f32 %v1828, %v1924
      %v1926 = vpop.f32.mrf.mxu0
      %v1927 = vpop.f32.mrf.mxu0
      %v1928 = vadd.f32 %v1831, %v1927
      %v1929 = vpop.f32.mrf.mxu0
      %1930 = vmatprep.mubr.bf16.mxu0 0
      %1931 = vmatmul.mubr.bf16.gmra.mxu0 %v761
      %v1932 = vpop.f32.mrf.mxu0
      %v1933 = vadd.f32 %v1836, %v1932
      %v1934 = vpop.f32.mrf.mxu0
      %v1935 = vpop.f32.mrf.mxu0
      %v1936 = vadd.f32 %v1839, %v1935
      %v1937 = vpop.f32.mrf.mxu0
      %1938 = vmatprep.mubr.bf16.mxu0 0
      %1939 = vmatmul.mubr.bf16.gmra.mxu0 %v764
      %v1940 = vpop.f32.mrf.mxu0
      %v1941 = vadd.f32 %v1844, %v1940
      %v1942 = vpop.f32.mrf.mxu0
      %v1943 = vpop.f32.mrf.mxu0
      %v1944 = vadd.f32 %v1847, %v1943
      %v1945 = vpop.f32.mrf.mxu0
      %1946 = vmatprep.mubr.bf16.mxu0 0
      %1947 = vmatmul.mubr.bf16.gmra.mxu0 %v831
      %v1948 = vpop.f32.mrf.mxu0
      %v1949 = vadd.f32 %v1852, %v1948
      %v1950 = vpop.f32.mrf.mxu0
      %v1951 = vpop.f32.mrf.mxu0
      %v1952 = vadd.f32 %v1855, %v1951
      %v1953 = vpop.f32.mrf.mxu0
      %1954 = vmatprep.mubr.bf16.mxu0 0
      %1955 = vmatmul.mubr.bf16.gmra.mxu0 %v1575
      %v1956 = vpop.f32.mrf.mxu0
      %v1957 = vadd.f32 %v1860, %v1956
      %v1958 = vpop.f32.mrf.mxu0
      %v1959 = vpop.f32.mrf.mxu0
      %v1960 = vadd.f32 %v1863, %v1959
      %v1961 = vpop.f32.mrf.mxu0
      %1962 = vdwg.mxu0
      %v1963 = vadd.f32 %v1495, %v1901
      %v1964 = vadd.f32 %v1498, %v1904
      %v1965 = vadd.f32 %v1503, %v1909
      %v1966 = vadd.f32 %v1506, %v1912
      %v1967 = vadd.f32 %v1511, %v1917
      %v1968 = vadd.f32 %v1514, %v1920
      %v1969 = vadd.f32 %v1519, %v1925
      %v1970 = vadd.f32 %v1522, %v1928
      %v1971 = vadd.f32 %v1527, %v1933
      %v1972 = vadd.f32 %v1530, %v1936
      %v1973 = vadd.f32 %v1535, %v1941
      %v1974 = vadd.f32 %v1538, %v1944
      %v1975 = vadd.f32 %v1543, %v1949
      %v1976 = vadd.f32 %v1546, %v1952
      %v1977 = vadd.f32 %v1551, %v1957
      %v1978 = vadd.f32 %v1554, %v1960
      %v1979 = vld [vmem:[%s3] sm:$0x1]
      %v1981 = vlaneseq
      %v1982 = vshrl.u32 %v1981, 7
      %v1983 = vsub.s32 0, %v1982
      %v1984 = vrot.slane %v1979, %v1983
      %v1986 = vadd.f32 %v1963, %v1984
      %v1987 = vadd.f32 %v1964, %v1984
      %v1988 = vadd.f32 %v1965, %v1984
      %v1989 = vadd.f32 %v1966, %v1984
      %v1990 = vadd.f32 %v1967, %v1984
      %v1991 = vadd.f32 %v1968, %v1984
      %v1992 = vadd.f32 %v1969, %v1984
      %v1993 = vadd.f32 %v1970, %v1984
      %v1994 = vadd.f32 %v1971, %v1984
      %v1995 = vadd.f32 %v1972, %v1984
      %v1996 = vadd.f32 %v1973, %v1984
      %v1997 = vadd.f32 %v1974, %v1984
      %v1998 = vadd.f32 %v1975, %v1984
      %v1999 = vadd.f32 %v1976, %v1984
      %v2000 = vadd.f32 %v1977, %v1984
      %v2001 = vadd.f32 %v1978, %v1984
      %v2002 = vpack.c.bf16 %v1987, %v1986
      %v2003 = vpack.c.bf16 %v1989, %v1988
      %v2004 = vpack.c.bf16 %v1991, %v1990
      %v2005 = vpack.c.bf16 %v1993, %v1992
      %v2006 = vpack.c.bf16 %v1995, %v1994
      %v2007 = vpack.c.bf16 %v1997, %v1996
      %v2008 = vpack.c.bf16 %v1999, %v1998
      %v2009 = vpack.c.bf16 %v2001, %v2000
      %v2018 = vunpack.c.l.b16 %v2002
      %v2019 = vunpack.c.h.b16 %v2002
      %v2020 = vunpack.c.l.b16 %v2003
      %v2021 = vunpack.c.h.b16 %v2003
      %v2022 = vunpack.c.l.b16 %v2004
      %v2023 = vunpack.c.h.b16 %v2004
      %v2024 = vunpack.c.l.b16 %v2005
      %v2025 = vunpack.c.h.b16 %v2005
      %v2026 = vunpack.c.l.b16 %v2006
      %v2027 = vunpack.c.h.b16 %v2006
      %v2028 = vunpack.c.l.b16 %v2007
      %v2029 = vunpack.c.h.b16 %v2007
      %v2030 = vunpack.c.l.b16 %v2008
      %v2031 = vunpack.c.h.b16 %v2008
      %v2032 = vunpack.c.l.b16 %v2009
      %v2033 = vunpack.c.h.b16 %v2009
      %v2034 = vpack.c.b16 %v2018, %v2018
      %v2035 = vpack.c.b16 %v2019, %v2019
      %v2036 = vpack.c.b16 %v2020, %v2020
      %v2037 = vpack.c.b16 %v2021, %v2021
      %v2038 = vpack.c.b16 %v2022, %v2022
      %v2039 = vpack.c.b16 %v2023, %v2023
      %v2040 = vpack.c.b16 %v2024, %v2024
      %v2041 = vpack.c.b16 %v2025, %v2025
      %v2042 = vpack.c.b16 %v2026, %v2026
      %v2043 = vpack.c.b16 %v2027, %v2027
      %v2044 = vpack.c.b16 %v2028, %v2028
      %v2045 = vpack.c.b16 %v2029, %v2029
      %v2046 = vpack.c.b16 %v2030, %v2030
      %v2047 = vpack.c.b16 %v2031, %v2031
      %v2048 = vpack.c.b16 %v2032, %v2032
      %v2049 = vpack.c.b16 %v2033, %v2033
      %2066 = vst [vmem:[%s373] sm:$0xf] %v2034
      %2067 = vst [vmem:[%s373 + $0x4] sm:$0xf] %v2035
      %2068 = vst [vmem:[%s373 + $0x8] sm:$0xf] %v2036
      %2069 = vst [vmem:[%s373 + $0xc] sm:$0xf] %v2037
      %2070 = vst [vmem:[%s373 + $0x10] sm:$0xf] %v2038
      %2071 = vst [vmem:[%s373 + $0x14] sm:$0xf] %v2039
      %2072 = vst [vmem:[%s373 + $0x18] sm:$0xf] %v2040
      %2073 = vst [vmem:[%s373 + $0x1c] sm:$0xf] %v2041
      %2074 = vst [vmem:[%s373 + $0x20] sm:$0xf] %v2042
      %2075 = vst [vmem:[%s373 + $0x24] sm:$0xf] %v2043
      %2076 = vst [vmem:[%s373 + $0x28] sm:$0xf] %v2044
      %2077 = vst [vmem:[%s373 + $0x2c] sm:$0xf] %v2045
      %2078 = vst [vmem:[%s373 + $0x30] sm:$0xf] %v2046
      %2079 = vst [vmem:[%s373 + $0x34] sm:$0xf] %v2047
      %2080 = vst [vmem:[%s373 + $0x38] sm:$0xf] %v2048
      %2081 = vst [vmem:[%s373 + $0x3c] sm:$0xf] %v2049
      %v2082 = vadd.f32 %v1986, %v1987
      %v2083 = vadd.f32 %v2082, %v1988
      %v2084 = vadd.f32 %v2083, %v1989
      %v2085 = vadd.f32 %v2084, %v1990
      %v2086 = vadd.f32 %v2085, %v1991
      %v2087 = vadd.f32 %v2086, %v1992
      %v2088 = vadd.f32 %v2087, %v1993
      %v2089 = vadd.f32 %v2088, %v1994
      %v2090 = vadd.f32 %v2089, %v1995
      %v2091 = vadd.f32 %v2090, %v1996
      %v2092 = vadd.f32 %v2091, %v1997
      %v2093 = vadd.f32 %v2092, %v1998
      %v2094 = vadd.f32 %v2093, %v1999
      %v2095 = vadd.f32 %v2094, %v2000
      %v2096 = vadd.f32 %v2095, %v2001
      %v2097 = vrot.slane %v2096, 4
      %v2098 = vadd.f32 %v2096, %v2097
      %v2099 = vrot.slane %v2098, 2
      %v2100 = vadd.f32 %v2098, %v2099
      %v2101 = vrot.slane %v2100, 1
      %v2102 = vadd.f32 %v2100, %v2101
      %v2103 = vmul.f32 %v1986, %v1986
      %v2104 = vmul.f32 %v1987, %v1987
      %v2105 = vmul.f32 %v1988, %v1988
      %v2106 = vmul.f32 %v1989, %v1989
      %v2107 = vmul.f32 %v1990, %v1990
      %v2108 = vmul.f32 %v1991, %v1991
      %v2109 = vmul.f32 %v1992, %v1992
      %v2110 = vmul.f32 %v1993, %v1993
      %v2111 = vmul.f32 %v1994, %v1994
      %v2112 = vmul.f32 %v1995, %v1995
      %v2113 = vmul.f32 %v1996, %v1996
      %v2114 = vmul.f32 %v1997, %v1997
      %v2115 = vmul.f32 %v1998, %v1998
      %v2116 = vmul.f32 %v1999, %v1999
      %v2117 = vmul.f32 %v2000, %v2000
      %v2118 = vmul.f32 %v2001, %v2001
      %v2119 = vadd.f32 %v2103, %v2104
      %v2120 = vadd.f32 %v2119, %v2105
      %v2121 = vadd.f32 %v2120, %v2106
      %v2122 = vadd.f32 %v2121, %v2107
      %v2123 = vadd.f32 %v2122, %v2108
      %v2124 = vadd.f32 %v2123, %v2109
      %v2125 = vadd.f32 %v2124, %v2110
      %v2126 = vadd.f32 %v2125, %v2111
      %v2127 = vadd.f32 %v2126, %v2112
      %v2128 = vadd.f32 %v2127, %v2113
      %v2129 = vadd.f32 %v2128, %v2114
      %v2130 = vadd.f32 %v2129, %v2115
      %v2131 = vadd.f32 %v2130, %v2116
      %v2132 = vadd.f32 %v2131, %v2117
      %v2133 = vadd.f32 %v2132, %v2118
      %v2134 = vrot.slane %v2133, 4
      %v2135 = vadd.f32 %v2133, %v2134
      %v2136 = vrot.slane %v2135, 2
      %v2137 = vadd.f32 %v2135, %v2136
      %v2138 = vrot.slane %v2137, 1
      %v2139 = vadd.f32 %v2137, %v2138
      %v2140 = vsel %vm530, %v2102, %v2139
      %2141 = vst [vmem:[%s382] sm:$0x3] %v2140
      %s2142 = smul.u32 8, %s24
      %p2143 = scmp.lt.s32.totalorder %s23, 1
      %s2144 = scalar_select %p2143, %s23, 1
      %p2145 = scmp.lt.s32.totalorder %s2142, 15
      %s2146 = scalar_select %p2145, %s2142, 15
      %s2147 = smul.addr %s2146, 2
      %s2148 = smul.addr %s2144, 32
      %s2149 = sadd.s32 %s2147, %s2148
      %s2150 = smul.addr %s2149, 4
      %s2151 = scalar_lea.vmem %s6, %s2150
      %p2152 = scmp.lt.s32.totalorder %s23, 1
      %s2153 = scalar_select %p2152, %s23, 1
      %p2154 = scmp.lt.s32.totalorder %s24, 1
      %s2155 = scalar_select %p2154, %s24, 1
      %s2156 = smul.addr %s2153, 2
      %s2157 = sadd.s32 %s2155, %s2156
      %s2158 = smul.addr %s2157, 2
      %s2159 = scalar_lea.vmem %s7, %s2158
      // Predicated region
      $region45: #{conv_block_forward.4} parent=43 // pred_check
        %p2160 = pneg %p191
      $region46: #{conv_block_forward.4} parent=43 // pred_check_branch
        %2162 = sbr.rel (%p2160) target = $region48
      $region47: #{conv_block_forward.4} parent=43 // pred_region
        %s2163 = smul.u32 8, %s24
      $region48: #{conv_block_forward.4} parent=43 // pred_fallthru
        _
      // Predicated region
      $region49: #{conv_block_forward.4} parent=43 // pred_check
        %p2164 = pneg %p219
      $region50: #{conv_block_forward.4} parent=43 // pred_check_branch
        %2166 = sbr.rel (%p2164) target = $region52
      $region51: #{conv_block_forward.4} parent=43 // pred_region
        _
      $region52: #{conv_block_forward.4} parent=43 // pred_fallthru
        _
    $region44: #{conv_block_forward.4} parent=5 // pred_fallthru
      _
    %p2167 = scmp.le.s32.totalorder 2, %s14
    // Predicated region
    $region53: #{conv_block_forward.4} parent=5 // pred_check
      %p2168 = pneg %p2167
    $region54: #{conv_block_forward.4} parent=5 // pred_check_branch
      %2170 = sbr.rel (%p2168) target = $region56
    $region55: #{conv_block_forward.4} parent=5 // pred_region
      %s2171 = ssub.s32 %s14, 2
      // Predicated region
      $region57: #{conv_block_forward.4} parent=55 // pred_check
        %p2172 = pneg %p197
      $region58: #{conv_block_forward.4} parent=55 // pred_check_branch
        %2174 = sbr.rel (%p2172) target = $region60
      $region59: #{conv_block_forward.4} parent=55 // pred_region
        %s2175 = smul.u32 8, %s26
        %p2176 = scmp.lt.s32.totalorder %s25, 1
        %s2177 = scalar_select %p2176, %s25, 1
        %p2178 = scmp.lt.s32.totalorder %s2175, 15
        %s2179 = scalar_select %p2178, %s2175, 15
        %s2180 = smul.addr %s2179, 2
        %s2181 = smul.addr %s2177, 32
        %s2182 = sadd.s32 %s2180, %s2181
        %s2183 = smul.addr %s2182, 4
        %s2184 = scalar_lea.vmem %s6, %s2183
      $region60: #{conv_block_forward.4} parent=55 // pred_fallthru
        _
      // Predicated region
      $region61: #{conv_block_forward.4} parent=55 // pred_check
        %p2185 = pneg %p225
      $region62: #{conv_block_forward.4} parent=55 // pred_check_branch
        %2187 = sbr.rel (%p2185) target = $region64
      $region63: #{conv_block_forward.4} parent=55 // pred_region
        %p2188 = scmp.lt.s32.totalorder %s25, 1
        %s2189 = scalar_select %p2188, %s25, 1
        %p2190 = scmp.lt.s32.totalorder %s26, 1
        %s2191 = scalar_select %p2190, %s26, 1
        %s2192 = smul.addr %s2189, 2
        %s2193 = sadd.s32 %s2191, %s2192
        %s2194 = smul.addr %s2193, 2
        %s2195 = scalar_lea.vmem %s7, %s2194
      $region64: #{conv_block_forward.4} parent=55 // pred_fallthru
        _
    $region56: #{conv_block_forward.4} parent=5 // pred_fallthru
      _
  $region6: #{conv_block_forward.4} parent=0 // loop_footer
    %s18 = sadd.s32 1, %s14
  $region7: #{conv_block_forward.4} parent=0 // loop_footer_branch
    %13 = sbr.rel target = $region3
  $region8: #{conv_block_forward.4} parent=0 // loop_exit
    _

// kernel: conv_block_forward.3
$region0: #{conv_block_forward.3}
  #allocation0 [shape = 'u32[]', space=smem, size = 0x4, offset = 0x4, fixed_abs, tag = 'smem constant byte address 0x4 - core index']
  #allocation1 [shape = 'u32[144,128]{1,0:T(1,128)}', space=vmem, size = 0x12000, scoped, tag = 'internal scratch']
  %s0 = inlined_call_operand.vmem [shape: f32[2,16,16,128], index: 0, kind: input, shape index: {}]
  %s1 = inlined_call_operand.vmem [shape: f32[2,4,16,128], index: 1, kind: input, shape index: {}]
  %s2 = inlined_call_operand.vmem [shape: bf16[3,384,128], index: 2, kind: input, shape index: {}]
  %s3 = inlined_call_operand.vmem [shape: f32[1,128], index: 3, kind: input, shape index: {}]
  %s4 = inlined_call_operand.vmem [shape: f32[1,128], index: 4, kind: input, shape index: {}, may-alias: {4,5}]
  %s5 = inlined_call_operand.vmem [shape: f32[1,128], index: 5, kind: input, shape index: {}, may-alias: {4,5}]
  %s6 = inlined_call_operand.vmem [shape: bf16[2,16,16,128], index: 6, kind: output, shape index: {0}]
  %s7 = inlined_call_operand.vmem [shape: f32[2,2,2,128], index: 7, kind: output, shape index: {1}]
  %8 = xla_tuple %s6, %s7
  %s9 = sld [smem:[#allocation0]]
  $region65: #{conv_block_forward.3} parent=0
    _
  %s11 = ssub.s32 1, %s9
  %s12 = scalar_select 0, %s11, %s9
  loop: start=0, step=1, limit=6
  $region2: #{conv_block_forward.3} parent=0 // loop_pre_header
    _
  $region3: #{conv_block_forward.3} parent=0 // loop_header
    %s14 = sphi 0, %s18
    %p15 = scmp.ge.s32.totalorder %s14, 6
    %s21 = sphi 0, %s33
    %s22 = sphi 0, %s29
    %s23 = sphi 0, %s21
    %s24 = sphi 0, %s22
    %s25 = sphi 0, %s23
    %s26 = sphi 0, %s24
    %s38 = sphi 0, %s40
    %s41 = sphi 0, %s38
    %s42 = sphi 0, %s41
    %s58 = sphi 0, %s42
    %s66 = sphi 0, %s68
    %s69 = sphi 0, %s66
    %s70 = sphi 0, %s69
    %s86 = sphi 0, %s70
    %s90 = sphi 0, %s90
    %s92 = sphi 0, %s90
    %s93 = sphi 0, %s92
    %s107 = sphi 0, %s93
    %s111 = sphi 0, %s111
    %s113 = sphi 0, %s111
    %s114 = sphi 0, %s113
    %s128 = sphi 0, %s114
    %s132 = sphi 0, %s132
    %s134 = sphi 0, %s132
    %s135 = sphi 0, %s134
    %s149 = sphi 0, %s135
    %s153 = sphi 0, %s153
    %s155 = sphi 0, %s153
    %s156 = sphi 0, %s155
    %s170 = sphi 0, %s156
    %s178 = sphi 0, %s180
    %s181 = sphi 0, %s178
    %s182 = sphi 0, %s181
    %s198 = sphi 0, %s182
    %s206 = sphi 0, %s208
    %s209 = sphi 0, %s206
    %s210 = sphi 0, %s209
    %s226 = sphi 0, %s210
  $region4: #{conv_block_forward.3} parent=0 // loop_header_branch
    %17 = sbr.rel (%p15) target = $region8
  $region5: #{conv_block_forward.3} parent=0 // loop_body
    %s19 = ssub.s32 %s14, 1
    %s20 = ssub.s32 %s14, 2
    %s27 = sadd.s32 1, %s22
    %p28 = scmp.ge.s32.totalorder %s27, 2
    %s29 = scalar_select %p28, 0, %s27
    %s30 = sadd.s32 1, %s21
    %s31 = scalar_select %p28, %s30, %s21
    %p32 = scmp.ge.s32.totalorder %s31, 2
    %s33 = scalar_select %p32, 0, %s31
    %s34 = ssub.s32 %s21, %s33
    %s35 = ssub.s32 %s22, %s29
    %s36 = sor.u32 %s34, %s35
    %p37 = scmp.eq.s32.totalorder %s36, 0
    %s39 = sadd.s32 %s38, 1
    %s40 = scalar_select %p37, %s38, %s39
    %p43 = pneg %p37
    %p44 = scmp.eq.s32.totalorder %s14, 3
    %p45 = por %p43, %p44
    %p46 = scmp.ne.s32.totalorder %s38, %s41
    %p47 = scmp.eq.s32.totalorder %s14, 0
    %p48 = por %p46, %p47
    %p49 = scmp.ne.s32.totalorder %s38, %s41
    %p50 = scmp.eq.s32.totalorder %s19, 3
    %p51 = por %p49, %p50
    %p52 = scmp.ne.s32.totalorder %s41, %s42
    %p53 = scmp.eq.s32.totalorder %s19, 0
    %p54 = por %p52, %p53
    %p55 = scmp.ne.s32.totalorder %s41, %s42
    %p56 = scmp.eq.s32.totalorder %s20, 3
    %p57 = por %p55, %p56
    %p59 = scmp.ne.s32.totalorder %s42, %s58
    %p60 = scmp.eq.s32.totalorder %s20, 0
    %p61 = por %p59, %p60
    %s62 = ssub.s32 %s21, %s33
    %s63 = ssub.s32 %s22, %s29
    %s64 = sor.u32 %s62, %s63
    %p65 = scmp.eq.s32.totalorder %s64, 0
    %s67 = sadd.s32 %s66, 1
    %s68 = scalar_select %p65, %s66, %s67
    %p71 = pneg %p65
    %p72 = scmp.eq.s32.totalorder %s14, 3
    %p73 = por %p71, %p72
    %p74 = scmp.ne.s32.totalorder %s66, %s69
    %p75 = scmp.eq.s32.totalorder %s14, 0
    %p76 = por %p74, %p75
    %p77 = scmp.ne.s32.totalorder %s66, %s69
    %p78 = scmp.eq.s32.totalorder %s19, 3
    %p79 = por %p77, %p78
    %p80 = scmp.ne.s32.totalorder %s69, %s70
    %p81 = scmp.eq.s32.totalorder %s19, 0
    %p82 = por %p80, %p81
    %p83 = scmp.ne.s32.totalorder %s69, %s70
    %p84 = scmp.eq.s32.totalorder %s20, 3
    %p85 = por %p83, %p84
    %p87 = scmp.ne.s32.totalorder %s70, %s86
    %p88 = scmp.eq.s32.totalorder %s20, 0
    %p89 = por %p87, %p88
    %s91 = sadd.s32 %s90, 1
    %p94 = scmp.eq.s32.totalorder %s14, 3
    %p95 = scmp.ne.s32.totalorder %s90, %s92
    %p96 = scmp.eq.s32.totalorder %s14, 0
    %p97 = por %p95, %p96
    %p98 = scmp.ne.s32.totalorder %s90, %s92
    %p99 = scmp.eq.s32.totalorder %s19, 3
    %p100 = por %p98, %p99
    %p101 = scmp.ne.s32.totalorder %s92, %s93
    %p102 = scmp.eq.s32.totalorder %s19, 0
    %p103 = por %p101, %p102
    %p104 = scmp.ne.s32.totalorder %s92, %s93
    %p105 = scmp.eq.s32.totalorder %s20, 3
    %p106 = por %p104, %p105
    %p108 = scmp.ne.s32.totalorder %s93, %s107
    %p109 = scmp.eq.s32.totalorder %s20, 0
    %p110 = por %p108, %p109
    %s112 = sadd.s32 %s111, 1
    %p115 = scmp.eq.s32.totalorder %s14, 3
    %p116 = scmp.ne.s32.totalorder %s111, %s113
    %p117 = scmp.eq.s32.totalorder %s14, 0
    %p118 = por %p116, %p117
    %p119 = scmp.ne.s32.totalorder %s111, %s113
    %p120 = scmp.eq.s32.totalorder %s19, 3
    %p121 = por %p119, %p120
    %p122 = scmp.ne.s32.totalorder %s113, %s114
    %p123 = scmp.eq.s32.totalorder %s19, 0
    %p124 = por %p122, %p123
    %p125 = scmp.ne.s32.totalorder %s113, %s114
    %p126 = scmp.eq.s32.totalorder %s20, 3
    %p127 = por %p125, %p126
    %p129 = scmp.ne.s32.totalorder %s114, %s128
    %p130 = scmp.eq.s32.totalorder %s20, 0
    %p131 = por %p129, %p130
    %s133 = sadd.s32 %s132, 1
    %p136 = scmp.eq.s32.totalorder %s14, 3
    %p137 = scmp.ne.s32.totalorder %s132, %s134
    %p138 = scmp.eq.s32.totalorder %s14, 0
    %p139 = por %p137, %p138
    %p140 = scmp.ne.s32.totalorder %s132, %s134
    %p141 = scmp.eq.s32.totalorder %s19, 3
    %p142 = por %p140, %p141
    %p143 = scmp.ne.s32.totalorder %s134, %s135
    %p144 = scmp.eq.s32.totalorder %s19, 0
    %p145 = por %p143, %p144
    %p146 = scmp.ne.s32.totalorder %s134, %s135
    %p147 = scmp.eq.s32.totalorder %s20, 3
    %p148 = por %p146, %p147
    %p150 = scmp.ne.s32.totalorder %s135, %s149
    %p151 = scmp.eq.s32.totalorder %s20, 0
    %p152 = por %p150, %p151
    %s154 = sadd.s32 %s153, 1
    %p157 = scmp.eq.s32.totalorder %s14, 3
    %p158 = scmp.ne.s32.totalorder %s153, %s155
    %p159 = scmp.eq.s32.totalorder %s14, 0
    %p160 = por %p158, %p159
    %p161 = scmp.ne.s32.totalorder %s153, %s155
    %p162 = scmp.eq.s32.totalorder %s19, 3
    %p163 = por %p161, %p162
    %p164 = scmp.ne.s32.totalorder %s155, %s156
    %p165 = scmp.eq.s32.totalorder %s19, 0
    %p166 = por %p164, %p165
    %p167 = scmp.ne.s32.totalorder %s155, %s156
    %p168 = scmp.eq.s32.totalorder %s20, 3
    %p169 = por %p167, %p168
    %p171 = scmp.ne.s32.totalorder %s156, %s170
    %p172 = scmp.eq.s32.totalorder %s20, 0
    %p173 = por %p171, %p172
    %s174 = ssub.s32 %s21, %s33
    %s175 = ssub.s32 %s22, %s29
    %s176 = sor.u32 %s174, %s175
    %p177 = scmp.eq.s32.totalorder %s176, 0
    %s179 = sadd.s32 %s178, 1
    %s180 = scalar_select %p177, %s178, %s179
    %p183 = pneg %p177
    %p184 = scmp.eq.s32.totalorder %s14, 3
    %p185 = por %p183, %p184
    %p186 = scmp.ne.s32.totalorder %s178, %s181
    %p187 = scmp.eq.s32.totalorder %s14, 0
    %p188 = por %p186, %p187
    %p189 = scmp.ne.s32.totalorder %s178, %s181
    %p190 = scmp.eq.s32.totalorder %s19, 3
    %p191 = por %p189, %p190
    %p192 = scmp.ne.s32.totalorder %s181, %s182
    %p193 = scmp.eq.s32.totalorder %s19, 0
    %p194 = por %p192, %p193
    %p195 = scmp.ne.s32.totalorder %s181, %s182
    %p196 = scmp.eq.s32.totalorder %s20, 3
    %p197 = por %p195, %p196
    %p199 = scmp.ne.s32.totalorder %s182, %s198
    %p200 = scmp.eq.s32.totalorder %s20, 0
    %p201 = por %p199, %p200
    %s202 = ssub.s32 %s21, %s33
    %s203 = ssub.s32 %s22, %s29
    %s204 = sor.u32 %s202, %s203
    %p205 = scmp.eq.s32.totalorder %s204, 0
    %s207 = sadd.s32 %s206, 1
    %s208 = scalar_select %p205, %s206, %s207
    %p211 = pneg %p205
    %p212 = scmp.eq.s32.totalorder %s14, 3
    %p213 = por %p211, %p212
    %p214 = scmp.ne.s32.totalorder %s206, %s209
    %p215 = scmp.eq.s32.totalorder %s14, 0
    %p216 = por %p214, %p215
    %p217 = scmp.ne.s32.totalorder %s206, %s209
    %p218 = scmp.eq.s32.totalorder %s19, 3
    %p219 = por %p217, %p218
    %p220 = scmp.ne.s32.totalorder %s209, %s210
    %p221 = scmp.eq.s32.totalorder %s19, 0
    %p222 = por %p220, %p221
    %p223 = scmp.ne.s32.totalorder %s209, %s210
    %p224 = scmp.eq.s32.totalorder %s20, 3
    %p225 = por %p223, %p224
    %p227 = scmp.ne.s32.totalorder %s210, %s226
    %p228 = scmp.eq.s32.totalorder %s20, 0
    %p229 = por %p227, %p228
    %p230 = scmp.le.s32.totalorder 1, %s14
    %p231 = scmp.lt.s32.totalorder %s14, 5
    %p232 = pnand %p230, %p231
    %p233 = pneg %p232
    // Predicated region
    $region9: #{conv_block_forward.3} parent=5 // pred_check
      _
    $region10: #{conv_block_forward.3} parent=5 // pred_check_branch
      %235 = sbr.rel (%p232) target = $region12
    $region11: #{conv_block_forward.3} parent=5 // pred_region
      %s236 = ssub.s32 %s14, 1
      // Predicated region
      $region13: #{conv_block_forward.3} parent=11 // pred_check
        %p237 = pneg %p103
      $region14: #{conv_block_forward.3} parent=11 // pred_check_branch
        %239 = sbr.rel (%p237) target = $region16
      $region15: #{conv_block_forward.3} parent=11 // pred_region
        _
      $region16: #{conv_block_forward.3} parent=11 // pred_fallthru
        _
      // Predicated region
      $region17: #{conv_block_forward.3} parent=11 // pred_check
        %p240 = pneg %p124
      $region18: #{conv_block_forward.3} parent=11 // pred_check_branch
        %242 = sbr.rel (%p240) target = $region20
      $region19: #{conv_block_forward.3} parent=11 // pred_region
        _
      $region20: #{conv_block_forward.3} parent=11 // pred_fallthru
        _
      // Predicated region
      $region21: #{conv_block_forward.3} parent=11 // pred_check
        %p243 = pneg %p145
      $region22: #{conv_block_forward.3} parent=11 // pred_check_branch
        %245 = sbr.rel (%p243) target = $region24
      $region23: #{conv_block_forward.3} parent=11 // pred_region
        _
      $region24: #{conv_block_forward.3} parent=11 // pred_fallthru
        _
      // Predicated region
      $region25: #{conv_block_forward.3} parent=11 // pred_check
        %p246 = pneg %p166
      $region26: #{conv_block_forward.3} parent=11 // pred_check_branch
        %248 = sbr.rel (%p246) target = $region28
      $region27: #{conv_block_forward.3} parent=11 // pred_region
        _
      $region28: #{conv_block_forward.3} parent=11 // pred_fallthru
        _
    $region12: #{conv_block_forward.3} parent=5 // pred_fallthru
      _
    %p249 = scmp.lt.s32.totalorder %s14, 4
    // Predicated region
    $region29: #{conv_block_forward.3} parent=5 // pred_check
      %p250 = pneg %p249
    $region30: #{conv_block_forward.3} parent=5 // pred_check_branch
      %252 = sbr.rel (%p250) target = $region32
    $region31: #{conv_block_forward.3} parent=5 // pred_region
      // Predicated region
      $region33: #{conv_block_forward.3} parent=31 // pred_check
        %p253 = pneg %p48
      $region34: #{conv_block_forward.3} parent=31 // pred_check_branch
        %255 = sbr.rel (%p253) target = $region36
      $region35: #{conv_block_forward.3} parent=31 // pred_region
        %s256 = smul.u32 8, %s22
        %p257 = scmp.lt.s32.totalorder %s21, 1
        %s258 = scalar_select %p257, %s21, 1
        %p259 = scmp.lt.s32.totalorder %s256, 15
        %s260 = scalar_select %p259, %s256, 15
        %s261 = smul.addr %s260, 2
        %s262 = smul.addr %s258, 32
        %s263 = sadd.s32 %s261, %s262
        %s264 = smul.addr %s263, 8
        %s265 = scalar_lea.vmem %s0, %s264
        %s266 = smul.u32 8, %s22
      $region36: #{conv_block_forward.3} parent=31 // pred_fallthru
        _
      // Predicated region
      $region37: #{conv_block_forward.3} parent=31 // pred_check
        %p267 = pneg %p76
      $region38: #{conv_block_forward.3} parent=31 // pred_check_branch
        %269 = sbr.rel (%p267) target = $region40
      $region39: #{conv_block_forward.3} parent=31 // pred_region
        %s270 = smul.u32 2, %s22
        %p271 = scmp.lt.s32.totalorder %s21, 1
        %s272 = scalar_select %p271, %s21, 1
        %p273 = scmp.lt.s32.totalorder %s270, 3
        %s274 = scalar_select %p273, %s270, 3
        %s275 = smul.addr %s274, 2
        %s276 = smul.addr %s272, 8
        %s277 = sadd.s32 %s275, %s276
        %s278 = smul.addr %s277, 8
        %s279 = scalar_lea.vmem %s1, %s278
        %s280 = smul.u32 2, %s22
      $region40: #{conv_block_forward.3} parent=31 // pred_fallthru
        _
    $region32: #{conv_block_forward.3} parent=5 // pred_fallthru
      _
    %p281 = scmp.le.s32.totalorder 1, %s14
    %p282 = scmp.lt.s32.totalorder %s14, 5
    %p283 = pnand %p281, %p282
    %p284 = pneg %p283
    // Predicated region
    $region41: #{conv_block_forward.3} parent=5 // pred_check
      _
    $region42: #{conv_block_forward.3} parent=5 // pred_check_branch
      %286 = sbr.rel (%p283) target = $region44
    $region43: #{conv_block_forward.3} parent=5 // pred_region
      %s287 = ssub.s32 %s14, 1
      %s288 = smul.u32 8, %s24
      %p289 = scmp.lt.s32.totalorder %s23, 1
      %s290 = scalar_select %p289, %s23, 1
      %p291 = scmp.lt.s32.totalorder %s288, 15
      %s292 = scalar_select %p291, %s288, 15
      %s293 = smul.addr %s292, 2
      %s294 = smul.addr %s290, 32
      %s295 = sadd.s32 %s293, %s294
      %s296 = smul.addr %s295, 8
      %s297 = scalar_lea.vmem %s0, %s296
      %p298 = pneg %p54
      %p299 = pneg %p51
      %s300 = smul.u32 2, %s24
      %p301 = scmp.lt.s32.totalorder %s23, 1
      %s302 = scalar_select %p301, %s23, 1
      %p303 = scmp.lt.s32.totalorder %s300, 3
      %s304 = scalar_select %p303, %s300, 3
      %s305 = smul.addr %s304, 2
      %s306 = smul.addr %s302, 8
      %s307 = sadd.s32 %s305, %s306
      %s308 = smul.addr %s307, 8
      %s309 = scalar_lea.vmem %s1, %s308
      %p310 = pneg %p82
      %p311 = pneg %p79
      %p312 = pneg %p103
      %p313 = pneg %p100
      %p314 = pneg %p124
      %p315 = pneg %p121
      %p316 = pneg %p145
      %p317 = pneg %p142
      %p318 = pneg %p166
      %p319 = pneg %p163
      %p320 = pneg %p194
      %p321 = pneg %p191
      %s322 = smul.u32 8, %s24
      %p323 = scmp.lt.s32.totalorder %s23, 1
      %s324 = scalar_select %p323, %s23, 1
      %p325 = scmp.lt.s32.totalorder %s322, 15
      %s326 = scalar_select %p325, %s322, 15
      %s327 = smul.addr %s326, 2
      %s328 = smul.addr %s324, 32
      %s329 = sadd.s32 %s327, %s328
      %s330 = smul.addr %s329, 4
      %s331 = scalar_lea.vmem %s6, %s330
      %p332 = pneg %p222
      %p333 = pneg %p219
      %p334 = scmp.lt.s32.totalorder %s23, 1
      %s335 = scalar_select %p334, %s23, 1
      %p336 = scmp.lt.s32.totalorder %s24, 1
      %s337 = scalar_select %p336, %s24, 1
      %s338 = smul.addr %s335, 2
      %s339 = sadd.s32 %s337, %s338
      %s340 = smul.addr %s339, 2
      %s341 = scalar_lea.vmem %s7, %s340
      %s342 = smul.u32 8, %s24
      %p343 = scmp.lt.s32.totalorder %s23, 1
      %s344 = scalar_select %p343, %s23, 1
      %p345 = scmp.lt.s32.totalorder %s342, 15
      %s346 = scalar_select %p345, %s342, 15
      %s347 = smul.addr %s346, 2
      %s348 = smul.addr %s344, 32
      %s349 = sadd.s32 %s347, %s348
      %s350 = smul.addr %s349, 8
      %s351 = scalar_lea.vmem %s0, %s350
      %s352 = smul.u32 8, %s24
      %s353 = smul.u32 2, %s24
      %p354 = scmp.lt.s32.totalorder %s23, 1
      %s355 = scalar_select %p354, %s23, 1
      %p356 = scmp.lt.s32.totalorder %s353, 3
      %s357 = scalar_select %p356, %s353, 3
      %s358 = smul.addr %s357, 2
      %s359 = smul.addr %s355, 8
      %s360 = sadd.s32 %s358, %s359
      %s361 = smul.addr %s360, 8
      %s362 = scalar_lea.vmem %s1, %s361
      %s363 = smul.u32 2, %s24
      %s364 = smul.u32 8, %s24
      %p365 = scmp.lt.s32.totalorder %s23, 1
      %s366 = scalar_select %p365, %s23, 1
      %p367 = scmp.lt.s32.totalorder %s364, 15
      %s368 = scalar_select %p367, %s364, 15
      %s369 = smul.addr %s368, 2
      %s370 = smul.addr %s366, 32
      %s371 = sadd.s32 %s369, %s370
      %s372 = smul.addr %s371, 4
      %s373 = scalar_lea.vmem %s6, %s372
      %s374 = smul.u32 8, %s24
      %p375 = scmp.lt.s32.totalorder %s23, 1
      %s376 = scalar_select %p375, %s23, 1
      %p377 = scmp.lt.s32.totalorder %s24, 1
      %s378 = scalar_select %p377, %s24, 1
      %s379 = smul.addr %s376, 2
      %s380 = sadd.s32 %s378, %s379
      %s381 = smul.addr %s380, 2
      %s382 = scalar_lea.vmem %s7, %s381
      %v384 = vld [vmem:[%s351] sm:$0xff]
      %v385 = vld [vmem:[%s351 + $0x8] sm:$0xff]
      %v386 = vld [vmem:[%s351 + $0x10] sm:$0xff]
      %v387 = vld [vmem:[%s351 + $0x18] sm:$0xff]
      %v388 = vld [vmem:[%s351 + $0x20] sm:$0xff]
      %v389 = vld [vmem:[%s351 + $0x28] sm:$0xff]
      %v390 = vld [vmem:[%s351 + $0x30] sm:$0xff]
      %v391 = vld [vmem:[%s351 + $0x38] sm:$0xff]
      %v392 = vld [vmem:[%s351 + $0x40] sm:$0xff]
      %v393 = vld [vmem:[%s351 + $0x48] sm:$0xff]
      %v394 = vld [vmem:[%s351 + $0x50] sm:$0xff]
      %v395 = vld [vmem:[%s351 + $0x58] sm:$0xff]
      %v396 = vld [vmem:[%s351 + $0x60] sm:$0xff]
      %v397 = vld [vmem:[%s351 + $0x68] sm:$0xff]
      %v398 = vld [vmem:[%s351 + $0x70] sm:$0xff]
      %v399 = vld [vmem:[%s351 + $0x78] sm:$0xff]
      %v400 = vld [vmem:[%s362] sm:$0xff]
      %v401 = vld [vmem:[%s362 + $0x8] sm:$0xff]
      %v402 = vld [vmem:[%s362 + $0x10] sm:$0xff]
      %v403 = vld [vmem:[%s362 + $0x18] sm:$0xff]
      %vm424 = vcmask 1040384
      %v425 = vrot.slane %v400, 7
      %v426 = vrot.slane %v401, 7
      %v427 = vsel %vm424, %v425, %v426
      %v428 = vrot.slane %v384, 7
      %v429 = vrot.slane %v385, 7
      %v430 = vsel %vm424, %v428, %v429
      %v431 = vrot.slane %v386, 7
      %v432 = vrot.slane %v387, 7
      %v433 = vsel %vm424, %v431, %v432
      %v434 = vrot.slane %v388, 7
      %v435 = vrot.slane %v389, 7
      %v436 = vsel %vm424, %v434, %v435
      %v437 = vrot.slane %v390, 7
      %v438 = vrot.slane %v391, 7
      %v439 = vsel %vm424, %v437, %v438
      %v440 = vrot.slane %v392, 7
      %v441 = vrot.slane %v393, 7
      %v442 = vsel %vm424, %v440, %v441
      %v443 = vrot.slane %v394, 7
      %v444 = vrot.slane %v395, 7
      %v445 = vsel %vm424, %v443, %v444
      %v446 = vrot.slane %v396, 7
      %v447 = vrot.slane %v397, 7
      %v448 = vsel %vm424, %v446, %v447
      %v449 = vrot.slane %v398, 7
      %v450 = vrot.slane %v399, 7
      %v451 = vsel %vm424, %v449, %v450
      %v452 = vrot.slane %v402, 7
      %v453 = vrot.slane %v403, 7
      %v454 = vsel %vm424, %v452, %v453
      %v485 = vsel %vm424, 0.0, %v425
      %v486 = vsel %vm424, 0.0, %v428
      %v487 = vsel %vm424, 0.0, %v431
      %v488 = vsel %vm424, 0.0, %v434
      %v489 = vsel %vm424, 0.0, %v437
      %v490 = vsel %vm424, 0.0, %v440
      %v491 = vsel %vm424, 0.0, %v443
      %v492 = vsel %vm424, 0.0, %v446
      %v493 = vsel %vm424, 0.0, %v449
      %v494 = vsel %vm424, 0.0, %v452
      %v495 = vsel %vm424, %v426, 0.0
      %v496 = vsel %vm424, %v429, 0.0
      %v497 = vsel %vm424, %v432, 0.0
      %v498 = vsel %vm424, %v435, 0.0
      %v499 = vsel %vm424, %v438, 0.0
      %v500 = vsel %vm424, %v441, 0.0
      %v501 = vsel %vm424, %v444, 0.0
      %v502 = vsel %vm424, %v447, 0.0
      %v503 = vsel %vm424, %v450, 0.0
      %v504 = vsel %vm424, %v453, 0.0
      %vm521 = vcmask 1046528
      %v522 = vrot.slane %v485, 1
      %v523 = vrot.slane %v427, 1
      %v524 = vsel %vm521, %v522, %v523
      %v525 = vrot.slane %v495, 1
      %v526 = vsel %vm521, %v523, %v525
      %v527 = vrot.slane %v486, 1
      %v528 = vrot.slane %v430, 1
      %v529 = vsel %vm521, %v527, %v528
      %v530 = vrot.slane %v496, 1
      %v531 = vsel %vm521, %v528, %v530
      %v532 = vrot.slane %v487, 1
      %v533 = vrot.slane %v433, 1
      %v534 = vsel %vm521, %v532, %v533
      %v535 = vrot.slane %v497, 1
      %v536 = vsel %vm521, %v533, %v535
      %v537 = vrot.slane %v488, 1
      %v538 = vrot.slane %v436, 1
      %v539 = vsel %vm521, %v537, %v538
      %v540 = vrot.slane %v498, 1
      %v541 = vsel %vm521, %v538, %v540
      %v542 = vrot.slane %v489, 1
      %v543 = vrot.slane %v439, 1
      %v544 = vsel %vm521, %v542, %v543
      %v545 = vrot.slane %v499, 1
      %v546 = vsel %vm521, %v543, %v545
      %v547 = vrot.slane %v490, 1
      %v548 = vrot.slane %v442, 1
      %v549 = vsel %vm521, %v547, %v548
      %v550 = vrot.slane %v500, 1
      %v551 = vsel %vm521, %v548, %v550
      %v552 = vrot.slane %v491, 1
      %v553 = vrot.slane %v445, 1
      %v554 = vsel %vm521, %v552, %v553
      %v555 = vrot.slane %v501, 1
      %v556 = vsel %vm521, %v553, %v555
      %v557 = vrot.slane %v492, 1
      %v558 = vrot.slane %v448, 1
      %v559 = vsel %vm521, %v557, %v558
      %v560 = vrot.slane %v502, 1
      %v561 = vsel %vm521, %v558, %v560
      %vm578 = vcmask 1045504
      %v579 = vrot.slane %v485, 2
      %v580 = vrot.slane %v427, 2
      %v581 = vsel %vm578, %v579, %v580
      %v582 = vrot.slane %v495, 2
      %v583 = vsel %vm578, %v580, %v582
      %v584 = vrot.slane %v486, 2
      %v585 = vrot.slane %v430, 2
      %v586 = vsel %vm578, %v584, %v585
      %v587 = vrot.slane %v496, 2
      %v588 = vsel %vm578, %v585, %v587
      %v589 = vrot.slane %v487, 2
      %v590 = vrot.slane %v433, 2
      %v591 = vsel %vm578, %v589, %v590
      %v592 = vrot.slane %v497, 2
      %v593 = vsel %vm578, %v590, %v592
      %v594 = vrot.slane %v488, 2
      %v595 = vrot.slane %v436, 2
      %v596 = vsel %vm578, %v594, %v595
      %v597 = vrot.slane %v498, 2
      %v598 = vsel %vm578, %v595, %v597
      %v599 = vrot.slane %v489, 2
      %v600 = vrot.slane %v439, 2
      %v601 = vsel %vm578, %v599, %v600
      %v602 = vrot.slane %v499, 2
      %v603 = vsel %vm578, %v600, %v602
      %v604 = vrot.slane %v490, 2
      %v605 = vrot.slane %v442, 2
      %v606 = vsel %vm578, %v604, %v605
      %v607 = vrot.slane %v500, 2
      %v608 = vsel %vm578, %v605, %v607
      %v609 = vrot.slane %v491, 2
      %v610 = vrot.slane %v445, 2
      %v611 = vsel %vm578, %v609, %v610
      %v612 = vrot.slane %v501, 2
      %v613 = vsel %vm578, %v610, %v612
      %v614 = vrot.slane %v492, 2
      %v615 = vrot.slane %v448, 2
      %v616 = vsel %vm578, %v614, %v615
      %v617 = vrot.slane %v502, 2
      %v618 = vsel %vm578, %v615, %v617
      %v635 = vpack.c.bf16 %v427, %v485
      %v636 = vpack.c.bf16 %v526, %v524
      %v637 = vpack.c.bf16 %v583, %v581
      %v638 = vpack.c.bf16 %v430, %v486
      %v639 = vpack.c.bf16 %v531, %v529
      %v640 = vpack.c.bf16 %v588, %v586
      %v641 = vpack.c.bf16 %v433, %v487
      %v642 = vpack.c.bf16 %v536, %v534
      %v643 = vpack.c.bf16 %v593, %v591
      %v644 = vpack.c.bf16 %v436, %v488
      %v645 = vpack.c.bf16 %v541, %v539
      %v646 = vpack.c.bf16 %v598, %v596
      %v647 = vpack.c.bf16 %v439, %v489
      %v648 = vpack.c.bf16 %v546, %v544
      %v649 = vpack.c.bf16 %v603, %v601
      %v650 = vpack.c.bf16 %v442, %v490
      %v651 = vpack.c.bf16 %v551, %v549
      %v652 = vpack.c.bf16 %v608, %v606
      %v653 = vpack.c.bf16 %v445, %v491
      %v654 = vpack.c.bf16 %v556, %v554
      %v655 = vpack.c.bf16 %v613, %v611
      %v656 = vpack.c.bf16 %v448, %v492
      %v657 = vpack.c.bf16 %v561, %v559
      %v658 = vpack.c.bf16 %v618, %v616
      %v659 = vld [vmem:[%s2] sm:$0xf]
      %v660 = vld [vmem:[%s2 + $0x4] sm:$0xf]
      %v661 = vld [vmem:[%s2 + $0x8] sm:$0xf]
      %v662 = vld [vmem:[%s2 + $0xc] sm:$0xf]
      %v663 = vld [vmem:[%s2 + $0x10] sm:$0xf]
      %v664 = vld [vmem:[%s2 + $0x14] sm:$0xf]
      %v665 = vld [vmem:[%s2 + $0x18] sm:$0xf]
      %v666 = vld [vmem:[%s2 + $0x1c] sm:$0xf]
      %v667 = vld [vmem:[%s2 + $0x20] sm:$0xf]
      %v668 = vld [vmem:[%s2 + $0x24] sm:$0xf]
      %v669 = vld [vmem:[%s2 + $0x28] sm:$0xf]
      %v670 = vld [vmem:[%s2 + $0x2c] sm:$0xf]
      %v671 = vld [vmem:[%s2 + $0x30] sm:$0xf]
      %v672 = vld [vmem:[%s2 + $0x34] sm:$0xf]
      %v673 = vld [vmem:[%s2 + $0x38] sm:$0xf]
      %v674 = vld [vmem:[%s2 + $0x3c] sm:$0xf]
      %v675 = vld [vmem:[%s2 + $0x40] sm:$0xf]
      %v676 = vld [vmem:[%s2 + $0x44] sm:$0xf]
      %v677 = vld [vmem:[%s2 + $0x48] sm:$0xf]
      %v678 = vld [vmem:[%s2 + $0x4c] sm:$0xf]
      %v679 = vld [vmem:[%s2 + $0x50] sm:$0xf]
      %v680 = vld [vmem:[%s2 + $0x54] sm:$0xf]
      %v681 = vld [vmem:[%s2 + $0x58] sm:$0xf]
      %v682 = vld [vmem:[%s2 + $0x5c] sm:$0xf]
      %v683 = vld [vmem:[%s2 + $0x60] sm:$0xf]
      %v684 = vld [vmem:[%s2 + $0x64] sm:$0xf]
      %v685 = vld [vmem:[%s2 + $0x68] sm:$0xf]
      %v686 = vld [vmem:[%s2 + $0x6c] sm:$0xf]
      %v687 = vld [vmem:[%s2 + $0x70] sm:$0xf]
      %v688 = vld [vmem:[%s2 + $0x74] sm:$0xf]
      %v689 = vld [vmem:[%s2 + $0x78] sm:$0xf]
      %v690 = vld [vmem:[%s2 + $0x7c] sm:$0xf]
      %v691 = vld [vmem:[%s2 + $0x80] sm:$0xf]
      %v692 = vld [vmem:[%s2 + $0x84] sm:$0xf]
      %v693 = vld [vmem:[%s2 + $0x88] sm:$0xf]
      %v694 = vld [vmem:[%s2 + $0x8c] sm:$0xf]
      %v695 = vld [vmem:[%s2 + $0x90] sm:$0xf]
      %v696 = vld [vmem:[%s2 + $0x94] sm:$0xf]
      %v697 = vld [vmem:[%s2 + $0x98] sm:$0xf]
      %v698 = vld [vmem:[%s2 + $0x9c] sm:$0xf]
      %v699 = vld [vmem:[%s2 + $0xa0] sm:$0xf]
      %v700 = vld [vmem:[%s2 + $0xa4] sm:$0xf]
      %v701 = vld [vmem:[%s2 + $0xa8] sm:$0xf]
      %v702 = vld [vmem:[%s2 + $0xac] sm:$0xf]
      %v703 = vld [vmem:[%s2 + $0xb0] sm:$0xf]
      %v704 = vld [vmem:[%s2 + $0xb4] sm:$0xf]
      %v705 = vld [vmem:[%s2 + $0xb8] sm:$0xf]
      %v706 = vld [vmem:[%s2 + $0xbc] sm:$0xf]
      %v709 = vrot.slane %v493, 1
      %v710 = vrot.slane %v451, 1
      %v711 = vsel %vm521, %v709, %v710
      %v712 = vrot.slane %v503, 1
      %v713 = vsel %vm521, %v710, %v712
      %v716 = vrot.slane %v493, 2
      %v717 = vrot.slane %v451, 2
      %v718 = vsel %vm578, %v716, %v717
      %v719 = vrot.slane %v503, 2
      %v720 = vsel %vm578, %v717, %v719
      %v723 = vpack.c.bf16 %v451, %v493
      %v724 = vpack.c.bf16 %v713, %v711
      %v725 = vpack.c.bf16 %v720, %v718
      %s726 = scalar_lea.vmem %s2, 192
      %v727 = vld [vmem:[%s726] sm:$0xf]
      %v728 = vld [vmem:[%s726 + $0x4] sm:$0xf]
      %v729 = vld [vmem:[%s726 + $0x8] sm:$0xf]
      %v730 = vld [vmem:[%s726 + $0xc] sm:$0xf]
      %v731 = vld [vmem:[%s726 + $0x10] sm:$0xf]
      %v732 = vld [vmem:[%s726 + $0x14] sm:$0xf]
      %v733 = vld [vmem:[%s726 + $0x18] sm:$0xf]
      %v734 = vld [vmem:[%s726 + $0x1c] sm:$0xf]
      %v735 = vld [vmem:[%s726 + $0x20] sm:$0xf]
      %v736 = vld [vmem:[%s726 + $0x24] sm:$0xf]
      %v737 = vld [vmem:[%s726 + $0x28] sm:$0xf]
      %v738 = vld [vmem:[%s726 + $0x2c] sm:$0xf]
      %v739 = vld [vmem:[%s726 + $0x30] sm:$0xf]
      %v740 = vld [vmem:[%s726 + $0x34] sm:$0xf]
      %v741 = vld [vmem:[%s726 + $0x38] sm:$0xf]
      %v742 = vld [vmem:[%s726 + $0x3c] sm:$0xf]
      %v743 = vld [vmem:[%s726 + $0x40] sm:$0xf]
      %v744 = vld [vmem:[%s726 + $0x44] sm:$0xf]
      %v745 = vld [vmem:[%s726 + $0x48] sm:$0xf]
      %v746 = vld [vmem:[%s726 + $0x4c] sm:$0xf]
      %v747 = vld [vmem:[%s726 + $0x50] sm:$0xf]
      %v748 = vld [vmem:[%s726 + $0x54] sm:$0xf]
      %v749 = vld [vmem:[%s726 + $0x58] sm:$0xf]
      %v750 = vld [vmem:[%s726 + $0x5c] sm:$0xf]
      %v751 = vld [vmem:[%s726 + $0x60] sm:$0xf]
      %v752 = vld [vmem:[%s726 + $0x64] sm:$0xf]
      %v753 = vld [vmem:[%s726 + $0x68] sm:$0xf]
      %v754 = vld [vmem:[%s726 + $0x6c] sm:$0xf]
      %v755 = vld [vmem:[%s726 + $0x70] sm:$0xf]
      %v756 = vld [vmem:[%s726 + $0x74] sm:$0xf]
      %v757 = vld [vmem:[%s726 + $0x78] sm:$0xf]
      %v758 = vld [vmem:[%s726 + $0x7c] sm:$0xf]
      %v759 = vld [vmem:[%s726 + $0x80] sm:$0xf]
      %v760 = vld [vmem:[%s726 + $0x84] sm:$0xf]
      %v761 = vld [vmem:[%s726 + $0x88] sm:$0xf]
      %v762 = vld [vmem:[%s726 + $0x8c] sm:$0xf]
      %v763 = vld [vmem:[%s726 + $0x90] sm:$0xf]
      %v764 = vld [vmem:[%s726 + $0x94] sm:$0xf]
      %v765 = vld [vmem:[%s726 + $0x98] sm:$0xf]
      %v766 = vld [vmem:[%s726 + $0x9c] sm:$0xf]
      %v767 = vld [vmem:[%s726 + $0xa0] sm:$0xf]
      %v768 = vld [vmem:[%s726 + $0xa4] sm:$0xf]
      %v769 = vld [vmem:[%s726 + $0xa8] sm:$0xf]
      %v770 = vld [vmem:[%s726 + $0xac] sm:$0xf]
      %v771 = vld [vmem:[%s726 + $0xb0] sm:$0xf]
      %v772 = vld [vmem:[%s726 + $0xb4] sm:$0xf]
      %v773 = vld [vmem:[%s726 + $0xb8] sm:$0xf]
      %v774 = vld [vmem:[%s726 + $0xbc] sm:$0xf]
      %v823 = vunpack.c.l.b16 %v727
      %v824 = vunpack.c.l.b16 %v728
      %v825 = vunpack.c.l.b16 %v729
      %v826 = vunpack.c.l.b16 %v730
      %v827 = vunpack.c.l.b16 %v731
      %v828 = vunpack.c.l.b16 %v732
      %v829 = vunpack.c.l.b16 %v733
      %v830 = vunpack.c.l.b16 %v734
      %v831 = vunpack.c.l.b16 %v735
      %v832 = vunpack.c.l.b16 %v736
      %v833 = vunpack.c.l.b16 %v737
      %v834 = vunpack.c.l.b16 %v738
      %v835 = vunpack.c.l.b16 %v739
      %v836 = vunpack.c.l.b16 %v740
      %v837 = vunpack.c.l.b16 %v741
      %v838 = vunpack.c.l.b16 %v742
      %v839 = vunpack.c.l.b16 %v743
      %v840 = vunpack.c.l.b16 %v744
      %v841 = vunpack.c.l.b16 %v745
      %v842 = vunpack.c.l.b16 %v746
      %v843 = vunpack.c.l.b16 %v747
      %v844 = vunpack.c.l.b16 %v748
      %v845 = vunpack.c.l.b16 %v749
      %v846 = vunpack.c.l.b16 %v750
      %v847 = vunpack.c.l.b16 %v751
      %v848 = vunpack.c.l.b16 %v752
      %v849 = vunpack.c.l.b16 %v753
      %v850 = vunpack.c.l.b16 %v754
      %v851 = vunpack.c.l.b16 %v755
      %v852 = vunpack.c.l.b16 %v756
      %v853 = vunpack.c.l.b16 %v757
      %v854 = vunpack.c.l.b16 %v758
      %v855 = vunpack.c.l.b16 %v759
      %v856 = vunpack.c.l.b16 %v760
      %v857 = vunpack.c.l.b16 %v761
      %v858 = vunpack.c.l.b16 %v762
      %v859 = vunpack.c.l.b16 %v763
      %v860 = vunpack.c.l.b16 %v764
      %v861 = vunpack.c.l.b16 %v765
      %v862 = vunpack.c.l.b16 %v766
      %v863 = vunpack.c.l.b16 %v767
      %v864 = vunpack.c.l.b16 %v768
      %v865 = vunpack.c.l.b16 %v769
      %v866 = vunpack.c.l.b16 %v770
      %v867 = vunpack.c.l.b16 %v771
      %v868 = vunpack.c.l.b16 %v772
      %v869 = vunpack.c.l.b16 %v773
      %v870 = vunpack.c.l.b16 %v774
      %v871 = vpack.c.b16 %v824, %v823
      %v872 = vpack.c.b16 %v826, %v825
      %v873 = vpack.c.b16 %v828, %v827
      %v874 = vpack.c.b16 %v830, %v829
      %v875 = vpack.c.b16 %v832, %v831
      %v876 = vpack.c.b16 %v834, %v833
      %v877 = vpack.c.b16 %v836, %v835
      %v878 = vpack.c.b16 %v838, %v837
      %v879 = vpack.c.b16 %v840, %v839
      %v880 = vpack.c.b16 %v842, %v841
      %v881 = vpack.c.b16 %v844, %v843
      %v882 = vpack.c.b16 %v846, %v845
      %v883 = vpack.c.b16 %v848, %v847
      %v884 = vpack.c.b16 %v850, %v849
      %v885 = vpack.c.b16 %v852, %v851
      %v886 = vpack.c.b16 %v854, %v853
      %v887 = vpack.c.b16 %v856, %v855
      %v888 = vpack.c.b16 %v858, %v857
      %v889 = vpack.c.b16 %v860, %v859
      %v890 = vpack.c.b16 %v862, %v861
      %v891 = vpack.c.b16 %v864, %v863
      %v892 = vpack.c.b16 %v866, %v865
      %v893 = vpack.c.b16 %v868, %v867
      %v894 = vpack.c.b16 %v870, %v869
      %919 = vmatprep.subr.bf16.mxu0 0
      %920 = vmatpush1.bf16.msra.mxu0 %v878
      %921 = vmatprep.subr.bf16.mxu0 0
      %922 = vmatpush1.bf16.msra.mxu0 %v877
      %923 = vmatprep.subr.bf16.mxu0 0
      %924 = vmatpush1.bf16.msra.mxu0 %v876
      %925 = vmatprep.subr.bf16.mxu0 0
      %926 = vmatpush1.bf16.msra.mxu0 %v875
      %927 = vmatprep.subr.bf16.mxu0 0
      %928 = vmatpush1.bf16.msra.mxu0 %v874
      %929 = vmatprep.subr.bf16.mxu0 0
      %930 = vmatpush1.bf16.msra.mxu0 %v873
      %931 = vmatprep.subr.bf16.mxu0 0
      %932 = vmatpush1.bf16.msra.mxu0 %v872
      %933 = vmatprep.subr.bf16.mxu0 0
      %934 = vmatpush1.bf16.msra.mxu0 %v871
      %935 = vmatprep.subr.bf16.mxu0 0
      %936 = vmatpush2.bf16.msra.mxu0 %v886
      %937 = vmatprep.subr.bf16.mxu0 0
      %938 = vmatpush2.bf16.msra.mxu0 %v885
      %939 = vmatprep.subr.bf16.mxu0 0
      %940 = vmatpush2.bf16.msra.mxu0 %v884
      %941 = vmatprep.subr.bf16.mxu0 0
      %942 = vmatpush2.bf16.msra.mxu0 %v883
      %943 = vmatprep.subr.bf16.mxu0 0
      %944 = vmatpush2.bf16.msra.mxu0 %v882
      %945 = vmatprep.subr.bf16.mxu0 0
      %946 = vmatpush2.bf16.msra.mxu0 %v881
      %947 = vmatprep.subr.bf16.mxu0 0
      %948 = vmatpush2.bf16.msra.mxu0 %v880
      %949 = vmatprep.subr.bf16.mxu0 0
      %950 = vmatpush2.bf16.msra.mxu0 %v879
      %951 = vmatprep.mubr.bf16.mxu0 %v639
      %952 = vmatmul.mubr.bf16.gmra.mxu0 %v638
      %v953 = vpop.f32.mrf.mxu0
      %v954 = vadd.f32 0.0, %v953
      %v955 = vpop.f32.mrf.mxu0
      %v956 = vpop.f32.mrf.mxu0
      %v957 = vadd.f32 0.0, %v956
      %v958 = vpop.f32.mrf.mxu0
      %959 = vmatprep.mubr.bf16.mxu0 %v642
      %960 = vmatmul.mubr.bf16.gmra.mxu0 %v641
      %v961 = vpop.f32.mrf.mxu0
      %v962 = vadd.f32 0.0, %v961
      %v963 = vpop.f32.mrf.mxu0
      %v964 = vpop.f32.mrf.mxu0
      %v965 = vadd.f32 0.0, %v964
      %v966 = vpop.f32.mrf.mxu0
      %967 = vmatprep.mubr.bf16.mxu0 %v645
      %968 = vmatmul.mubr.bf16.gmra.mxu0 %v644
      %v969 = vpop.f32.mrf.mxu0
      %v970 = vadd.f32 0.0, %v969
      %v971 = vpop.f32.mrf.mxu0
      %v972 = vpop.f32.mrf.mxu0
      %v973 = vadd.f32 0.0, %v972
      %v974 = vpop.f32.mrf.mxu0
      %975 = vmatprep.mubr.bf16.mxu0 %v648
      %976 = vmatmul.mubr.bf16.gmra.mxu0 %v647
      %v977 = vpop.f32.mrf.mxu0
      %v978 = vadd.f32 0.0, %v977
      %v979 = vpop.f32.mrf.mxu0
      %v980 = vpop.f32.mrf.mxu0
      %v981 = vadd.f32 0.0, %v980
      %v982 = vpop.f32.mrf.mxu0
      %983 = vmatprep.mubr.bf16.mxu0 %v651
      %984 = vmatmul.mubr.bf16.gmra.mxu0 %v650
      %v985 = vpop.f32.mrf.mxu0
      %v986 = vadd.f32 0.0, %v985
      %v987 = vpop.f32.mrf.mxu0
      %v988 = vpop.f32.mrf.mxu0
      %v989 = vadd.f32 0.0, %v988
      %v990 = vpop.f32.mrf.mxu0
      %991 = vmatprep.mubr.bf16.mxu0 %v654
      %992 = vmatmul.mubr.bf16.gmra.mxu0 %v653
      %v993 = vpop.f32.mrf.mxu0
      %v994 = vadd.f32 0.0, %v993
      %v995 = vpop.f32.mrf.mxu0
      %v996 = vpop.f32.mrf.mxu0
      %v997 = vadd.f32 0.0, %v996
      %v998 = vpop.f32.mrf.mxu0
      %999 = vmatprep.mubr.bf16.mxu0 %v657
      %1000 = vmatmul.mubr.bf16.gmra.mxu0 %v656
      %v1001 = vpop.f32.mrf.mxu0
      %v1002 = vadd.f32 0.0, %v1001
      %v1003 = vpop.f32.mrf.mxu0
      %v1004 = vpop.f32.mrf.mxu0
      %v1005 = vadd.f32 0.0, %v1004
      %v1006 = vpop.f32.mrf.mxu0
      %1007 = vmatprep.mubr.bf16.mxu0 %v724
      %1008 = vmatmul.mubr.bf16.gmra.mxu0 %v723
      %v1009 = vpop.f32.mrf.mxu0
      %v1010 = vadd.f32 0.0, %v1009
      %v1011 = vpop.f32.mrf.mxu0
      %v1012 = vpop.f32.mrf.mxu0
      %v1013 = vadd.f32 0.0, %v1012
      %v1014 = vpop.f32.mrf.mxu0
      %1015 = vdwg.mxu0
      %1016 = vmatprep.subr.bf16.mxu0 0
      %1017 = vmatpush1.bf16.msra.mxu0 %v894
      %1018 = vmatprep.subr.bf16.mxu0 0
      %1019 = vmatpush1.bf16.msra.mxu0 %v893
      %1020 = vmatprep.subr.bf16.mxu0 0
      %1021 = vmatpush1.bf16.msra.mxu0 %v892
      %1022 = vmatprep.subr.bf16.mxu0 0
      %1023 = vmatpush1.bf16.msra.mxu0 %v891
      %1024 = vmatprep.subr.bf16.mxu0 0
      %1025 = vmatpush1.bf16.msra.mxu0 %v890
      %1026 = vmatprep.subr.bf16.mxu0 0
      %1027 = vmatpush1.bf16.msra.mxu0 %v889
      %1028 = vmatprep.subr.bf16.mxu0 0
      %1029 = vmatpush1.bf16.msra.mxu0 %v888
      %1030 = vmatprep.subr.bf16.mxu0 0
      %1031 = vmatpush1.bf16.msra.mxu0 %v887
      %1032 = vmatprep.subr.bf16.mxu0 0
      %1033 = vmatpush2.bf16.msra.mxu0 0
      %1034 = vmatprep.subr.bf16.mxu0 0
      %1035 = vmatpush2.bf16.msra.mxu0 0
      %1036 = vmatprep.subr.bf16.mxu0 0
      %1037 = vmatpush2.bf16.msra.mxu0 0
      %1038 = vmatprep.subr.bf16.mxu0 0
      %1039 = vmatpush2.bf16.msra.mxu0 0
      %1040 = vmatprep.subr.bf16.mxu0 0
      %1041 = vmatpush2.bf16.msra.mxu0 0
      %1042 = vmatprep.subr.bf16.mxu0 0
      %1043 = vmatpush2.bf16.msra.mxu0 0
      %1044 = vmatprep.subr.bf16.mxu0 0
      %1045 = vmatpush2.bf16.msra.mxu0 0
      %1046 = vmatprep.subr.bf16.mxu0 0
      %1047 = vmatpush2.bf16.msra.mxu0 0
      %1048 = vmatprep.mubr.bf16.mxu0 0
      %1049 = vmatmul.mubr.bf16.gmra.mxu0 %v640
      %v1050 = vpop.f32.mrf.mxu0
      %v1051 = vadd.f32 %v954, %v1050
      %v1052 = vpop.f32.mrf.mxu0
      %v1053 = vpop.f32.mrf.mxu0
      %v1054 = vadd.f32 %v957, %v1053
      %v1055 = vpop.f32.mrf.mxu0
      %1056 = vmatprep.mubr.bf16.mxu0 0
      %1057 = vmatmul.mubr.bf16.gmra.mxu0 %v643
      %v1058 = vpop.f32.mrf.mxu0
      %v1059 = vadd.f32 %v962, %v1058
      %v1060 = vpop.f32.mrf.mxu0
      %v1061 = vpop.f32.mrf.mxu0
      %v1062 = vadd.f32 %v965, %v1061
      %v1063 = vpop.f32.mrf.mxu0
      %1064 = vmatprep.mubr.bf16.mxu0 0
      %1065 = vmatmul.mubr.bf16.gmra.mxu0 %v646
      %v1066 = vpop.f32.mrf.mxu0
      %v1067 = vadd.f32 %v970, %v1066
      %v1068 = vpop.f32.mrf.mxu0
      %v1069 = vpop.f32.mrf.mxu0
      %v1070 = vadd.f32 %v973, %v1069
      %v1071 = vpop.f32.mrf.mxu0
      %1072 = vmatprep.mubr.bf16.mxu0 0
      %1073 = vmatmul.mubr.bf16.gmra.mxu0 %v649
      %v1074 = vpop.f32.mrf.mxu0
      %v1075 = vadd.f32 %v978, %v1074
      %v1076 = vpop.f32.mrf.mxu0
      %v1077 = vpop.f32.mrf.mxu0
      %v1078 = vadd.f32 %v981, %v1077
      %v1079 = vpop.f32.mrf.mxu0
      %1080 = vmatprep.mubr.bf16.mxu0 0
      %1081 = vmatmul.mubr.bf16.gmra.mxu0 %v652
      %v1082 = vpop.f32.mrf.mxu0
      %v1083 = vadd.f32 %v986, %v1082
      %v1084 = vpop.f32.mrf.mxu0
      %v1085 = vpop.f32.mrf.mxu0
      %v1086 = vadd.f32 %v989, %v1085
      %v1087 = vpop.f32.mrf.mxu0
      %1088 = vmatprep.mubr.bf16.mxu0 0
      %1089 = vmatmul.mubr.bf16.gmra.mxu0 %v655
      %v1090 = vpop.f32.mrf.mxu0
      %v1091 = vadd.f32 %v994, %v1090
      %v1092 = vpop.f32.mrf.mxu0
      %v1093 = vpop.f32.mrf.mxu0
      %v1094 = vadd.f32 %v997, %v1093
      %v1095 = vpop.f32.mrf.mxu0
      %1096 = vmatprep.mubr.bf16.mxu0 0
      %1097 = vmatmul.mubr.bf16.gmra.mxu0 %v658
      %v1098 = vpop.f32.mrf.mxu0
      %v1099 = vadd.f32 %v1002, %v1098
      %v1100 = vpop.f32.mrf.mxu0
      %v1101 = vpop.f32.mrf.mxu0
      %v1102 = vadd.f32 %v1005, %v1101
      %v1103 = vpop.f32.mrf.mxu0
      %1104 = vmatprep.mubr.bf16.mxu0 0
      %1105 = vmatmul.mubr.bf16.gmra.mxu0 %v725
      %v1106 = vpop.f32.mrf.mxu0
      %v1107 = vadd.f32 %v1010, %v1106
      %v1108 = vpop.f32.mrf.mxu0
      %v1109 = vpop.f32.mrf.mxu0
      %v1110 = vadd.f32 %v1013, %v1109
      %v1111 = vpop.f32.mrf.mxu0
      %1112 = vdwg.mxu0
      %v1161 = vunpack.c.l.b16 %v659
      %v1162 = vunpack.c.l.b16 %v660
      %v1163 = vunpack.c.l.b16 %v661
      %v1164 = vunpack.c.l.b16 %v662
      %v1165 = vunpack.c.l.b16 %v663
      %v1166 = vunpack.c.l.b16 %v664
      %v1167 = vunpack.c.l.b16 %v665
      %v1168 = vunpack.c.l.b16 %v666
      %v1169 = vunpack.c.l.b16 %v667
      %v1170 = vunpack.c.l.b16 %v668
      %v1171 = vunpack.c.l.b16 %v669
      %v1172 = vunpack.c.l.b16 %v670
      %v1173 = vunpack.c.l.b16 %v671
      %v1174 = vunpack.c.l.b16 %v672
      %v1175 = vunpack.c.l.b16 %v673
      %v1176 = vunpack.c.l.b16 %v674
      %v1177 = vunpack.c.l.b16 %v675
      %v1178 = vunpack.c.l.b16 %v676
      %v1179 = vunpack.c.l.b16 %v677
      %v1180 = vunpack.c.l.b16 %v678
      %v1181 = vunpack.c.l.b16 %v679
      %v1182 = vunpack.c.l.b16 %v680
      %v1183 = vunpack.c.l.b16 %v681
      %v1184 = vunpack.c.l.b16 %v682
      %v1185 = vunpack.c.l.b16 %v683
      %v1186 = vunpack.c.l.b16 %v684
      %v1187 = vunpack.c.l.b16 %v685
      %v1188 = vunpack.c.l.b16 %v686
      %v1189 = vunpack.c.l.b16 %v687
      %v1190 = vunpack.c.l.b16 %v688
      %v1191 = vunpack.c.l.b16 %v689
      %v1192 = vunpack.c.l.b16 %v690
      %v1193 = vunpack.c.l.b16 %v691
      %v1194 = vunpack.c.l.b16 %v692
      %v1195 = vunpack.c.l.b16 %v693
      %v1196 = vunpack.c.l.b16 %v694
      %v1197 = vunpack.c.l.b16 %v695
      %v1198 = vunpack.c.l.b16 %v696
      %v1199 = vunpack.c.l.b16 %v697
      %v1200 = vunpack.c.l.b16 %v698
      %v1201 = vunpack.c.l.b16 %v699
      %v1202 = vunpack.c.l.b16 %v700
      %v1203 = vunpack.c.l.b16 %v701
      %v1204 = vunpack.c.l.b16 %v702
      %v1205 = vunpack.c.l.b16 %v703
      %v1206 = vunpack.c.l.b16 %v704
      %v1207 = vunpack.c.l.b16 %v705
      %v1208 = vunpack.c.l.b16 %v706
      %v1209 = vpack.c.b16 %v1162, %v1161
      %v1210 = vpack.c.b16 %v1164, %v1163
      %v1211 = vpack.c.b16 %v1166, %v1165
      %v1212 = vpack.c.b16 %v1168, %v1167
      %v1213 = vpack.c.b16 %v1170, %v1169
      %v1214 = vpack.c.b16 %v1172, %v1171
      %v1215 = vpack.c.b16 %v1174, %v1173
      %v1216 = vpack.c.b16 %v1176, %v1175
      %v1217 = vpack.c.b16 %v1178, %v1177
      %v1218 = vpack.c.b16 %v1180, %v1179
      %v1219 = vpack.c.b16 %v1182, %v1181
      %v1220 = vpack.c.b16 %v1184, %v1183
      %v1221 = vpack.c.b16 %v1186, %v1185
      %v1222 = vpack.c.b16 %v1188, %v1187
      %v1223 = vpack.c.b16 %v1190, %v1189
      %v1224 = vpack.c.b16 %v1192, %v1191
      %v1225 = vpack.c.b16 %v1194, %v1193
      %v1226 = vpack.c.b16 %v1196, %v1195
      %v1227 = vpack.c.b16 %v1198, %v1197
      %v1228 = vpack.c.b16 %v1200, %v1199
      %v1229 = vpack.c.b16 %v1202, %v1201
      %v1230 = vpack.c.b16 %v1204, %v1203
      %v1231 = vpack.c.b16 %v1206, %v1205
      %v1232 = vpack.c.b16 %v1208, %v1207
      %1257 = vmatprep.subr.bf16.mxu0 0
      %1258 = vmatpush1.bf16.msra.mxu0 %v1216
      %1259 = vmatprep.subr.bf16.mxu0 0
      %1260 = vmatpush1.bf16.msra.mxu0 %v1215
      %1261 = vmatprep.subr.bf16.mxu0 0
      %1262 = vmatpush1.bf16.msra.mxu0 %v1214
      %1263 = vmatprep.subr.bf16.mxu0 0
      %1264 = vmatpush1.bf16.msra.mxu0 %v1213
      %1265 = vmatprep.subr.bf16.mxu0 0
      %1266 = vmatpush1.bf16.msra.mxu0 %v1212
      %1267 = vmatprep.subr.bf16.mxu0 0
      %1268 = vmatpush1.bf16.msra.mxu0 %v1211
      %1269 = vmatprep.subr.bf16.mxu0 0
      %1270 = vmatpush1.bf16.msra.mxu0 %v1210
      %1271 = vmatprep.subr.bf16.mxu0 0
      %1272 = vmatpush1.bf16.msra.mxu0 %v1209
      %1273 = vmatprep.subr.bf16.mxu0 0
      %1274 = vmatpush2.bf16.msra.mxu0 %v1224
      %1275 = vmatprep.subr.bf16.mxu0 0
      %1276 = vmatpush2.bf16.msra.mxu0 %v1223
      %1277 = vmatprep.subr.bf16.mxu0 0
      %1278 = vmatpush2.bf16.msra.mxu0 %v1222
      %1279 = vmatprep.subr.bf16.mxu0 0
      %1280 = vmatpush2.bf16.msra.mxu0 %v1221
      %1281 = vmatprep.subr.bf16.mxu0 0
      %1282 = vmatpush2.bf16.msra.mxu0 %v1220
      %1283 = vmatprep.subr.bf16.mxu0 0
      %1284 = vmatpush2.bf16.msra.mxu0 %v1219
      %1285 = vmatprep.subr.bf16.mxu0 0
      %1286 = vmatpush2.bf16.msra.mxu0 %v1218
      %1287 = vmatprep.subr.bf16.mxu0 0
      %1288 = vmatpush2.bf16.msra.mxu0 %v1217
      %1289 = vmatprep.mubr.bf16.mxu0 %v636
      %1290 = vmatmul.mubr.bf16.gmra.mxu0 %v635
      %v1291 = vpop.f32.mrf.mxu0
      %v1292 = vadd.f32 %v1051, %v1291
      %v1293 = vpop.f32.mrf.mxu0
      %v1294 = vpop.f32.mrf.mxu0
      %v1295 = vadd.f32 %v1054, %v1294
      %v1296 = vpop.f32.mrf.mxu0
      %1297 = vmatprep.mubr.bf16.mxu0 %v639
      %1298 = vmatmul.mubr.bf16.gmra.mxu0 %v638
      %v1299 = vpop.f32.mrf.mxu0
      %v1300 = vadd.f32 %v1059, %v1299
      %v1301 = vpop.f32.mrf.mxu0
      %v1302 = vpop.f32.mrf.mxu0
      %v1303 = vadd.f32 %v1062, %v1302
      %v1304 = vpop.f32.mrf.mxu0
      %1305 = vmatprep.mubr.bf16.mxu0 %v642
      %1306 = vmatmul.mubr.bf16.gmra.mxu0 %v641
      %v1307 = vpop.f32.mrf.mxu0
      %v1308 = vadd.f32 %v1067, %v1307
      %v1309 = vpop.f32.mrf.mxu0
      %v1310 = vpop.f32.mrf.mxu0
      %v1311 = vadd.f32 %v1070, %v1310
      %v1312 = vpop.f32.mrf.mxu0
      %1313 = vmatprep.mubr.bf16.mxu0 %v645
      %1314 = vmatmul.mubr.bf16.gmra.mxu0 %v644
      %v1315 = vpop.f32.mrf.mxu0
      %v1316 = vadd.f32 %v1075, %v1315
      %v1317 = vpop.f32.mrf.mxu0
      %v1318 = vpop.f32.mrf.mxu0
      %v1319 = vadd.f32 %v1078, %v1318
      %v1320 = vpop.f32.mrf.mxu0
      %1321 = vmatprep.mubr.bf16.mxu0 %v648
      %1322 = vmatmul.mubr.bf16.gmra.mxu0 %v647
      %v1323 = vpop.f32.mrf.mxu0
      %v1324 = vadd.f32 %v1083, %v1323
      %v1325 = vpop.f32.mrf.mxu0
      %v1326 = vpop.f32.mrf.mxu0
      %v1327 = vadd.f32 %v1086, %v1326
      %v1328 = vpop.f32.mrf.mxu0
      %1329 = vmatprep.mubr.bf16.mxu0 %v651
      %1330 = vmatmul.mubr.bf16.gmra.mxu0 %v650
      %v1331 = vpop.f32.mrf.mxu0
      %v1332 = vadd.f32 %v1091, %v1331
      %v1333 = vpop.f32.mrf.mxu0
      %v1334 = vpop.f32.mrf.mxu0
      %v1335 = vadd.f32 %v1094, %v1334
      %v1336 = vpop.f32.mrf.mxu0
      %1337 = vmatprep.mubr.bf16.mxu0 %v654
      %1338 = vmatmul.mubr.bf16.gmra.mxu0 %v653
      %v1339 = vpop.f32.mrf.mxu0
      %v1340 = vadd.f32 %v1099, %v1339
      %v1341 = vpop.f32.mrf.mxu0
      %v1342 = vpop.f32.mrf.mxu0
      %v1343 = vadd.f32 %v1102, %v1342
      %v1344 = vpop.f32.mrf.mxu0
      %1345 = vmatprep.mubr.bf16.mxu0 %v657
      %1346 = vmatmul.mubr.bf16.gmra.mxu0 %v656
      %v1347 = vpop.f32.mrf.mxu0
      %v1348 = vadd.f32 %v1107, %v1347
      %v1349 = vpop.f32.mrf.mxu0
      %v1350 = vpop.f32.mrf.mxu0
      %v1351 = vadd.f32 %v1110, %v1350
      %v1352 = vpop.f32.mrf.mxu0
      %1353 = vdwg.mxu0
      %1354 = vmatprep.subr.bf16.mxu0 0
      %1355 = vmatpush1.bf16.msra.mxu0 %v1232
      %1356 = vmatprep.subr.bf16.mxu0 0
      %1357 = vmatpush1.bf16.msra.mxu0 %v1231
      %1358 = vmatprep.subr.bf16.mxu0 0
      %1359 = vmatpush1.bf16.msra.mxu0 %v1230
      %1360 = vmatprep.subr.bf16.mxu0 0
      %1361 = vmatpush1.bf16.msra.mxu0 %v1229
      %1362 = vmatprep.subr.bf16.mxu0 0
      %1363 = vmatpush1.bf16.msra.mxu0 %v1228
      %1364 = vmatprep.subr.bf16.mxu0 0
      %1365 = vmatpush1.bf16.msra.mxu0 %v1227
      %1366 = vmatprep.subr.bf16.mxu0 0
      %1367 = vmatpush1.bf16.msra.mxu0 %v1226
      %1368 = vmatprep.subr.bf16.mxu0 0
      %1369 = vmatpush1.bf16.msra.mxu0 %v1225
      %1370 = vmatprep.subr.bf16.mxu0 0
      %1371 = vmatpush2.bf16.msra.mxu0 0
      %1372 = vmatprep.subr.bf16.mxu0 0
      %1373 = vmatpush2.bf16.msra.mxu0 0
      %1374 = vmatprep.subr.bf16.mxu0 0
      %1375 = vmatpush2.bf16.msra.mxu0 0
      %1376 = vmatprep.subr.bf16.mxu0 0
      %1377 = vmatpush2.bf16.msra.mxu0 0
      %1378 = vmatprep.subr.bf16.mxu0 0
      %1379 = vmatpush2.bf16.msra.mxu0 0
      %1380 = vmatprep.subr.bf16.mxu0 0
      %1381 = vmatpush2.bf16.msra.mxu0 0
      %1382 = vmatprep.subr.bf16.mxu0 0
      %1383 = vmatpush2.bf16.msra.mxu0 0
      %1384 = vmatprep.subr.bf16.mxu0 0
      %1385 = vmatpush2.bf16.msra.mxu0 0
      %1386 = vmatprep.mubr.bf16.mxu0 0
      %1387 = vmatmul.mubr.bf16.gmra.mxu0 %v637
      %v1388 = vpop.f32.mrf.mxu0
      %v1389 = vadd.f32 %v1292, %v1388
      %v1390 = vpop.f32.mrf.mxu0
      %v1391 = vpop.f32.mrf.mxu0
      %v1392 = vadd.f32 %v1295, %v1391
      %v1393 = vpop.f32.mrf.mxu0
      %1394 = vmatprep.mubr.bf16.mxu0 0
      %1395 = vmatmul.mubr.bf16.gmra.mxu0 %v640
      %v1396 = vpop.f32.mrf.mxu0
      %v1397 = vadd.f32 %v1300, %v1396
      %v1398 = vpop.f32.mrf.mxu0
      %v1399 = vpop.f32.mrf.mxu0
      %v1400 = vadd.f32 %v1303, %v1399
      %v1401 = vpop.f32.mrf.mxu0
      %1402 = vmatprep.mubr.bf16.mxu0 0
      %1403 = vmatmul.mubr.bf16.gmra.mxu0 %v643
      %v1404 = vpop.f32.mrf.mxu0
      %v1405 = vadd.f32 %v1308, %v1404
      %v1406 = vpop.f32.mrf.mxu0
      %v1407 = vpop.f32.mrf.mxu0
      %v1408 = vadd.f32 %v1311, %v1407
      %v1409 = vpop.f32.mrf.mxu0
      %1410 = vmatprep.mubr.bf16.mxu0 0
      %1411 = vmatmul.mubr.bf16.gmra.mxu0 %v646
      %v1412 = vpop.f32.mrf.mxu0
      %v1413 = vadd.f32 %v1316, %v1412
      %v1414 = vpop.f32.mrf.mxu0
      %v1415 = vpop.f32.mrf.mxu0
      %v1416 = vadd.f32 %v1319, %v1415
      %v1417 = vpop.f32.mrf.mxu0
      %1418 = vmatprep.mubr.bf16.mxu0 0
      %1419 = vmatmul.mubr.bf16.gmra.mxu0 %v649
      %v1420 = vpop.f32.mrf.mxu0
      %v1421 = vadd.f32 %v1324, %v1420
      %v1422 = vpop.f32.mrf.mxu0
      %v1423 = vpop.f32.mrf.mxu0
      %v1424 = vadd.f32 %v1327, %v1423
      %v1425 = vpop.f32.mrf.mxu0
      %1426 = vmatprep.mubr.bf16.mxu0 0
      %1427 = vmatmul.mubr.bf16.gmra.mxu0 %v652
      %v1428 = vpop.f32.mrf.mxu0
      %v1429 = vadd.f32 %v1332, %v1428
      %v1430 = vpop.f32.mrf.mxu0
      %v1431 = vpop.f32.mrf.mxu0
      %v1432 = vadd.f32 %v1335, %v1431
      %v1433 = vpop.f32.mrf.mxu0
      %1434 = vmatprep.mubr.bf16.mxu0 0
      %1435 = vmatmul.mubr.bf16.gmra.mxu0 %v655
      %v1436 = vpop.f32.mrf.mxu0
      %v1437 = vadd.f32 %v1340, %v1436
      %v1438 = vpop.f32.mrf.mxu0
      %v1439 = vpop.f32.mrf.mxu0
      %v1440 = vadd.f32 %v1343, %v1439
      %v1441 = vpop.f32.mrf.mxu0
      %1442 = vmatprep.mubr.bf16.mxu0 0
      %1443 = vmatmul.mubr.bf16.gmra.mxu0 %v658
      %v1444 = vpop.f32.mrf.mxu0
      %v1445 = vadd.f32 %v1348, %v1444
      %v1446 = vpop.f32.mrf.mxu0
      %v1447 = vpop.f32.mrf.mxu0
      %v1448 = vadd.f32 %v1351, %v1447
      %v1449 = vpop.f32.mrf.mxu0
      %1450 = vdwg.mxu0
      %v1453 = vrot.slane %v494, 1
      %v1454 = vrot.slane %v454, 1
      %v1455 = vsel %vm521, %v1453, %v1454
      %v1456 = vrot.slane %v504, 1
      %v1457 = vsel %vm521, %v1454, %v1456
      %v1460 = vrot.slane %v494, 2
      %v1461 = vrot.slane %v454, 2
      %v1462 = vsel %vm578, %v1460, %v1461
      %v1463 = vrot.slane %v504, 2
      %v1464 = vsel %vm578, %v1461, %v1463
      %v1467 = vpack.c.bf16 %v454, %v494
      %v1468 = vpack.c.bf16 %v1457, %v1455
      %v1469 = vpack.c.bf16 %v1464, %v1462
      %s1470 = scalar_lea.vmem %s2, 384
      %v1471 = vld [vmem:[%s1470] sm:$0xf]
      %v1472 = vld [vmem:[%s1470 + $0x4] sm:$0xf]
      %v1473 = vld [vmem:[%s1470 + $0x8] sm:$0xf]
      %v1474 = vld [vmem:[%s1470 + $0xc] sm:$0xf]
      %v1475 = vld [vmem:[%s1470 + $0x10] sm:$0xf]
      %v1476 = vld [vmem:[%s1470 + $0x14] sm:$0xf]
      %v1477 = vld [vmem:[%s1470 + $0x18] sm:$0xf]
      %v1478 = vld [vmem:[%s1470 + $0x1c] sm:$0xf]
      %v1479 = vld [vmem:[%s1470 + $0x20] sm:$0xf]
      %v1480 = vld [vmem:[%s1470 + $0x24] sm:$0xf]
      %v1481 = vld [vmem:[%s1470 + $0x28] sm:$0xf]
      %v1482 = vld [vmem:[%s1470 + $0x2c] sm:$0xf]
      %v1483 = vld [vmem:[%s1470 + $0x30] sm:$0xf]
      %v1484 = vld [vmem:[%s1470 + $0x34] sm:$0xf]
      %v1485 = vld [vmem:[%s1470 + $0x38] sm:$0xf]
      %v1486 = vld [vmem:[%s1470 + $0x3c] sm:$0xf]
      %v1487 = vld [vmem:[%s1470 + $0x40] sm:$0xf]
      %v1488 = vld [vmem:[%s1470 + $0x44] sm:$0xf]
      %v1489 = vld [vmem:[%s1470 + $0x48] sm:$0xf]
      %v1490 = vld [vmem:[%s1470 + $0x4c] sm:$0xf]
      %v1491 = vld [vmem:[%s1470 + $0x50] sm:$0xf]
      %v1492 = vld [vmem:[%s1470 + $0x54] sm:$0xf]
      %v1493 = vld [vmem:[%s1470 + $0x58] sm:$0xf]
      %v1494 = vld [vmem:[%s1470 + $0x5c] sm:$0xf]
      %v1495 = vld [vmem:[%s1470 + $0x60] sm:$0xf]
      %v1496 = vld [vmem:[%s1470 + $0x64] sm:$0xf]
      %v1497 = vld [vmem:[%s1470 + $0x68] sm:$0xf]
      %v1498 = vld [vmem:[%s1470 + $0x6c] sm:$0xf]
      %v1499 = vld [vmem:[%s1470 + $0x70] sm:$0xf]
      %v1500 = vld [vmem:[%s1470 + $0x74] sm:$0xf]
      %v1501 = vld [vmem:[%s1470 + $0x78] sm:$0xf]
      %v1502 = vld [vmem:[%s1470 + $0x7c] sm:$0xf]
      %v1503 = vld [vmem:[%s1470 + $0x80] sm:$0xf]
      %v1504 = vld [vmem:[%s1470 + $0x84] sm:$0xf]
      %v1505 = vld [vmem:[%s1470 + $0x88] sm:$0xf]
      %v1506 = vld [vmem:[%s1470 + $0x8c] sm:$0xf]
      %v1507 = vld [vmem:[%s1470 + $0x90] sm:$0xf]
      %v1508 = vld [vmem:[%s1470 + $0x94] sm:$0xf]
      %v1509 = vld [vmem:[%s1470 + $0x98] sm:$0xf]
      %v1510 = vld [vmem:[%s1470 + $0x9c] sm:$0xf]
      %v1511 = vld [vmem:[%s1470 + $0xa0] sm:$0xf]
      %v1512 = vld [vmem:[%s1470 + $0xa4] sm:$0xf]
      %v1513 = vld [vmem:[%s1470 + $0xa8] sm:$0xf]
      %v1514 = vld [vmem:[%s1470 + $0xac] sm:$0xf]
      %v1515 = vld [vmem:[%s1470 + $0xb0] sm:$0xf]
      %v1516 = vld [vmem:[%s1470 + $0xb4] sm:$0xf]
      %v1517 = vld [vmem:[%s1470 + $0xb8] sm:$0xf]
      %v1518 = vld [vmem:[%s1470 + $0xbc] sm:$0xf]
      %v1567 = vunpack.c.l.b16 %v1471
      %v1568 = vunpack.c.l.b16 %v1472
      %v1569 = vunpack.c.l.b16 %v1473
      %v1570 = vunpack.c.l.b16 %v1474
      %v1571 = vunpack.c.l.b16 %v1475
      %v1572 = vunpack.c.l.b16 %v1476
      %v1573 = vunpack.c.l.b16 %v1477
      %v1574 = vunpack.c.l.b16 %v1478
      %v1575 = vunpack.c.l.b16 %v1479
      %v1576 = vunpack.c.l.b16 %v1480
      %v1577 = vunpack.c.l.b16 %v1481
      %v1578 = vunpack.c.l.b16 %v1482
      %v1579 = vunpack.c.l.b16 %v1483
      %v1580 = vunpack.c.l.b16 %v1484
      %v1581 = vunpack.c.l.b16 %v1485
      %v1582 = vunpack.c.l.b16 %v1486
      %v1583 = vunpack.c.l.b16 %v1487
      %v1584 = vunpack.c.l.b16 %v1488
      %v1585 = vunpack.c.l.b16 %v1489
      %v1586 = vunpack.c.l.b16 %v1490
      %v1587 = vunpack.c.l.b16 %v1491
      %v1588 = vunpack.c.l.b16 %v1492
      %v1589 = vunpack.c.l.b16 %v1493
      %v1590 = vunpack.c.l.b16 %v1494
      %v1591 = vunpack.c.l.b16 %v1495
      %v1592 = vunpack.c.l.b16 %v1496
      %v1593 = vunpack.c.l.b16 %v1497
      %v1594 = vunpack.c.l.b16 %v1498
      %v1595 = vunpack.c.l.b16 %v1499
      %v1596 = vunpack.c.l.b16 %v1500
      %v1597 = vunpack.c.l.b16 %v1501
      %v1598 = vunpack.c.l.b16 %v1502
      %v1599 = vunpack.c.l.b16 %v1503
      %v1600 = vunpack.c.l.b16 %v1504
      %v1601 = vunpack.c.l.b16 %v1505
      %v1602 = vunpack.c.l.b16 %v1506
      %v1603 = vunpack.c.l.b16 %v1507
      %v1604 = vunpack.c.l.b16 %v1508
      %v1605 = vunpack.c.l.b16 %v1509
      %v1606 = vunpack.c.l.b16 %v1510
      %v1607 = vunpack.c.l.b16 %v1511
      %v1608 = vunpack.c.l.b16 %v1512
      %v1609 = vunpack.c.l.b16 %v1513
      %v1610 = vunpack.c.l.b16 %v1514
      %v1611 = vunpack.c.l.b16 %v1515
      %v1612 = vunpack.c.l.b16 %v1516
      %v1613 = vunpack.c.l.b16 %v1517
      %v1614 = vunpack.c.l.b16 %v1518
      %v1615 = vpack.c.b16 %v1568, %v1567
      %v1616 = vpack.c.b16 %v1570, %v1569
      %v1617 = vpack.c.b16 %v1572, %v1571
      %v1618 = vpack.c.b16 %v1574, %v1573
      %v1619 = vpack.c.b16 %v1576, %v1575
      %v1620 = vpack.c.b16 %v1578, %v1577
      %v1621 = vpack.c.b16 %v1580, %v1579
      %v1622 = vpack.c.b16 %v1582, %v1581
      %v1623 = vpack.c.b16 %v1584, %v1583
      %v1624 = vpack.c.b16 %v1586, %v1585
      %v1625 = vpack.c.b16 %v1588, %v1587
      %v1626 = vpack.c.b16 %v1590, %v1589
      %v1627 = vpack.c.b16 %v1592, %v1591
      %v1628 = vpack.c.b16 %v1594, %v1593
      %v1629 = vpack.c.b16 %v1596, %v1595
      %v1630 = vpack.c.b16 %v1598, %v1597
      %v1631 = vpack.c.b16 %v1600, %v1599
      %v1632 = vpack.c.b16 %v1602, %v1601
      %v1633 = vpack.c.b16 %v1604, %v1603
      %v1634 = vpack.c.b16 %v1606, %v1605
      %v1635 = vpack.c.b16 %v1608, %v1607
      %v1636 = vpack.c.b16 %v1610, %v1609
      %v1637 = vpack.c.b16 %v1612, %v1611
      %v1638 = vpack.c.b16 %v1614, %v1613
      %1663 = vmatprep.subr.bf16.mxu0 0
      %1664 = vmatpush1.bf16.msra.mxu0 %v1622
      %1665 = vmatprep.subr.bf16.mxu0 0
      %1666 = vmatpush1.bf16.msra.mxu0 %v1621
      %1667 = vmatprep.subr.bf16.mxu0 0
      %1668 = vmatpush1.bf16.msra.mxu0 %v1620
      %1669 = vmatprep.subr.bf16.mxu0 0
      %1670 = vmatpush1.bf16.msra.mxu0 %v1619
      %1671 = vmatprep.subr.bf16.mxu0 0
      %1672 = vmatpush1.bf16.msra.mxu0 %v1618
      %1673 = vmatprep.subr.bf16.mxu0 0
      %1674 = vmatpush1.bf16.msra.mxu0 %v1617
      %1675 = vmatprep.subr.bf16.mxu0 0
      %1676 = vmatpush1.bf16.msra.mxu0 %v1616
      %1677 = vmatprep.subr.bf16.mxu0 0
      %1678 = vmatpush1.bf16.msra.mxu0 %v1615
      %1679 = vmatprep.subr.bf16.mxu0 0
      %1680 = vmatpush2.bf16.msra.mxu0 %v1630
      %1681 = vmatprep.subr.bf16.mxu0 0
      %1682 = vmatpush2.bf16.msra.mxu0 %v1629
      %1683 = vmatprep.subr.bf16.mxu0 0
      %1684 = vmatpush2.bf16.msra.mxu0 %v1628
      %1685 = vmatprep.subr.bf16.mxu0 0
      %1686 = vmatpush2.bf16.msra.mxu0 %v1627
      %1687 = vmatprep.subr.bf16.mxu0 0
      %1688 = vmatpush2.bf16.msra.mxu0 %v1626
      %1689 = vmatprep.subr.bf16.mxu0 0
      %1690 = vmatpush2.bf16.msra.mxu0 %v1625
      %1691 = vmatprep.subr.bf16.mxu0 0
      %1692 = vmatpush2.bf16.msra.mxu0 %v1624
      %1693 = vmatprep.subr.bf16.mxu0 0
      %1694 = vmatpush2.bf16.msra.mxu0 %v1623
      %1695 = vmatprep.mubr.bf16.mxu0 %v642
      %1696 = vmatmul.mubr.bf16.gmra.mxu0 %v641
      %v1697 = vpop.f32.mrf.mxu0
      %v1698 = vadd.f32 0.0, %v1697
      %v1699 = vpop.f32.mrf.mxu0
      %v1700 = vpop.f32.mrf.mxu0
      %v1701 = vadd.f32 0.0, %v1700
      %v1702 = vpop.f32.mrf.mxu0
      %1703 = vmatprep.mubr.bf16.mxu0 %v645
      %1704 = vmatmul.mubr.bf16.gmra.mxu0 %v644
      %v1705 = vpop.f32.mrf.mxu0
      %v1706 = vadd.f32 0.0, %v1705
      %v1707 = vpop.f32.mrf.mxu0
      %v1708 = vpop.f32.mrf.mxu0
      %v1709 = vadd.f32 0.0, %v1708
      %v1710 = vpop.f32.mrf.mxu0
      %1711 = vmatprep.mubr.bf16.mxu0 %v648
      %1712 = vmatmul.mubr.bf16.gmra.mxu0 %v647
      %v1713 = vpop.f32.mrf.mxu0
      %v1714 = vadd.f32 0.0, %v1713
      %v1715 = vpop.f32.mrf.mxu0
      %v1716 = vpop.f32.mrf.mxu0
      %v1717 = vadd.f32 0.0, %v1716
      %v1718 = vpop.f32.mrf.mxu0
      %1719 = vmatprep.mubr.bf16.mxu0 %v651
      %1720 = vmatmul.mubr.bf16.gmra.mxu0 %v650
      %v1721 = vpop.f32.mrf.mxu0
      %v1722 = vadd.f32 0.0, %v1721
      %v1723 = vpop.f32.mrf.mxu0
      %v1724 = vpop.f32.mrf.mxu0
      %v1725 = vadd.f32 0.0, %v1724
      %v1726 = vpop.f32.mrf.mxu0
      %1727 = vmatprep.mubr.bf16.mxu0 %v654
      %1728 = vmatmul.mubr.bf16.gmra.mxu0 %v653
      %v1729 = vpop.f32.mrf.mxu0
      %v1730 = vadd.f32 0.0, %v1729
      %v1731 = vpop.f32.mrf.mxu0
      %v1732 = vpop.f32.mrf.mxu0
      %v1733 = vadd.f32 0.0, %v1732
      %v1734 = vpop.f32.mrf.mxu0
      %1735 = vmatprep.mubr.bf16.mxu0 %v657
      %1736 = vmatmul.mubr.bf16.gmra.mxu0 %v656
      %v1737 = vpop.f32.mrf.mxu0
      %v1738 = vadd.f32 0.0, %v1737
      %v1739 = vpop.f32.mrf.mxu0
      %v1740 = vpop.f32.mrf.mxu0
      %v1741 = vadd.f32 0.0, %v1740
      %v1742 = vpop.f32.mrf.mxu0
      %1743 = vmatprep.mubr.bf16.mxu0 %v724
      %1744 = vmatmul.mubr.bf16.gmra.mxu0 %v723
      %v1745 = vpop.f32.mrf.mxu0
      %v1746 = vadd.f32 0.0, %v1745
      %v1747 = vpop.f32.mrf.mxu0
      %v1748 = vpop.f32.mrf.mxu0
      %v1749 = vadd.f32 0.0, %v1748
      %v1750 = vpop.f32.mrf.mxu0
      %1751 = vmatprep.mubr.bf16.mxu0 %v1468
      %1752 = vmatmul.mubr.bf16.gmra.mxu0 %v1467
      %v1753 = vpop.f32.mrf.mxu0
      %v1754 = vadd.f32 0.0, %v1753
      %v1755 = vpop.f32.mrf.mxu0
      %v1756 = vpop.f32.mrf.mxu0
      %v1757 = vadd.f32 0.0, %v1756
      %v1758 = vpop.f32.mrf.mxu0
      %1759 = vdwg.mxu0
      %1760 = vmatprep.subr.bf16.mxu0 0
      %1761 = vmatpush1.bf16.msra.mxu0 %v1638
      %1762 = vmatprep.subr.bf16.mxu0 0
      %1763 = vmatpush1.bf16.msra.mxu0 %v1637
      %1764 = vmatprep.subr.bf16.mxu0 0
      %1765 = vmatpush1.bf16.msra.mxu0 %v1636
      %1766 = vmatprep.subr.bf16.mxu0 0
      %1767 = vmatpush1.bf16.msra.mxu0 %v1635
      %1768 = vmatprep.subr.bf16.mxu0 0
      %1769 = vmatpush1.bf16.msra.mxu0 %v1634
      %1770 = vmatprep.subr.bf16.mxu0 0
      %1771 = vmatpush1.bf16.msra.mxu0 %v1633
      %1772 = vmatprep.subr.bf16.mxu0 0
      %1773 = vmatpush1.bf16.msra.mxu0 %v1632
      %1774 = vmatprep.subr.bf16.mxu0 0
      %1775 = vmatpush1.bf16.msra.mxu0 %v1631
      %1776 = vmatprep.subr.bf16.mxu0 0
      %1777 = vmatpush2.bf16.msra.mxu0 0
      %1778 = vmatprep.subr.bf16.mxu0 0
      %1779 = vmatpush2.bf16.msra.mxu0 0
      %1780 = vmatprep.subr.bf16.mxu0 0
      %1781 = vmatpush2.bf16.msra.mxu0 0
      %1782 = vmatprep.subr.bf16.mxu0 0
      %1783 = vmatpush2.bf16.msra.mxu0 0
      %1784 = vmatprep.subr.bf16.mxu0 0
      %1785 = vmatpush2.bf16.msra.mxu0 0
      %1786 = vmatprep.subr.bf16.mxu0 0
      %1787 = vmatpush2.bf16.msra.mxu0 0
      %1788 = vmatprep.subr.bf16.mxu0 0
      %1789 = vmatpush2.bf16.msra.mxu0 0
      %1790 = vmatprep.subr.bf16.mxu0 0
      %1791 = vmatpush2.bf16.msra.mxu0 0
      %1792 = vmatprep.mubr.bf16.mxu0 0
      %1793 = vmatmul.mubr.bf16.gmra.mxu0 %v643
      %v1794 = vpop.f32.mrf.mxu0
      %v1795 = vadd.f32 %v1698, %v1794
      %v1796 = vpop.f32.mrf.mxu0
      %v1797 = vpop.f32.mrf.mxu0
      %v1798 = vadd.f32 %v1701, %v1797
      %v1799 = vpop.f32.mrf.mxu0
      %1800 = vmatprep.mubr.bf16.mxu0 0
      %1801 = vmatmul.mubr.bf16.gmra.mxu0 %v646
      %v1802 = vpop.f32.mrf.mxu0
      %v1803 = vadd.f32 %v1706, %v1802
      %v1804 = vpop.f32.mrf.mxu0
      %v1805 = vpop.f32.mrf.mxu0
      %v1806 = vadd.f32 %v1709, %v1805
      %v1807 = vpop.f32.mrf.mxu0
      %1808 = vmatprep.mubr.bf16.mxu0 0
      %1809 = vmatmul.mubr.bf16.gmra.mxu0 %v649
      %v1810 = vpop.f32.mrf.mxu0
      %v1811 = vadd.f32 %v1714, %v1810
      %v1812 = vpop.f32.mrf.mxu0
      %v1813 = vpop.f32.mrf.mxu0
      %v1814 = vadd.f32 %v1717, %v1813
      %v1815 = vpop.f32.mrf.mxu0
      %1816 = vmatprep.mubr.bf16.mxu0 0
      %1817 = vmatmul.mubr.bf16.gmra.mxu0 %v652
      %v1818 = vpop.f32.mrf.mxu0
      %v1819 = vadd.f32 %v1722, %v1818
      %v1820 = vpop.f32.mrf.mxu0
      %v1821 = vpop.f32.mrf.mxu0
      %v1822 = vadd.f32 %v1725, %v1821
      %v1823 = vpop.f32.mrf.mxu0
      %1824 = vmatprep.mubr.bf16.mxu0 0
      %1825 = vmatmul.mubr.bf16.gmra.mxu0 %v655
      %v1826 = vpop.f32.mrf.mxu0
      %v1827 = vadd.f32 %v1730, %v1826
      %v1828 = vpop.f32.mrf.mxu0
      %v1829 = vpop.f32.mrf.mxu0
      %v1830 = vadd.f32 %v1733, %v1829
      %v1831 = vpop.f32.mrf.mxu0
      %1832 = vmatprep.mubr.bf16.mxu0 0
      %1833 = vmatmul.mubr.bf16.gmra.mxu0 %v658
      %v1834 = vpop.f32.mrf.mxu0
      %v1835 = vadd.f32 %v1738, %v1834
      %v1836 = vpop.f32.mrf.mxu0
      %v1837 = vpop.f32.mrf.mxu0
      %v1838 = vadd.f32 %v1741, %v1837
      %v1839 = vpop.f32.mrf.mxu0
      %1840 = vmatprep.mubr.bf16.mxu0 0
      %1841 = vmatmul.mubr.bf16.gmra.mxu0 %v725
      %v1842 = vpop.f32.mrf.mxu0
      %v1843 = vadd.f32 %v1746, %v1842
      %v1844 = vpop.f32.mrf.mxu0
      %v1845 = vpop.f32.mrf.mxu0
      %v1846 = vadd.f32 %v1749, %v1845
      %v1847 = vpop.f32.mrf.mxu0
      %1848 = vmatprep.mubr.bf16.mxu0 0
      %1849 = vmatmul.mubr.bf16.gmra.mxu0 %v1469
      %v1850 = vpop.f32.mrf.mxu0
      %v1851 = vadd.f32 %v1754, %v1850
      %v1852 = vpop.f32.mrf.mxu0
      %v1853 = vpop.f32.mrf.mxu0
      %v1854 = vadd.f32 %v1757, %v1853
      %v1855 = vpop.f32.mrf.mxu0
      %1856 = vdwg.mxu0
      %v1857 = vadd.f32 %v1389, %v1795
      %v1858 = vadd.f32 %v1392, %v1798
      %v1859 = vadd.f32 %v1397, %v1803
      %v1860 = vadd.f32 %v1400, %v1806
      %v1861 = vadd.f32 %v1405, %v1811
      %v1862 = vadd.f32 %v1408, %v1814
      %v1863 = vadd.f32 %v1413, %v1819
      %v1864 = vadd.f32 %v1416, %v1822
      %v1865 = vadd.f32 %v1421, %v1827
      %v1866 = vadd.f32 %v1424, %v1830
      %v1867 = vadd.f32 %v1429, %v1835
      %v1868 = vadd.f32 %v1432, %v1838
      %v1869 = vadd.f32 %v1437, %v1843
      %v1870 = vadd.f32 %v1440, %v1846
      %v1871 = vadd.f32 %v1445, %v1851
      %v1872 = vadd.f32 %v1448, %v1854
      %v1873 = vld [vmem:[%s3] sm:$0x1]
      %v1875 = vlaneseq
      %v1876 = vshrl.u32 %v1875, 7
      %v1877 = vsub.s32 0, %v1876
      %v1878 = vrot.slane %v1873, %v1877
      %v1880 = vadd.f32 %v1857, %v1878
      %v1881 = vadd.f32 %v1858, %v1878
      %v1882 = vadd.f32 %v1859, %v1878
      %v1883 = vadd.f32 %v1860, %v1878
      %v1884 = vadd.f32 %v1861, %v1878
      %v1885 = vadd.f32 %v1862, %v1878
      %v1886 = vadd.f32 %v1863, %v1878
      %v1887 = vadd.f32 %v1864, %v1878
      %v1888 = vadd.f32 %v1865, %v1878
      %v1889 = vadd.f32 %v1866, %v1878
      %v1890 = vadd.f32 %v1867, %v1878
      %v1891 = vadd.f32 %v1868, %v1878
      %v1892 = vadd.f32 %v1869, %v1878
      %v1893 = vadd.f32 %v1870, %v1878
      %v1894 = vadd.f32 %v1871, %v1878
      %v1895 = vadd.f32 %v1872, %v1878
      %v1896 = vpack.c.bf16 %v1881, %v1880
      %v1897 = vpack.c.bf16 %v1883, %v1882
      %v1898 = vpack.c.bf16 %v1885, %v1884
      %v1899 = vpack.c.bf16 %v1887, %v1886
      %v1900 = vpack.c.bf16 %v1889, %v1888
      %v1901 = vpack.c.bf16 %v1891, %v1890
      %v1902 = vpack.c.bf16 %v1893, %v1892
      %v1903 = vpack.c.bf16 %v1895, %v1894
      %v1912 = vunpack.c.l.b16 %v1896
      %v1913 = vunpack.c.h.b16 %v1896
      %v1914 = vunpack.c.l.b16 %v1897
      %v1915 = vunpack.c.h.b16 %v1897
      %v1916 = vunpack.c.l.b16 %v1898
      %v1917 = vunpack.c.h.b16 %v1898
      %v1918 = vunpack.c.l.b16 %v1899
      %v1919 = vunpack.c.h.b16 %v1899
      %v1920 = vunpack.c.l.b16 %v1900
      %v1921 = vunpack.c.h.b16 %v1900
      %v1922 = vunpack.c.l.b16 %v1901
      %v1923 = vunpack.c.h.b16 %v1901
      %v1924 = vunpack.c.l.b16 %v1902
      %v1925 = vunpack.c.h.b16 %v1902
      %v1926 = vunpack.c.l.b16 %v1903
      %v1927 = vunpack.c.h.b16 %v1903
      %v1928 = vpack.c.b16 %v1912, %v1912
      %v1929 = vpack.c.b16 %v1913, %v1913
      %v1930 = vpack.c.b16 %v1914, %v1914
      %v1931 = vpack.c.b16 %v1915, %v1915
      %v1932 = vpack.c.b16 %v1916, %v1916
      %v1933 = vpack.c.b16 %v1917, %v1917
      %v1934 = vpack.c.b16 %v1918, %v1918
      %v1935 = vpack.c.b16 %v1919, %v1919
      %v1936 = vpack.c.b16 %v1920, %v1920
      %v1937 = vpack.c.b16 %v1921, %v1921
      %v1938 = vpack.c.b16 %v1922, %v1922
      %v1939 = vpack.c.b16 %v1923, %v1923
      %v1940 = vpack.c.b16 %v1924, %v1924
      %v1941 = vpack.c.b16 %v1925, %v1925
      %v1942 = vpack.c.b16 %v1926, %v1926
      %v1943 = vpack.c.b16 %v1927, %v1927
      %1960 = vst [vmem:[%s373] sm:$0xf] %v1928
      %1961 = vst [vmem:[%s373 + $0x4] sm:$0xf] %v1929
      %1962 = vst [vmem:[%s373 + $0x8] sm:$0xf] %v1930
      %1963 = vst [vmem:[%s373 + $0xc] sm:$0xf] %v1931
      %1964 = vst [vmem:[%s373 + $0x10] sm:$0xf] %v1932
      %1965 = vst [vmem:[%s373 + $0x14] sm:$0xf] %v1933
      %1966 = vst [vmem:[%s373 + $0x18] sm:$0xf] %v1934
      %1967 = vst [vmem:[%s373 + $0x1c] sm:$0xf] %v1935
      %1968 = vst [vmem:[%s373 + $0x20] sm:$0xf] %v1936
      %1969 = vst [vmem:[%s373 + $0x24] sm:$0xf] %v1937
      %1970 = vst [vmem:[%s373 + $0x28] sm:$0xf] %v1938
      %1971 = vst [vmem:[%s373 + $0x2c] sm:$0xf] %v1939
      %1972 = vst [vmem:[%s373 + $0x30] sm:$0xf] %v1940
      %1973 = vst [vmem:[%s373 + $0x34] sm:$0xf] %v1941
      %1974 = vst [vmem:[%s373 + $0x38] sm:$0xf] %v1942
      %1975 = vst [vmem:[%s373 + $0x3c] sm:$0xf] %v1943
      %v1976 = vadd.f32 %v1880, %v1881
      %v1977 = vadd.f32 %v1976, %v1882
      %v1978 = vadd.f32 %v1977, %v1883
      %v1979 = vadd.f32 %v1978, %v1884
      %v1980 = vadd.f32 %v1979, %v1885
      %v1981 = vadd.f32 %v1980, %v1886
      %v1982 = vadd.f32 %v1981, %v1887
      %v1983 = vadd.f32 %v1982, %v1888
      %v1984 = vadd.f32 %v1983, %v1889
      %v1985 = vadd.f32 %v1984, %v1890
      %v1986 = vadd.f32 %v1985, %v1891
      %v1987 = vadd.f32 %v1986, %v1892
      %v1988 = vadd.f32 %v1987, %v1893
      %v1989 = vadd.f32 %v1988, %v1894
      %v1990 = vadd.f32 %v1989, %v1895
      %v1991 = vrot.slane %v1990, 4
      %v1992 = vadd.f32 %v1990, %v1991
      %v1993 = vrot.slane %v1992, 2
      %v1994 = vadd.f32 %v1992, %v1993
      %v1995 = vrot.slane %v1994, 1
      %v1996 = vadd.f32 %v1994, %v1995
      %v1997 = vmul.f32 %v1880, %v1880
      %v1998 = vmul.f32 %v1881, %v1881
      %v1999 = vmul.f32 %v1882, %v1882
      %v2000 = vmul.f32 %v1883, %v1883
      %v2001 = vmul.f32 %v1884, %v1884
      %v2002 = vmul.f32 %v1885, %v1885
      %v2003 = vmul.f32 %v1886, %v1886
      %v2004 = vmul.f32 %v1887, %v1887
      %v2005 = vmul.f32 %v1888, %v1888
      %v2006 = vmul.f32 %v1889, %v1889
      %v2007 = vmul.f32 %v1890, %v1890
      %v2008 = vmul.f32 %v1891, %v1891
      %v2009 = vmul.f32 %v1892, %v1892
      %v2010 = vmul.f32 %v1893, %v1893
      %v2011 = vmul.f32 %v1894, %v1894
      %v2012 = vmul.f32 %v1895, %v1895
      %v2013 = vadd.f32 %v1997, %v1998
      %v2014 = vadd.f32 %v2013, %v1999
      %v2015 = vadd.f32 %v2014, %v2000
      %v2016 = vadd.f32 %v2015, %v2001
      %v2017 = vadd.f32 %v2016, %v2002
      %v2018 = vadd.f32 %v2017, %v2003
      %v2019 = vadd.f32 %v2018, %v2004
      %v2020 = vadd.f32 %v2019, %v2005
      %v2021 = vadd.f32 %v2020, %v2006
      %v2022 = vadd.f32 %v2021, %v2007
      %v2023 = vadd.f32 %v2022, %v2008
      %v2024 = vadd.f32 %v2023, %v2009
      %v2025 = vadd.f32 %v2024, %v2010
      %v2026 = vadd.f32 %v2025, %v2011
      %v2027 = vadd.f32 %v2026, %v2012
      %v2028 = vrot.slane %v2027, 4
      %v2029 = vadd.f32 %v2027, %v2028
      %v2030 = vrot.slane %v2029, 2
      %v2031 = vadd.f32 %v2029, %v2030
      %v2032 = vrot.slane %v2031, 1
      %v2033 = vadd.f32 %v2031, %v2032
      %v2034 = vsel %vm424, %v1996, %v2033
      %2035 = vst [vmem:[%s382] sm:$0x3] %v2034
      %s2036 = smul.u32 8, %s24
      %p2037 = scmp.lt.s32.totalorder %s23, 1
      %s2038 = scalar_select %p2037, %s23, 1
      %p2039 = scmp.lt.s32.totalorder %s2036, 15
      %s2040 = scalar_select %p2039, %s2036, 15
      %s2041 = smul.addr %s2040, 2
      %s2042 = smul.addr %s2038, 32
      %s2043 = sadd.s32 %s2041, %s2042
      %s2044 = smul.addr %s2043, 4
      %s2045 = scalar_lea.vmem %s6, %s2044
      %p2046 = scmp.lt.s32.totalorder %s23, 1
      %s2047 = scalar_select %p2046, %s23, 1
      %p2048 = scmp.lt.s32.totalorder %s24, 1
      %s2049 = scalar_select %p2048, %s24, 1
      %s2050 = smul.addr %s2047, 2
      %s2051 = sadd.s32 %s2049, %s2050
      %s2052 = smul.addr %s2051, 2
      %s2053 = scalar_lea.vmem %s7, %s2052
      // Predicated region
      $region45: #{conv_block_forward.3} parent=43 // pred_check
        %p2054 = pneg %p191
      $region46: #{conv_block_forward.3} parent=43 // pred_check_branch
        %2056 = sbr.rel (%p2054) target = $region48
      $region47: #{conv_block_forward.3} parent=43 // pred_region
        %s2057 = smul.u32 8, %s24
      $region48: #{conv_block_forward.3} parent=43 // pred_fallthru
        _
      // Predicated region
      $region49: #{conv_block_forward.3} parent=43 // pred_check
        %p2058 = pneg %p219
      $region50: #{conv_block_forward.3} parent=43 // pred_check_branch
        %2060 = sbr.rel (%p2058) target = $region52
      $region51: #{conv_block_forward.3} parent=43 // pred_region
        _
      $region52: #{conv_block_forward.3} parent=43 // pred_fallthru
        _
    $region44: #{conv_block_forward.3} parent=5 // pred_fallthru
      _
    %p2061 = scmp.le.s32.totalorder 2, %s14
    // Predicated region
    $region53: #{conv_block_forward.3} parent=5 // pred_check
      %p2062 = pneg %p2061
    $region54: #{conv_block_forward.3} parent=5 // pred_check_branch
      %2064 = sbr.rel (%p2062) target = $region56
    $region55: #{conv_block_forward.3} parent=5 // pred_region
      %s2065 = ssub.s32 %s14, 2
      // Predicated region
      $region57: #{conv_block_forward.3} parent=55 // pred_check
        %p2066 = pneg %p197
      $region58: #{conv_block_forward.3} parent=55 // pred_check_branch
        %2068 = sbr.rel (%p2066) target = $region60
      $region59: #{conv_block_forward.3} parent=55 // pred_region
        %s2069 = smul.u32 8, %s26
        %p2070 = scmp.lt.s32.totalorder %s25, 1
        %s2071 = scalar_select %p2070, %s25, 1
        %p2072 = scmp.lt.s32.totalorder %s2069, 15
        %s2073 = scalar_select %p2072, %s2069, 15
        %s2074 = smul.addr %s2073, 2
        %s2075 = smul.addr %s2071, 32
        %s2076 = sadd.s32 %s2074, %s2075
        %s2077 = smul.addr %s2076, 4
        %s2078 = scalar_lea.vmem %s6, %s2077
      $region60: #{conv_block_forward.3} parent=55 // pred_fallthru
        _
      // Predicated region
      $region61: #{conv_block_forward.3} parent=55 // pred_check
        %p2079 = pneg %p225
      $region62: #{conv_block_forward.3} parent=55 // pred_check_branch
        %2081 = sbr.rel (%p2079) target = $region64
      $region63: #{conv_block_forward.3} parent=55 // pred_region
        %p2082 = scmp.lt.s32.totalorder %s25, 1
        %s2083 = scalar_select %p2082, %s25, 1
        %p2084 = scmp.lt.s32.totalorder %s26, 1
        %s2085 = scalar_select %p2084, %s26, 1
        %s2086 = smul.addr %s2083, 2
        %s2087 = sadd.s32 %s2085, %s2086
        %s2088 = smul.addr %s2087, 2
        %s2089 = scalar_lea.vmem %s7, %s2088
      $region64: #{conv_block_forward.3} parent=55 // pred_fallthru
        _
    $region56: #{conv_block_forward.3} parent=5 // pred_fallthru
      _
  $region6: #{conv_block_forward.3} parent=0 // loop_footer
    %s18 = sadd.s32 1, %s14
  $region7: #{conv_block_forward.3} parent=0 // loop_footer_branch
    %13 = sbr.rel target = $region3
  $region8: #{conv_block_forward.3} parent=0 // loop_exit
    _

</llo_original>
